<compile_context>
chip_gen: v6e
topology: v6e:2x2x1
jax: 0.10.0
libtpu: 0.0.40
codegen_flags: <defaults>
</compile_context>

<pallas_src>
import functools

import jax
import jax.numpy as jnp
from jax import lax
from jax.experimental import pallas as pl
from jax.experimental.pallas import tpu as pltpu


def _gaussian_conv_kernel(w_ref, xc_ref, xl_ref, xr_ref, o_ref,
                          winl_ref, winr_ref, *, K, TN, TL, precision):
    """Computes one (TN, TL) output tile.

    w_ref    : VMEM f32[128 + 2K, 128]  banded weights (resident across grid)
    xc_ref   : VMEM f32[TN, TL]         center tile of x
    xl_ref   : VMEM f32[TN, 128]        128-wide block left of the tile (clamped)
    xr_ref   : VMEM f32[TN, 128]        128-wide block right of the tile (clamped)
    o_ref    : VMEM f32[TN, TL]         output tile
    winl_ref : VMEM f32[TN, 384]        scratch: [left halo | first 256 center cols]
    winr_ref : VMEM f32[TN, 384]        scratch: [last 256 center cols | right halo]
    """
    TLb = TL // 128
    j = pl.program_id(1)
    nj = pl.num_programs(1)
    w = w_ref[...]                                     # (128 + 2K, 128)

    def mm(seg):
        return jnp.dot(seg, w, preferred_element_type=jnp.float32,
                       precision=precision)

    if TLb == 1:
        # Single-slab tile: full stitched window [left | center | right].
        winl_ref[:, 0:128] = xl_ref[...]
        winl_ref[:, 128:256] = xc_ref[...]
        winl_ref[:, 256:384] = xr_ref[...]

        @pl.when(j == 0)
        def _():                                       # replicate left edge
            winl_ref[:, 0:128] = jnp.broadcast_to(xc_ref[:, 0:1], (TN, 128))

        @pl.when(j == nj - 1)
        def _():                                       # replicate right edge
            winl_ref[:, 256:384] = jnp.broadcast_to(xc_ref[:, TL - 1:TL], (TN, 128))

        o_ref[...] = mm(winl_ref[:, 128 - K:256 + K])
        return

    # Edge-slab stitched windows (lane-aligned stores only).
    winl_ref[:, 0:128] = xl_ref[...]
    winl_ref[:, 128:384] = xc_ref[:, 0:256]
    winr_ref[:, 0:256] = xc_ref[:, TL - 256:TL]
    winr_ref[:, 256:384] = xr_ref[...]

    @pl.when(j == 0)
    def _():                                           # replicate left edge
        winl_ref[:, 0:128] = jnp.broadcast_to(xc_ref[:, 0:1], (TN, 128))

    @pl.when(j == nj - 1)
    def _():                                           # replicate right edge
        winr_ref[:, 256:384] = jnp.broadcast_to(xc_ref[:, TL - 1:TL], (TN, 128))

    # First slab from the left window, last slab from the right window,
    # interior slabs sliced directly from the center block (no scratch copy).
    o_ref[:, 0:128] = mm(winl_ref[:, 128 - K:256 + K])
    for c in range(1, TLb - 1):                        # static unroll
        seg = xc_ref[:, c * 128 - K:c * 128 + 128 + K]
        o_ref[:, c * 128:(c + 1) * 128] = mm(seg)
    o_ref[:, TL - 128:TL] = mm(winr_ref[:, 128 - K:256 + K])


def _vmem_bytes(TN, TL, K):
    """Estimate of the kernel's VMEM footprint (double-buffered blocks + scratch)."""
    in_center = 2 * TN * TL * 4
    out_tile = 2 * TN * TL * 4
    halos = 2 * 2 * TN * 128 * 4
    weights = 2 * (128 + 2 * K) * 128 * 4
    scratch = 2 * TN * 384 * 4
    return in_center + out_tile + halos + weights + scratch


def _vmem_budget_bytes():
    cap = 128 * 1024 * 1024
    try:  # per-generation VMEM (v7x has only 64 MiB per TensorCore)
        cap = int(pltpu.get_tpu_info().vmem_capacity_bytes)
    except Exception:
        pass
    return max(16 << 20, min(cap * 3 // 4, 48 << 20))


def _pick_tiles(N_pad, L_pad, K, budget):
    tn_cands = [t for t in (256, 128, 64, 32, 16, 8) if N_pad % t == 0]
    tl_cands = [t for t in (4096, 2048, 1024, 512, 384, 256, 128) if L_pad % t == 0]

    TN = tn_cands[0]
    fits = [t for t in tl_cands if _vmem_bytes(TN, t, K) + (4 << 20) <= budget]
    while not fits and len(tn_cands) > 1:
        tn_cands = tn_cands[1:]
        TN = tn_cands[0]
        fits = [t for t in tl_cands if _vmem_bytes(TN, t, K) + (4 << 20) <= budget]
    if not fits:
        fits = [tl_cands[-1]]
    TL = fits[0]

    # v7x megacore: if the row axis yields only one grid step, prefer a TL that
    # gives >= 2 column steps so both TensorCores receive work.
    if N_pad // TN == 1 and L_pad // TL < 2:
        multi = [t for t in fits if L_pad // t >= 2]
        if multi:
            TL = multi[0]
    return TN, TL


def gaussian_filter_1d(x, sigma, truncate=4):
    """x: (N, L) float32 -> (N, L) float32, matching GaussianFilter1D.forward."""
    x = jnp.asarray(x, jnp.float32)
    N, L = x.shape

    # Weight construction (mirrors the module's __init__; the 1/(sigma*sqrt(2pi))
    # factor cancels after normalization).  sigma must be a Python scalar.
    K = int(truncate * sigma + 0.5)
    if K == 0:                                  # kernel_size == 1, weight == [1.0]
        return x
    if K > 128:
        # TODO(synk): support K > 128 (very large sigma) with a wider halo.
        raise NotImplementedError("GaussianFilter1D Pallas kernel requires K <= 128")
    taps = jnp.arange(-K, K + 1, dtype=jnp.float32)
    w = jnp.exp(-0.5 * (taps / jnp.float32(sigma)) ** 2)
    w = (w / jnp.sum(w)).astype(jnp.float32)

    # Align to full (8, 128)-multiple blocks.  Lane padding uses 'edge' mode so
    # the replicate-conv values of the first L columns are unchanged; aligned
    # inputs skip this and take the zero-copy path.
    N_pad = ((N + 7) // 8) * 8
    L_pad = ((L + 127) // 128) * 128
    if N_pad != N or L_pad != L:
        x_in = jnp.pad(x, ((0, N_pad - N), (0, L_pad - L)), mode="edge")
    else:
        x_in = x

    budget = _vmem_budget_bytes()
    TN, TL = _pick_tiles(N_pad, L_pad, K, budget)
    TLb = TL // 128
    Lb = L_pad // 128

    # Banded weight matrix for one 128-lane output slab:
    #   Wsub[r, c] = w[r - c] if 0 <= r - c <= 2K else 0,   shape (128 + 2K, 128)
    rows = jnp.arange(128 + 2 * K)[:, None]
    cols = jnp.arange(128)[None, :]
    k_idx = rows - cols
    Wsub = jnp.where((k_idx >= 0) & (k_idx <= 2 * K),
                     w[jnp.clip(k_idx, 0, 2 * K)],
                     0.0).astype(jnp.float32)

    grid = (N_pad // TN, L_pad // TL)
    vmem_limit = int(min(budget, max(_vmem_bytes(TN, TL, K) + (4 << 20), 16 << 20)))

    def _run(precision):
        kernel = functools.partial(_gaussian_conv_kernel,
                                   K=K, TN=TN, TL=TL, precision=precision)
        return pl.pallas_call(
            kernel,
            out_shape=jax.ShapeDtypeStruct((N_pad, L_pad), jnp.float32),
            grid=grid,
            in_specs=[
                # Banded weights: same block every step -> loaded once, resident.
                pl.BlockSpec((128 + 2 * K, 128), lambda i, j: (0, 0)),
                # Center tile.
                pl.BlockSpec((TN, TL), lambda i, j: (i, j)),
                # Left halo: 128-wide block just left of the tile (clamped at edge).
                pl.BlockSpec((TN, 128), lambda i, j: (i, jnp.maximum(j * TLb - 1, 0))),
                # Right halo: 128-wide block just right of the tile (clamped at edge).
                pl.BlockSpec((TN, 128), lambda i, j: (i, jnp.minimum(j * TLb + TLb, Lb - 1))),
            ],
            out_specs=pl.BlockSpec((TN, TL), lambda i, j: (i, j)),
            scratch_shapes=[pltpu.VMEM((TN, 384), jnp.float32),
                            pltpu.VMEM((TN, 384), jnp.float32)],
            compiler_params=pltpu.CompilerParams(
                dimension_semantics=("parallel", "parallel"),
                vmem_limit_bytes=vmem_limit,
            ),
        )(Wsub, x_in, x_in, x_in)

    try:
        # bf16x3: ~1e-6 abs error vs f32, half the MXU passes of HIGHEST.
        out = _run(lax.Precision.HIGH)
    except Exception:
        # Fallback for lowerings that only accept DEFAULT/HIGHEST.
        out = _run(lax.Precision.HIGHEST)

    return out[:N, :L]


def _reference(x, sigma, truncate=4):
    """Pure-JAX reference matching the PyTorch module."""
    K = int(truncate * sigma + 0.5)
    idx = jnp.arange(-K, K + 1, dtype=jnp.float32)
    w = jnp.exp(-0.5 * (idx / jnp.float32(sigma)) ** 2)
    w = w / jnp.sum(w)
    x = jnp.asarray(x, jnp.float32)
    x_pad = jnp.pad(x, ((0, 0), (K, K)), mode="edge")
    N, L = x.shape
    out = jnp.zeros((N, L), jnp.float32)
    for k in range(2 * K + 1):
        out = out + w[k] * x_pad[:, k:k + L]
    return out


if __name__ == "__main__":
    key = jax.random.PRNGKey(0)

    # Aligned case: 3 column tiles -> left edge, interior slabs read directly
    # from the center block, right edge, gated pl.when fixups.
    sigma = 2
    N, L = 8, 1536
    x = jax.random.normal(key, (N, L), dtype=jnp.float32)
    y = jax.block_until_ready(gaussian_filter_1d(x, sigma))
    y_ref = _reference(x, sigma)
    assert y.shape == (N, L)
    err = float(jnp.max(jnp.abs(y - y_ref)))
    assert jnp.allclose(y, y_ref, atol=1e-4, rtol=1e-4), err

    # Unaligned case: exercises wrapper-side edge padding and the single-slab
    # (TL == 128) path chosen to keep >= 2 column grid steps.
    x2 = jax.random.normal(jax.random.PRNGKey(1), (5, 300), dtype=jnp.float32)
    y2 = jax.block_until_ready(gaussian_filter_1d(x2, 1))
    y2_ref = _reference(x2, 1)
    err2 = float(jnp.max(jnp.abs(y2 - y2_ref)))
    assert y2.shape == (5, 300)
    assert jnp.allclose(y2, y2_ref, atol=1e-4, rtol=1e-4), err2

    print("KERNEL_OK")
</pallas_src>

<mosaic_0001>
module attributes {stable_mosaic.version = 11 : i64} {
  func.func @_gaussian_conv_kernel(%arg0: i32, %arg1: i32, %arg2: memref<144x128xf32, #tpu.memory_space<vmem>>, %arg3: memref<8x512xf32, #tpu.memory_space<vmem>>, %arg4: memref<8x128xf32, #tpu.memory_space<vmem>>, %arg5: memref<8x128xf32, #tpu.memory_space<vmem>>, %arg6: memref<8x512xf32, #tpu.memory_space<vmem>>, %arg7: memref<8x384xf32, #tpu.memory_space<vmem>>, %arg8: memref<8x384xf32, #tpu.memory_space<vmem>>) attributes {dimension_semantics = [#tpu.dimension_semantics<parallel>, #tpu.dimension_semantics<parallel>], iteration_bounds = array<i64: 1, 3>, scalar_prefetch = 0 : i64, scratch_operands = 2 : i64, tpu.core_type = #tpu.core_type<tc>, window_params = [{pipeline_mode = #tpu.pipeline_mode<synchronous>, transform_indices = @transform_0, window_bounds = array<i64: 144, 128>}, {transform_indices = @transform_1, window_bounds = array<i64: 8, 512>}, {transform_indices = @transform_2, window_bounds = array<i64: 8, 128>}, {transform_indices = @transform_3, window_bounds = array<i64: 8, 128>}, {transform_indices = @transform_4, window_bounds = array<i64: 8, 512>}]} {
    %c0 = arith.constant 0 : index
    %c0_0 = arith.constant 0 : index
    %0 = vector.load %arg2[%c0, %c0_0] : memref<144x128xf32, #tpu.memory_space<vmem>>, vector<144x128xf32>
    %c0_1 = arith.constant 0 : index
    %c0_2 = arith.constant 0 : index
    %1 = vector.load %arg4[%c0_1, %c0_2] : memref<8x128xf32, #tpu.memory_space<vmem>>, vector<8x128xf32>
    %c0_3 = arith.constant 0 : index
    %c0_4 = arith.constant 0 : index
    %2 = vector.load %arg7[%c0_3, %c0_4] : memref<8x384xf32, #tpu.memory_space<vmem>>, vector<8x128xf32>
    tpu.vector_store %arg7[%c0_3, %c0_4], %1 {strides = array<i32>} : memref<8x384xf32, #tpu.memory_space<vmem>>, vector<8x128xf32>,
    %c0_5 = arith.constant 0 : index
    %c0_6 = arith.constant 0 : index
    %3 = vector.load %arg3[%c0_5, %c0_6] : memref<8x512xf32, #tpu.memory_space<vmem>>, vector<8x256xf32>
    %c0_7 = arith.constant 0 : index
    %c128 = arith.constant 128 : index
    %4 = vector.load %arg7[%c0_7, %c128] : memref<8x384xf32, #tpu.memory_space<vmem>>, vector<8x256xf32>
    tpu.vector_store %arg7[%c0_7, %c128], %3 {strides = array<i32>} : memref<8x384xf32, #tpu.memory_space<vmem>>, vector<8x256xf32>,
    %c0_8 = arith.constant 0 : index
    %c256 = arith.constant 256 : index
    %5 = vector.load %arg3[%c0_8, %c256] : memref<8x512xf32, #tpu.memory_space<vmem>>, vector<8x256xf32>
    %c0_9 = arith.constant 0 : index
    %c0_10 = arith.constant 0 : index
    %6 = vector.load %arg8[%c0_9, %c0_10] : memref<8x384xf32, #tpu.memory_space<vmem>>, vector<8x256xf32>
    tpu.vector_store %arg8[%c0_9, %c0_10], %5 {strides = array<i32>} : memref<8x384xf32, #tpu.memory_space<vmem>>, vector<8x256xf32>,
    %c0_11 = arith.constant 0 : index
    %c0_12 = arith.constant 0 : index
    %7 = vector.load %arg5[%c0_11, %c0_12] : memref<8x128xf32, #tpu.memory_space<vmem>>, vector<8x128xf32>
    %c0_13 = arith.constant 0 : index
    %c256_14 = arith.constant 256 : index
    %8 = vector.load %arg8[%c0_13, %c256_14] : memref<8x384xf32, #tpu.memory_space<vmem>>, vector<8x128xf32>
    tpu.vector_store %arg8[%c0_13, %c256_14], %7 {strides = array<i32>} : memref<8x384xf32, #tpu.memory_space<vmem>>, vector<8x128xf32>,
    %c0_i32 = arith.constant 0 : i32
    %9 = arith.cmpi eq, %arg1, %c0_i32 : i32
    %10 = arith.extui %9 : i1 to i32
    %c0_i32_15 = arith.constant 0 : i32
    %11 = arith.cmpi ne, %10, %c0_i32_15 : i32
    scf.if %11 {
      %c0_33 = arith.constant 0 : index
      %c0_34 = arith.constant 0 : index
      %27 = vector.load %arg3[%c0_33, %c0_34] : memref<8x512xf32, #tpu.memory_space<vmem>>, vector<8x1xf32>
      %28 = vector.shape_cast %27 : vector<8x1xf32> to vector<8x1xf32>
      %29 = vector.broadcast %28 : vector<8x1xf32> to vector<8x128xf32>
      %c0_35 = arith.constant 0 : index
      %c0_36 = arith.constant 0 : index
      %30 = vector.load %arg7[%c0_35, %c0_36] : memref<8x384xf32, #tpu.memory_space<vmem>>, vector<8x128xf32>
      tpu.vector_store %arg7[%c0_35, %c0_36], %29 {strides = array<i32>} : memref<8x384xf32, #tpu.memory_space<vmem>>, vector<8x128xf32>,
    } else {
    }
    %c2_i32 = arith.constant 2 : i32
    %12 = arith.cmpi eq, %arg1, %c2_i32 : i32
    %13 = arith.extui %12 : i1 to i32
    %c0_i32_16 = arith.constant 0 : i32
    %14 = arith.cmpi ne, %13, %c0_i32_16 : i32
    scf.if %14 {
      %c0_33 = arith.constant 0 : index
      %c511 = arith.constant 511 : index
      %27 = vector.load %arg3[%c0_33, %c511] : memref<8x512xf32, #tpu.memory_space<vmem>>, vector<8x1xf32>
      %28 = vector.shape_cast %27 : vector<8x1xf32> to vector<8x1xf32>
      %29 = vector.broadcast %28 : vector<8x1xf32> to vector<8x128xf32>
      %c0_34 = arith.constant 0 : index
      %c256_35 = arith.constant 256 : index
      %30 = vector.load %arg8[%c0_34, %c256_35] : memref<8x384xf32, #tpu.memory_space<vmem>>, vector<8x128xf32>
      tpu.vector_store %arg8[%c0_34, %c256_35], %29 {strides = array<i32>} : memref<8x384xf32, #tpu.memory_space<vmem>>, vector<8x128xf32>,
    } else {
    }
    %c0_17 = arith.constant 0 : index
    %c120 = arith.constant 120 : index
    %15 = vector.load %arg7[%c0_17, %c120] : memref<8x384xf32, #tpu.memory_space<vmem>>, vector<8x144xf32>
    %cst = arith.constant dense<0.000000e+00> : vector<8x128xf32>
    %16 = tpu.matmul %15, %0, %cst {dimension_numbers = #tpu.dot_dimension_numbers<[1], [0], [0], [1], [0, 0, 1, 1], [], []>, precision = #tpu.contract_precision<fp32>} : vector<8x144xf32>, vector<144x128xf32>, vector<8x128xf32> -> vector<8x128xf32>
    %c0_18 = arith.constant 0 : index
    %c0_19 = arith.constant 0 : index
    %17 = vector.load %arg6[%c0_18, %c0_19] : memref<8x512xf32, #tpu.memory_space<vmem>>, vector<8x128xf32>
    tpu.vector_store %arg6[%c0_18, %c0_19], %16 {strides = array<i32>} : memref<8x512xf32, #tpu.memory_space<vmem>>, vector<8x128xf32>,
    %c0_20 = arith.constant 0 : index
    %c120_21 = arith.constant 120 : index
    %18 = vector.load %arg3[%c0_20, %c120_21] : memref<8x512xf32, #tpu.memory_space<vmem>>, vector<8x144xf32>
    %cst_22 = arith.constant dense<0.000000e+00> : vector<8x128xf32>
    %19 = tpu.matmul %18, %0, %cst_22 {dimension_numbers = #tpu.dot_dimension_numbers<[1], [0], [0], [1], [0, 0, 1, 1], [], []>, precision = #tpu.contract_precision<fp32>} : vector<8x144xf32>, vector<144x128xf32>, vector<8x128xf32> -> vector<8x128xf32>
    %c0_23 = arith.constant 0 : index
    %c128_24 = arith.constant 128 : index
    %20 = vector.load %arg6[%c0_23, %c128_24] : memref<8x512xf32, #tpu.memory_space<vmem>>, vector<8x128xf32>
    tpu.vector_store %arg6[%c0_23, %c128_24], %19 {strides = array<i32>} : memref<8x512xf32, #tpu.memory_space<vmem>>, vector<8x128xf32>,
    %c0_25 = arith.constant 0 : index
    %c248 = arith.constant 248 : index
    %21 = vector.load %arg3[%c0_25, %c248] : memref<8x512xf32, #tpu.memory_space<vmem>>, vector<8x144xf32>
    %cst_26 = arith.constant dense<0.000000e+00> : vector<8x128xf32>
    %22 = tpu.matmul %21, %0, %cst_26 {dimension_numbers = #tpu.dot_dimension_numbers<[1], [0], [0], [1], [0, 0, 1, 1], [], []>, precision = #tpu.contract_precision<fp32>} : vector<8x144xf32>, vector<144x128xf32>, vector<8x128xf32> -> vector<8x128xf32>
    %c0_27 = arith.constant 0 : index
    %c256_28 = arith.constant 256 : index
    %23 = vector.load %arg6[%c0_27, %c256_28] : memref<8x512xf32, #tpu.memory_space<vmem>>, vector<8x128xf32>
    tpu.vector_store %arg6[%c0_27, %c256_28], %22 {strides = array<i32>} : memref<8x512xf32, #tpu.memory_space<vmem>>, vector<8x128xf32>,
    %c0_29 = arith.constant 0 : index
    %c120_30 = arith.constant 120 : index
    %24 = vector.load %arg8[%c0_29, %c120_30] : memref<8x384xf32, #tpu.memory_space<vmem>>, vector<8x144xf32>
    %cst_31 = arith.constant dense<0.000000e+00> : vector<8x128xf32>
    %25 = tpu.matmul %24, %0, %cst_31 {dimension_numbers = #tpu.dot_dimension_numbers<[1], [0], [0], [1], [0, 0, 1, 1], [], []>, precision = #tpu.contract_precision<fp32>} : vector<8x144xf32>, vector<144x128xf32>, vector<8x128xf32> -> vector<8x128xf32>
    %c0_32 = arith.constant 0 : index
    %c384 = arith.constant 384 : index
    %26 = vector.load %arg6[%c0_32, %c384] : memref<8x512xf32, #tpu.memory_space<vmem>>, vector<8x128xf32>
    tpu.vector_store %arg6[%c0_32, %c384], %25 {strides = array<i32>} : memref<8x512xf32, #tpu.memory_space<vmem>>, vector<8x128xf32>,
    return
  }
  func.func @transform_0(%arg0: i32, %arg1: i32) -> (i32, i32) {
    %c0_i32 = arith.constant 0 : i32
    %c0_i32_0 = arith.constant 0 : i32
    %c0_i32_1 = arith.constant 0 : i32
    return %c0_i32, %c0_i32_0 : i32, i32
  }
  func.func @transform_1(%arg0: i32, %arg1: i32) -> (i32, i32) {
    %c0_i32 = arith.constant 0 : i32
    return %arg0, %arg1 : i32, i32
  }
  func.func @transform_2(%arg0: i32, %arg1: i32) -> (i32, i32) {
    %c4_i32 = arith.constant 4 : i32
    %0 = arith.muli %arg1, %c4_i32 : i32
    %c1_i32 = arith.constant 1 : i32
    %1 = arith.subi %0, %c1_i32 : i32
    %c0_i32 = arith.constant 0 : i32
    %2 = arith.maxsi %1, %c0_i32 : i32
    %c0_i32_0 = arith.constant 0 : i32
    return %arg0, %2 : i32, i32
  }
  func.func @transform_3(%arg0: i32, %arg1: i32) -> (i32, i32) {
    %c4_i32 = arith.constant 4 : i32
    %0 = arith.muli %arg1, %c4_i32 : i32
    %c4_i32_0 = arith.constant 4 : i32
    %1 = arith.addi %0, %c4_i32_0 : i32
    %c11_i32 = arith.constant 11 : i32
    %2 = arith.minsi %1, %c11_i32 : i32
    %c0_i32 = arith.constant 0 : i32
    return %arg0, %2 : i32, i32
  }
  func.func @transform_4(%arg0: i32, %arg1: i32) -> (i32, i32) {
    %c0_i32 = arith.constant 0 : i32
    return %arg0, %arg1 : i32, i32
  }
}

</mosaic_0001>

<llo_original>
// kernel: tpu_custom_call.1
$region0: #{tpu_custom_call.1}
  #allocation0 [shape = 'u32[]', space=smem, size = 0x4, offset = 0x4, fixed_abs, tag = 'smem constant byte address 0x4 - core index']
  #allocation1 [shape = 'u32[144,128]{1,0:T(1,128)}', space=vmem, size = 0x12000, scoped, tag = 'internal scratch']
  #allocation2 [shape = 'f32[8,384]{1,0:T(8,128)}', space=vmem, size = 0x3000, scoped, tag = 'scratch operand']
  #allocation3 [shape = 'f32[8,384]{1,0:T(8,128)}', space=vmem, size = 0x3000, scoped, tag = 'scratch operand']
  %s0 = inlined_call_operand.hbm [shape: f32[144,128], index: 0, kind: input, shape index: {}]
  %s1 = inlined_call_operand.hbm [shape: f32[8,1536], index: 1, kind: input, shape index: {}]
  %s2 = inlined_call_operand.hbm [shape: f32[8,1536], index: 2, kind: input, shape index: {}]
  %s3 = inlined_call_operand.hbm [shape: f32[8,1536], index: 3, kind: input, shape index: {}]
  %s4 = inlined_call_operand.hbm [shape: f32[8,1536], index: 4, kind: output, shape index: {}]
  %s5 = sld [smem:[#allocation0]]
  $region73: #{tpu_custom_call.1} parent=0
    _
  %s7 = ssub.s32 1, %s5
  %s8 = scalar_select 0, %s7, %s5
  $region1: #{tpu_custom_call.1} parent=0
    #allocation4 [shape = 'u8[73728]{0}', space=vmem, size = 0x12000, scoped, tag = 'input window, operand 0, single buffered']
    #allocation5 [shape = 's32[2]{0}', space=sflag, size = 0x8, scoped, tag = 'scoped memory for tpu_custom_call.1']
    #allocation6 [shape = 's32[2]{0}', space=sflag, size = 0x8, scoped, tag = 'scoped memory for tpu_custom_call.1']
    #allocation7 [shape = 'u8[32768]{0}', space=vmem, size = 0x8000, scoped, tag = 'input window, operand 1']
    #allocation8 [shape = 's32[2]{0}', space=sflag, size = 0x8, scoped, tag = 'scoped memory for tpu_custom_call.1']
    #allocation9 [shape = 'u8[8192]{0}', space=vmem, size = 0x2000, scoped, tag = 'input window, operand 2']
    #allocation10 [shape = 'u8[8192]{0}', space=vmem, size = 0x2000, scoped, tag = 'input window, operand 3']
    #allocation11 [shape = 's32[2]{0}', space=sflag, size = 0x8, scoped, tag = 'scoped memory for tpu_custom_call.1']
    #allocation12 [shape = 'u8[32768]{0}', space=vmem, size = 0x8000, scoped, tag = 'output window, operand 0']
    %9 = vsyncpa [#allocation5], 0
    %10 = vsyncpa [#allocation8], 0
    %s11 = scalar_lea.sflag [#allocation8], 1
    %12 = vsyncpa %s11, 0
    %13 = vsyncpa [#allocation11], 0
    %s14 = scalar_lea.sflag [#allocation11], 1
    %15 = vsyncpa %s14, 0
    %16 = vsyncpa [#allocation6], 0
    %s17 = scalar_lea.sflag [#allocation6], 1
    %18 = vsyncpa %s17, 0
    loop: start=0, step=1, limit=5
    $region2: #{tpu_custom_call.1} parent=1 // loop_pre_header
      _
    $region3: #{tpu_custom_call.1} parent=1 // loop_header
      %s20 = sphi 0, %s24
      %p21 = scmp.ge.s32.totalorder %s20, 5
      %s27 = sphi 0, %s39
      %s28 = sphi 0, %s35
      %s29 = sphi 0, %s27
      %s30 = sphi 0, %s28
      %s31 = sphi 0, %s29
      %s32 = sphi 0, %s30
      %s40 = sphi 0, %s40
      %s42 = sphi 0, %s40
      %s43 = sphi 0, %s42
      %s57 = sphi 0, %s43
      %s65 = sphi 0, %s67
      %s68 = sphi 0, %s65
      %s69 = sphi 0, %s68
      %s85 = sphi 0, %s69
      %s101 = sphi 0, %s103
      %s104 = sphi 0, %s101
      %s105 = sphi 0, %s104
      %s121 = sphi 0, %s105
      %s137 = sphi 0, %s139
      %s140 = sphi 0, %s137
      %s141 = sphi 0, %s140
      %s157 = sphi 0, %s141
      %s165 = sphi 0, %s167
      %s168 = sphi 0, %s165
      %s169 = sphi 0, %s168
      %s185 = sphi 0, %s169
    $region4: #{tpu_custom_call.1} parent=1 // loop_header_branch
      %23 = sbr.rel (%p21) target = $region8
    $region5: #{tpu_custom_call.1} parent=1 // loop_body
      %s25 = ssub.s32 %s20, 1
      %s26 = ssub.s32 %s20, 2
      %s33 = sadd.s32 1, %s28
      %p34 = scmp.ge.s32.totalorder %s33, 3
      %s35 = scalar_select %p34, 0, %s33
      %s36 = sadd.s32 1, %s27
      %s37 = scalar_select %p34, %s36, %s27
      %p38 = scmp.ge.s32.totalorder %s37, 1
      %s39 = scalar_select %p38, 0, %s37
      %s41 = sadd.s32 %s40, 1
      %p44 = scmp.eq.s32.totalorder %s20, 2
      %p45 = scmp.ne.s32.totalorder %s40, %s42
      %p46 = scmp.eq.s32.totalorder %s20, 0
      %p47 = por %p45, %p46
      %p48 = scmp.ne.s32.totalorder %s40, %s42
      %p49 = scmp.eq.s32.totalorder %s25, 2
      %p50 = por %p48, %p49
      %p51 = scmp.ne.s32.totalorder %s42, %s43
      %p52 = scmp.eq.s32.totalorder %s25, 0
      %p53 = por %p51, %p52
      %p54 = scmp.ne.s32.totalorder %s42, %s43
      %p55 = scmp.eq.s32.totalorder %s26, 2
      %p56 = por %p54, %p55
      %p58 = scmp.ne.s32.totalorder %s43, %s57
      %p59 = scmp.eq.s32.totalorder %s26, 0
      %p60 = por %p58, %p59
      %s61 = ssub.s32 %s27, %s39
      %s62 = ssub.s32 %s28, %s35
      %s63 = sor.u32 %s61, %s62
      %p64 = scmp.eq.s32.totalorder %s63, 0
      %s66 = sadd.s32 %s65, 1
      %s67 = scalar_select %p64, %s65, %s66
      %p70 = pneg %p64
      %p71 = scmp.eq.s32.totalorder %s20, 2
      %p72 = por %p70, %p71
      %p73 = scmp.ne.s32.totalorder %s65, %s68
      %p74 = scmp.eq.s32.totalorder %s20, 0
      %p75 = por %p73, %p74
      %p76 = scmp.ne.s32.totalorder %s65, %s68
      %p77 = scmp.eq.s32.totalorder %s25, 2
      %p78 = por %p76, %p77
      %p79 = scmp.ne.s32.totalorder %s68, %s69
      %p80 = scmp.eq.s32.totalorder %s25, 0
      %p81 = por %p79, %p80
      %p82 = scmp.ne.s32.totalorder %s68, %s69
      %p83 = scmp.eq.s32.totalorder %s26, 2
      %p84 = por %p82, %p83
      %p86 = scmp.ne.s32.totalorder %s69, %s85
      %p87 = scmp.eq.s32.totalorder %s26, 0
      %p88 = por %p86, %p87
      %s89 = smul.u32 %s28, 4
      %s90 = ssub.s32 %s89, 1
      %p91 = scmp.gt.s32.totalorder %s90, 0
      %s92 = scalar_select %p91, %s90, 0
      %s93 = smul.u32 %s35, 4
      %s94 = ssub.s32 %s93, 1
      %p95 = scmp.gt.s32.totalorder %s94, 0
      %s96 = scalar_select %p95, %s94, 0
      %s97 = ssub.s32 %s27, %s39
      %s98 = ssub.s32 %s92, %s96
      %s99 = sor.u32 %s97, %s98
      %p100 = scmp.eq.s32.totalorder %s99, 0
      %s102 = sadd.s32 %s101, 1
      %s103 = scalar_select %p100, %s101, %s102
      %p106 = pneg %p100
      %p107 = scmp.eq.s32.totalorder %s20, 2
      %p108 = por %p106, %p107
      %p109 = scmp.ne.s32.totalorder %s101, %s104
      %p110 = scmp.eq.s32.totalorder %s20, 0
      %p111 = por %p109, %p110
      %p112 = scmp.ne.s32.totalorder %s101, %s104
      %p113 = scmp.eq.s32.totalorder %s25, 2
      %p114 = por %p112, %p113
      %p115 = scmp.ne.s32.totalorder %s104, %s105
      %p116 = scmp.eq.s32.totalorder %s25, 0
      %p117 = por %p115, %p116
      %p118 = scmp.ne.s32.totalorder %s104, %s105
      %p119 = scmp.eq.s32.totalorder %s26, 2
      %p120 = por %p118, %p119
      %p122 = scmp.ne.s32.totalorder %s105, %s121
      %p123 = scmp.eq.s32.totalorder %s26, 0
      %p124 = por %p122, %p123
      %s125 = smul.u32 %s28, 4
      %s126 = sadd.s32 %s125, 4
      %p127 = scmp.lt.s32.totalorder %s126, 11
      %s128 = scalar_select %p127, %s126, 11
      %s129 = smul.u32 %s35, 4
      %s130 = sadd.s32 %s129, 4
      %p131 = scmp.lt.s32.totalorder %s130, 11
      %s132 = scalar_select %p131, %s130, 11
      %s133 = ssub.s32 %s27, %s39
      %s134 = ssub.s32 %s128, %s132
      %s135 = sor.u32 %s133, %s134
      %p136 = scmp.eq.s32.totalorder %s135, 0
      %s138 = sadd.s32 %s137, 1
      %s139 = scalar_select %p136, %s137, %s138
      %p142 = pneg %p136
      %p143 = scmp.eq.s32.totalorder %s20, 2
      %p144 = por %p142, %p143
      %p145 = scmp.ne.s32.totalorder %s137, %s140
      %p146 = scmp.eq.s32.totalorder %s20, 0
      %p147 = por %p145, %p146
      %p148 = scmp.ne.s32.totalorder %s137, %s140
      %p149 = scmp.eq.s32.totalorder %s25, 2
      %p150 = por %p148, %p149
      %p151 = scmp.ne.s32.totalorder %s140, %s141
      %p152 = scmp.eq.s32.totalorder %s25, 0
      %p153 = por %p151, %p152
      %p154 = scmp.ne.s32.totalorder %s140, %s141
      %p155 = scmp.eq.s32.totalorder %s26, 2
      %p156 = por %p154, %p155
      %p158 = scmp.ne.s32.totalorder %s141, %s157
      %p159 = scmp.eq.s32.totalorder %s26, 0
      %p160 = por %p158, %p159
      %s161 = ssub.s32 %s27, %s39
      %s162 = ssub.s32 %s28, %s35
      %s163 = sor.u32 %s161, %s162
      %p164 = scmp.eq.s32.totalorder %s163, 0
      %s166 = sadd.s32 %s165, 1
      %s167 = scalar_select %p164, %s165, %s166
      %p170 = pneg %p164
      %p171 = scmp.eq.s32.totalorder %s20, 2
      %p172 = por %p170, %p171
      %p173 = scmp.ne.s32.totalorder %s165, %s168
      %p174 = scmp.eq.s32.totalorder %s20, 0
      %p175 = por %p173, %p174
      %p176 = scmp.ne.s32.totalorder %s165, %s168
      %p177 = scmp.eq.s32.totalorder %s25, 2
      %p178 = por %p176, %p177
      %p179 = scmp.ne.s32.totalorder %s168, %s169
      %p180 = scmp.eq.s32.totalorder %s25, 0
      %p181 = por %p179, %p180
      %p182 = scmp.ne.s32.totalorder %s168, %s169
      %p183 = scmp.eq.s32.totalorder %s26, 2
      %p184 = por %p182, %p183
      %p186 = scmp.ne.s32.totalorder %s169, %s185
      %p187 = scmp.eq.s32.totalorder %s26, 0
      %p188 = por %p186, %p187
      %p189 = scmp.le.s32.totalorder 1, %s20
      %p190 = scmp.lt.s32.totalorder %s20, 4
      %p191 = pnand %p189, %p190
      %p192 = pneg %p191
      // Predicated region
      $region9: #{tpu_custom_call.1} parent=5 // pred_check
        _
      $region10: #{tpu_custom_call.1} parent=5 // pred_check_branch
        %194 = sbr.rel (%p191) target = $region12
      $region11: #{tpu_custom_call.1} parent=5 // pred_region
        %s195 = ssub.s32 %s20, 1
        // Predicated region
        $region13: #{tpu_custom_call.1} parent=11 // pred_check
          %p196 = pneg %p53
        $region14: #{tpu_custom_call.1} parent=11 // pred_check_branch
          %198 = sbr.rel (%p196) target = $region16
        $region15: #{tpu_custom_call.1} parent=11 // pred_region
          %s200 = ssub.s32 2304, 2304
          %201 = vsyncadd [#allocation5], %s200
          %s202 = sshll.u32 [#allocation4], 4
          %s203 = int_to_ptr.vmem [resolvable:$true] %s202
          %208 = dma.hbm_to_vmem [thread:$0]  %s0, 2304, %s203, [#allocation5], 128, 128, 8
        $region16: #{tpu_custom_call.1} parent=11 // pred_fallthru
          _
      $region12: #{tpu_custom_call.1} parent=5 // pred_fallthru
        _
      %p209 = scmp.lt.s32.totalorder %s20, 3
      // Predicated region
      $region17: #{tpu_custom_call.1} parent=5 // pred_check
        %p210 = pneg %p209
      $region18: #{tpu_custom_call.1} parent=5 // pred_check_branch
        %212 = sbr.rel (%p210) target = $region20
      $region19: #{tpu_custom_call.1} parent=5 // pred_region
        // Predicated region
        $region21: #{tpu_custom_call.1} parent=19 // pred_check
          %p213 = pneg %p75
        $region22: #{tpu_custom_call.1} parent=19 // pred_check_branch
          %215 = sbr.rel (%p213) target = $region24
        $region23: #{tpu_custom_call.1} parent=19 // pred_region
          %s216 = sand.u32 %s20, 1
          %s217 = scalar_lea.sflag [#allocation8], %s216
          %s218 = sand.u32 %s65, 1
          %s219 = smul.addr %s218, 32
          %s220 = scalar_lea.vmem [#allocation7], %s219
          %s221 = smul.u32 4, %s28
          %s223 = ssub.s32 512, 512
          %224 = vsyncadd %s217, %s223
          %s225 = smul.addr %s27, 12
          %s226 = sadd.s32 %s221, %s225
          %s227 = smul.addr %s226, 128
          %s228 = scalar_lea.hbm %s1, %s227
          %s230 = sshll.u32 %s220, 4
          %s231 = int_to_ptr.vmem [resolvable:$true] %s230
          %233 = dma.hbm_to_vmem [thread:$0]  %s228, 512, %s231, %s217
        $region24: #{tpu_custom_call.1} parent=19 // pred_fallthru
          _
        // Predicated region
        $region25: #{tpu_custom_call.1} parent=19 // pred_check
          %p234 = pneg %p111
        $region26: #{tpu_custom_call.1} parent=19 // pred_check_branch
          %236 = sbr.rel (%p234) target = $region28
        $region27: #{tpu_custom_call.1} parent=19 // pred_region
          %s237 = sand.u32 %s20, 1
          %s238 = scalar_lea.sflag [#allocation8], %s237
          %s239 = sand.u32 %s101, 1
          %s240 = smul.addr %s239, 8
          %s241 = scalar_lea.vmem [#allocation9], %s240
          %s242 = smul.u32 %s28, 4
          %s243 = ssub.s32 %s242, 1
          %p244 = scmp.gt.s32.totalorder %s243, 0
          %s245 = scalar_select %p244, %s243, 0
          %s247 = ssub.s32 128, 128
          %248 = vsyncadd %s238, %s247
          %s249 = smul.addr %s27, 12
          %s250 = sadd.s32 %s245, %s249
          %s251 = smul.addr %s250, 128
          %s252 = scalar_lea.hbm %s2, %s251
          %s254 = sshll.u32 %s241, 4
          %s255 = int_to_ptr.vmem [resolvable:$true] %s254
          %257 = dma.hbm_to_vmem [thread:$0]  %s252, 128, %s255, %s238
        $region28: #{tpu_custom_call.1} parent=19 // pred_fallthru
          _
        // Predicated region
        $region29: #{tpu_custom_call.1} parent=19 // pred_check
          %p258 = pneg %p147
        $region30: #{tpu_custom_call.1} parent=19 // pred_check_branch
          %260 = sbr.rel (%p258) target = $region32
        $region31: #{tpu_custom_call.1} parent=19 // pred_region
          %s261 = sand.u32 %s137, 1
          %s262 = scalar_lea.sflag [#allocation11], %s261
          %s263 = sand.u32 %s137, 1
          %s264 = smul.addr %s263, 8
          %s265 = scalar_lea.vmem [#allocation10], %s264
          %s266 = smul.u32 %s28, 4
          %s267 = sadd.s32 %s266, 4
          %p268 = scmp.lt.s32.totalorder %s267, 11
          %s269 = scalar_select %p268, %s267, 11
          %s271 = ssub.s32 128, 128
          %272 = vsyncadd %s262, %s271
          %s273 = smul.addr %s27, 12
          %s274 = sadd.s32 %s269, %s273
          %s275 = smul.addr %s274, 128
          %s276 = scalar_lea.hbm %s3, %s275
          %s278 = sshll.u32 %s265, 4
          %s279 = int_to_ptr.vmem [resolvable:$true] %s278
          %281 = dma.hbm_to_vmem [thread:$0]  %s276, 128, %s279, %s262
        $region32: #{tpu_custom_call.1} parent=19 // pred_fallthru
          _
      $region20: #{tpu_custom_call.1} parent=5 // pred_fallthru
        _
      %p282 = scmp.le.s32.totalorder 1, %s20
      %p283 = scmp.lt.s32.totalorder %s20, 4
      %p284 = pnand %p282, %p283
      %p285 = pneg %p284
      // Predicated region
      $region33: #{tpu_custom_call.1} parent=5 // pred_check
        _
      $region34: #{tpu_custom_call.1} parent=5 // pred_check_branch
        %287 = sbr.rel (%p284) target = $region36
      $region35: #{tpu_custom_call.1} parent=5 // pred_region
        %s288 = ssub.s32 %s20, 1
        // Predicated region
        $region37: #{tpu_custom_call.1} parent=35 // pred_check
          %p289 = pneg %p53
        $region38: #{tpu_custom_call.1} parent=35 // pred_check_branch
          %291 = sbr.rel (%p289) target = $region40
        $region39: #{tpu_custom_call.1} parent=35 // pred_region
          %292 = dma.done [#allocation5], 2304
        $region40: #{tpu_custom_call.1} parent=35 // pred_fallthru
          _
        %s293 = sand.u32 %s25, 1
        %s294 = scalar_lea.sflag [#allocation8], %s293
        %s295 = sand.u32 %s68, 1
        %s296 = smul.addr %s295, 32
        %s297 = scalar_lea.vmem [#allocation7], %s296
        // Predicated region
        $region41: #{tpu_custom_call.1} parent=35 // pred_check
          %p298 = pneg %p81
        $region42: #{tpu_custom_call.1} parent=35 // pred_check_branch
          %300 = sbr.rel (%p298) target = $region44
        $region43: #{tpu_custom_call.1} parent=35 // pred_region
          %301 = dma.done %s294, 512
        $region44: #{tpu_custom_call.1} parent=35 // pred_fallthru
          _
        %s302 = sand.u32 %s25, 1
        %s303 = scalar_lea.sflag [#allocation8], %s302
        %s304 = sand.u32 %s104, 1
        %s305 = smul.addr %s304, 8
        %s306 = scalar_lea.vmem [#allocation9], %s305
        // Predicated region
        $region45: #{tpu_custom_call.1} parent=35 // pred_check
          %p307 = pneg %p117
        $region46: #{tpu_custom_call.1} parent=35 // pred_check_branch
          %309 = sbr.rel (%p307) target = $region48
        $region47: #{tpu_custom_call.1} parent=35 // pred_region
          %310 = dma.done %s303, 128
        $region48: #{tpu_custom_call.1} parent=35 // pred_fallthru
          _
        %s311 = sand.u32 %s140, 1
        %s312 = scalar_lea.sflag [#allocation11], %s311
        %s313 = sand.u32 %s140, 1
        %s314 = smul.addr %s313, 8
        %s315 = scalar_lea.vmem [#allocation10], %s314
        // Predicated region
        $region49: #{tpu_custom_call.1} parent=35 // pred_check
          %p316 = pneg %p153
        $region50: #{tpu_custom_call.1} parent=35 // pred_check_branch
          %318 = sbr.rel (%p316) target = $region52
        $region51: #{tpu_custom_call.1} parent=35 // pred_region
          %319 = dma.done %s312, 128
        $region52: #{tpu_custom_call.1} parent=35 // pred_fallthru
          _
        %p320 = pneg %p53
        %p321 = pneg %p50
        %s322 = sand.u32 %s25, 1
        %s323 = scalar_lea.sflag [#allocation8], %s322
        %s324 = sand.u32 %s68, 1
        %s325 = smul.addr %s324, 32
        %s326 = scalar_lea.vmem [#allocation7], %s325
        %p327 = pneg %p81
        %p328 = pneg %p78
        %s329 = sand.u32 %s25, 1
        %s330 = scalar_lea.sflag [#allocation8], %s329
        %s331 = sand.u32 %s104, 1
        %s332 = smul.addr %s331, 8
        %s333 = scalar_lea.vmem [#allocation9], %s332
        %p334 = pneg %p117
        %p335 = pneg %p114
        %s336 = sand.u32 %s140, 1
        %s337 = scalar_lea.sflag [#allocation11], %s336
        %s338 = sand.u32 %s140, 1
        %s339 = smul.addr %s338, 8
        %s340 = scalar_lea.vmem [#allocation10], %s339
        %p341 = pneg %p153
        %p342 = pneg %p150
        %p343 = pneg %p181
        %p344 = pneg %p178
        %s345 = sand.u32 %s168, 1
        %s346 = scalar_lea.sflag [#allocation6], %s345
        %s347 = sand.u32 %s168, 1
        %s348 = smul.addr %s347, 32
        %s349 = scalar_lea.vmem [#allocation12], %s348
        %s350 = smul.u32 4, %s30
        %s351 = smul.u32 %s30, 4
        %s352 = ssub.s32 %s351, 1
        %p353 = scmp.gt.s32.totalorder %s352, 0
        %s354 = scalar_select %p353, %s352, 0
        %s355 = smul.u32 %s30, 4
        %s356 = sadd.s32 %s355, 4
        %p357 = scmp.lt.s32.totalorder %s356, 11
        %s358 = scalar_select %p357, %s356, 11
        %s359 = smul.u32 4, %s30
        %v360 = vld [vmem:[#allocation4] sm:$0xff]
        %v361 = vld [vmem:[#allocation4 + $0x8] sm:$0xff]
        %v362 = vld [vmem:[#allocation4 + $0x10] sm:$0xff]
        %v363 = vld [vmem:[#allocation4 + $0x18] sm:$0xff]
        %v364 = vld [vmem:[#allocation4 + $0x20] sm:$0xff]
        %v365 = vld [vmem:[#allocation4 + $0x28] sm:$0xff]
        %v366 = vld [vmem:[#allocation4 + $0x30] sm:$0xff]
        %v367 = vld [vmem:[#allocation4 + $0x38] sm:$0xff]
        %v368 = vld [vmem:[#allocation4 + $0x40] sm:$0xff]
        %v369 = vld [vmem:[#allocation4 + $0x48] sm:$0xff]
        %v370 = vld [vmem:[#allocation4 + $0x50] sm:$0xff]
        %v371 = vld [vmem:[#allocation4 + $0x58] sm:$0xff]
        %v372 = vld [vmem:[#allocation4 + $0x60] sm:$0xff]
        %v373 = vld [vmem:[#allocation4 + $0x68] sm:$0xff]
        %v374 = vld [vmem:[#allocation4 + $0x70] sm:$0xff]
        %v375 = vld [vmem:[#allocation4 + $0x78] sm:$0xff]
        %v376 = vld [vmem:[#allocation4 + $0x80] sm:$0xff]
        %v377 = vld [vmem:[#allocation4 + $0x88] sm:$0xff]
        %v378 = vld [vmem:[%s306] sm:$0xff]
        %379 = vst [vmem:[#allocation2] sm:$0xff] %v378
        %v380 = vld [vmem:[%s297] sm:$0xff]
        %v381 = vld [vmem:[%s297 + $0x8] sm:$0xff]
        %382 = vst [vmem:[#allocation2 + $0x8] sm:$0xff] %v380
        %383 = vst [vmem:[#allocation2 + $0x10] sm:$0xff] %v381
        %v384 = vld [vmem:[%s297 + $0x10] sm:$0xff]
        %v385 = vld [vmem:[%s297 + $0x18] sm:$0xff]
        %386 = vst [vmem:[#allocation3] sm:$0xff] %v384
        %387 = vst [vmem:[#allocation3 + $0x8] sm:$0xff] %v385
        %v388 = vld [vmem:[%s315] sm:$0xff]
        %389 = vst [vmem:[#allocation3 + $0x10] sm:$0xff] %v388
        %p390 = scmp.eq.s32.totalorder %s30, 0
        // Predicated region
        $region53: #{tpu_custom_call.1} parent=35 // pred_check
          %p391 = pneg %p390
        $region54: #{tpu_custom_call.1} parent=35 // pred_check_branch
          %393 = sbr.rel (%p391) target = $region56
        $region55: #{tpu_custom_call.1} parent=35 // pred_region
          %v394 = vld [vmem:[%s297] sm:$0xff]
          %396 = vset.pattern.permute.xlu0 0
          %397 = vperm.xlu0 %396, %v394
          %v398 = vpop.permute.xlu0 %397
          %400 = vst [vmem:[#allocation2] sm:$0xff] %v398
        $region56: #{tpu_custom_call.1} parent=35 // pred_fallthru
          _
        %p401 = scmp.eq.s32.totalorder %s30, 2
        // Predicated region
        $region57: #{tpu_custom_call.1} parent=35 // pred_check
          %p402 = pneg %p401
        $region58: #{tpu_custom_call.1} parent=35 // pred_check_branch
          %404 = sbr.rel (%p402) target = $region60
        $region59: #{tpu_custom_call.1} parent=35 // pred_region
          %v405 = vld [vmem:[%s297 + $0x18] sm:$0xff]
          %407 = vset.pattern.permute.xlu0 127
          %408 = vperm.xlu0 %407, %v405
          %v409 = vpop.permute.xlu0 %408
          %411 = vst [vmem:[#allocation3 + $0x10] sm:$0xff] %v409
        $region60: #{tpu_custom_call.1} parent=35 // pred_fallthru
          _
        %v412 = vld [vmem:[#allocation2] sm:$0xff]
        %v413 = vld [vmem:[#allocation2 + $0x8] sm:$0xff]
        %v414 = vld [vmem:[#allocation2 + $0x10] sm:$0xff]
        %418 = vrot.lane.b32.xlu0 %v412, 8
        %v419 = vpop.permute.xlu0 %418
        %420 = vrot.lane.b32.xlu0 %v413, 8
        %v421 = vpop.permute.xlu0 %420
        %422 = vrot.lane.b32.xlu0 %v414, 8
        %v423 = vpop.permute.xlu0 %422
        %vm424 = vcmask 64512
        %v425 = vsel %vm424, %v419, %v421
        %v426 = vsel %vm424, %v421, %v423
        %vm428 = vcmask 130048
        %v429 = vsel %vm428, %v426, 0
        %431 = vmatprep.subr.mxu0 0.0
        %v432 = vand.u32 %v375, 4294901760
        %433 = vmatpush1.msra.mxu0 %v432
        %434 = vmatprep.subr.mxu0 0.0
        %v435 = vand.u32 %v374, 4294901760
        %436 = vmatpush1.msra.mxu0 %v435
        %437 = vmatprep.subr.mxu0 0.0
        %v438 = vand.u32 %v373, 4294901760
        %439 = vmatpush1.msra.mxu0 %v438
        %440 = vmatprep.subr.mxu0 0.0
        %v441 = vand.u32 %v372, 4294901760
        %442 = vmatpush1.msra.mxu0 %v441
        %443 = vmatprep.subr.mxu0 0.0
        %v444 = vand.u32 %v371, 4294901760
        %445 = vmatpush1.msra.mxu0 %v444
        %446 = vmatprep.subr.mxu0 0.0
        %v447 = vand.u32 %v370, 4294901760
        %448 = vmatpush1.msra.mxu0 %v447
        %449 = vmatprep.subr.mxu0 0.0
        %v450 = vand.u32 %v369, 4294901760
        %451 = vmatpush1.msra.mxu0 %v450
        %452 = vmatprep.subr.mxu0 0.0
        %v453 = vand.u32 %v368, 4294901760
        %454 = vmatpush1.msra.mxu0 %v453
        %455 = vmatprep.subr.mxu0 0.0
        %v456 = vand.u32 %v367, 4294901760
        %457 = vmatpush1.msra.mxu0 %v456
        %458 = vmatprep.subr.mxu0 0.0
        %v459 = vand.u32 %v366, 4294901760
        %460 = vmatpush1.msra.mxu0 %v459
        %461 = vmatprep.subr.mxu0 0.0
        %v462 = vand.u32 %v365, 4294901760
        %463 = vmatpush1.msra.mxu0 %v462
        %464 = vmatprep.subr.mxu0 0.0
        %v465 = vand.u32 %v364, 4294901760
        %466 = vmatpush1.msra.mxu0 %v465
        %467 = vmatprep.subr.mxu0 0.0
        %v468 = vand.u32 %v363, 4294901760
        %469 = vmatpush1.msra.mxu0 %v468
        %470 = vmatprep.subr.mxu0 0.0
        %v471 = vand.u32 %v362, 4294901760
        %472 = vmatpush1.msra.mxu0 %v471
        %473 = vmatprep.subr.mxu0 0.0
        %v474 = vand.u32 %v361, 4294901760
        %475 = vmatpush1.msra.mxu0 %v474
        %476 = vmatprep.subr.mxu0 0.0
        %v477 = vand.u32 %v360, 4294901760
        %478 = vmatpush1.msra.mxu0 %v477
        %479 = vmatprep.subr.mxu0 0.0
        %480 = vmatpush2.msra.mxu0 0.0
        %481 = vmatprep.subr.mxu0 0.0
        %482 = vmatpush2.msra.mxu0 0.0
        %483 = vmatprep.subr.mxu0 0.0
        %484 = vmatpush2.msra.mxu0 0.0
        %485 = vmatprep.subr.mxu0 0.0
        %486 = vmatpush2.msra.mxu0 0.0
        %487 = vmatprep.subr.mxu0 0.0
        %488 = vmatpush2.msra.mxu0 0.0
        %489 = vmatprep.subr.mxu0 0.0
        %490 = vmatpush2.msra.mxu0 0.0
        %491 = vmatprep.subr.mxu0 0.0
        %492 = vmatpush2.msra.mxu0 0.0
        %493 = vmatprep.subr.mxu0 0.0
        %494 = vmatpush2.msra.mxu0 0.0
        %495 = vmatprep.subr.mxu0 0.0
        %496 = vmatpush2.msra.mxu0 0.0
        %497 = vmatprep.subr.mxu0 0.0
        %498 = vmatpush2.msra.mxu0 0.0
        %499 = vmatprep.subr.mxu0 0.0
        %500 = vmatpush2.msra.mxu0 0.0
        %501 = vmatprep.subr.mxu0 0.0
        %502 = vmatpush2.msra.mxu0 0.0
        %503 = vmatprep.subr.mxu0 0.0
        %504 = vmatpush2.msra.mxu0 0.0
        %505 = vmatprep.subr.mxu0 0.0
        %506 = vmatpush2.msra.mxu0 0.0
        %507 = vmatprep.subr.mxu0 0.0
        %v508 = vand.u32 %v377, 4294901760
        %509 = vmatpush2.msra.mxu0 %v508
        %510 = vmatprep.subr.mxu0 0.0
        %v511 = vand.u32 %v376, 4294901760
        %512 = vmatpush2.msra.mxu0 %v511
        %v513 = vand.u32 %v429, 4294901760
        %v514 = vsub.f32 %v429, %v513
        %v515 = vand.u32 %v514, 4294901760
        %v516 = vsub.f32 %v514, %v515
        %v517 = vand.u32 %v516, 4294901760
        %518 = vmatprep.mubr.f32.mxu0 %v517
        %v519 = vand.u32 %v425, 4294901760
        %v520 = vsub.f32 %v425, %v519
        %v521 = vand.u32 %v520, 4294901760
        %v522 = vsub.f32 %v520, %v521
        %v523 = vand.u32 %v522, 4294901760
        %524 = vmatmul.mubr.f32.gmra.mxu0 %v523
        %v525 = vpop.f32.mrf.mxu0
        %v526 = vadd.f32 0.0, %v525
        %v527 = vpop.f32.mrf.mxu0
        %528 = vdwg.mxu0
        %529 = vmatprep.subr.mxu0 0.0
        %v530 = vand.u32 %v375, 4294901760
        %v531 = vsub.f32 %v375, %v530
        %v532 = vand.u32 %v531, 4294901760
        %v533 = vsub.f32 %v531, %v532
        %v534 = vand.u32 %v533, 4294901760
        %535 = vmatpush1.msra.mxu0 %v534
        %536 = vmatprep.subr.mxu0 0.0
        %v537 = vand.u32 %v374, 4294901760
        %v538 = vsub.f32 %v374, %v537
        %v539 = vand.u32 %v538, 4294901760
        %v540 = vsub.f32 %v538, %v539
        %v541 = vand.u32 %v540, 4294901760
        %542 = vmatpush1.msra.mxu0 %v541
        %543 = vmatprep.subr.mxu0 0.0
        %v544 = vand.u32 %v373, 4294901760
        %v545 = vsub.f32 %v373, %v544
        %v546 = vand.u32 %v545, 4294901760
        %v547 = vsub.f32 %v545, %v546
        %v548 = vand.u32 %v547, 4294901760
        %549 = vmatpush1.msra.mxu0 %v548
        %550 = vmatprep.subr.mxu0 0.0
        %v551 = vand.u32 %v372, 4294901760
        %v552 = vsub.f32 %v372, %v551
        %v553 = vand.u32 %v552, 4294901760
        %v554 = vsub.f32 %v552, %v553
        %v555 = vand.u32 %v554, 4294901760
        %556 = vmatpush1.msra.mxu0 %v555
        %557 = vmatprep.subr.mxu0 0.0
        %v558 = vand.u32 %v371, 4294901760
        %v559 = vsub.f32 %v371, %v558
        %v560 = vand.u32 %v559, 4294901760
        %v561 = vsub.f32 %v559, %v560
        %v562 = vand.u32 %v561, 4294901760
        %563 = vmatpush1.msra.mxu0 %v562
        %564 = vmatprep.subr.mxu0 0.0
        %v565 = vand.u32 %v370, 4294901760
        %v566 = vsub.f32 %v370, %v565
        %v567 = vand.u32 %v566, 4294901760
        %v568 = vsub.f32 %v566, %v567
        %v569 = vand.u32 %v568, 4294901760
        %570 = vmatpush1.msra.mxu0 %v569
        %571 = vmatprep.subr.mxu0 0.0
        %v572 = vand.u32 %v369, 4294901760
        %v573 = vsub.f32 %v369, %v572
        %v574 = vand.u32 %v573, 4294901760
        %v575 = vsub.f32 %v573, %v574
        %v576 = vand.u32 %v575, 4294901760
        %577 = vmatpush1.msra.mxu0 %v576
        %578 = vmatprep.subr.mxu0 0.0
        %v579 = vand.u32 %v368, 4294901760
        %v580 = vsub.f32 %v368, %v579
        %v581 = vand.u32 %v580, 4294901760
        %v582 = vsub.f32 %v580, %v581
        %v583 = vand.u32 %v582, 4294901760
        %584 = vmatpush1.msra.mxu0 %v583
        %585 = vmatprep.subr.mxu0 0.0
        %v586 = vand.u32 %v367, 4294901760
        %v587 = vsub.f32 %v367, %v586
        %v588 = vand.u32 %v587, 4294901760
        %v589 = vsub.f32 %v587, %v588
        %v590 = vand.u32 %v589, 4294901760
        %591 = vmatpush1.msra.mxu0 %v590
        %592 = vmatprep.subr.mxu0 0.0
        %v593 = vand.u32 %v366, 4294901760
        %v594 = vsub.f32 %v366, %v593
        %v595 = vand.u32 %v594, 4294901760
        %v596 = vsub.f32 %v594, %v595
        %v597 = vand.u32 %v596, 4294901760
        %598 = vmatpush1.msra.mxu0 %v597
        %599 = vmatprep.subr.mxu0 0.0
        %v600 = vand.u32 %v365, 4294901760
        %v601 = vsub.f32 %v365, %v600
        %v602 = vand.u32 %v601, 4294901760
        %v603 = vsub.f32 %v601, %v602
        %v604 = vand.u32 %v603, 4294901760
        %605 = vmatpush1.msra.mxu0 %v604
        %606 = vmatprep.subr.mxu0 0.0
        %v607 = vand.u32 %v364, 4294901760
        %v608 = vsub.f32 %v364, %v607
        %v609 = vand.u32 %v608, 4294901760
        %v610 = vsub.f32 %v608, %v609
        %v611 = vand.u32 %v610, 4294901760
        %612 = vmatpush1.msra.mxu0 %v611
        %613 = vmatprep.subr.mxu0 0.0
        %v614 = vand.u32 %v363, 4294901760
        %v615 = vsub.f32 %v363, %v614
        %v616 = vand.u32 %v615, 4294901760
        %v617 = vsub.f32 %v615, %v616
        %v618 = vand.u32 %v617, 4294901760
        %619 = vmatpush1.msra.mxu0 %v618
        %620 = vmatprep.subr.mxu0 0.0
        %v621 = vand.u32 %v362, 4294901760
        %v622 = vsub.f32 %v362, %v621
        %v623 = vand.u32 %v622, 4294901760
        %v624 = vsub.f32 %v622, %v623
        %v625 = vand.u32 %v624, 4294901760
        %626 = vmatpush1.msra.mxu0 %v625
        %627 = vmatprep.subr.mxu0 0.0
        %v628 = vand.u32 %v361, 4294901760
        %v629 = vsub.f32 %v361, %v628
        %v630 = vand.u32 %v629, 4294901760
        %v631 = vsub.f32 %v629, %v630
        %v632 = vand.u32 %v631, 4294901760
        %633 = vmatpush1.msra.mxu0 %v632
        %634 = vmatprep.subr.mxu0 0.0
        %v635 = vand.u32 %v360, 4294901760
        %v636 = vsub.f32 %v360, %v635
        %v637 = vand.u32 %v636, 4294901760
        %v638 = vsub.f32 %v636, %v637
        %v639 = vand.u32 %v638, 4294901760
        %640 = vmatpush1.msra.mxu0 %v639
        %641 = vmatprep.subr.mxu0 0.0
        %642 = vmatpush2.msra.mxu0 0.0
        %643 = vmatprep.subr.mxu0 0.0
        %644 = vmatpush2.msra.mxu0 0.0
        %645 = vmatprep.subr.mxu0 0.0
        %646 = vmatpush2.msra.mxu0 0.0
        %647 = vmatprep.subr.mxu0 0.0
        %648 = vmatpush2.msra.mxu0 0.0
        %649 = vmatprep.subr.mxu0 0.0
        %650 = vmatpush2.msra.mxu0 0.0
        %651 = vmatprep.subr.mxu0 0.0
        %652 = vmatpush2.msra.mxu0 0.0
        %653 = vmatprep.subr.mxu0 0.0
        %654 = vmatpush2.msra.mxu0 0.0
        %655 = vmatprep.subr.mxu0 0.0
        %656 = vmatpush2.msra.mxu0 0.0
        %657 = vmatprep.subr.mxu0 0.0
        %658 = vmatpush2.msra.mxu0 0.0
        %659 = vmatprep.subr.mxu0 0.0
        %660 = vmatpush2.msra.mxu0 0.0
        %661 = vmatprep.subr.mxu0 0.0
        %662 = vmatpush2.msra.mxu0 0.0
        %663 = vmatprep.subr.mxu0 0.0
        %664 = vmatpush2.msra.mxu0 0.0
        %665 = vmatprep.subr.mxu0 0.0
        %666 = vmatpush2.msra.mxu0 0.0
        %667 = vmatprep.subr.mxu0 0.0
        %668 = vmatpush2.msra.mxu0 0.0
        %669 = vmatprep.subr.mxu0 0.0
        %v670 = vand.u32 %v377, 4294901760
        %v671 = vsub.f32 %v377, %v670
        %v672 = vand.u32 %v671, 4294901760
        %v673 = vsub.f32 %v671, %v672
        %v674 = vand.u32 %v673, 4294901760
        %675 = vmatpush2.msra.mxu0 %v674
        %676 = vmatprep.subr.mxu0 0.0
        %v677 = vand.u32 %v376, 4294901760
        %v678 = vsub.f32 %v376, %v677
        %v679 = vand.u32 %v678, 4294901760
        %v680 = vsub.f32 %v678, %v679
        %v681 = vand.u32 %v680, 4294901760
        %682 = vmatpush2.msra.mxu0 %v681
        %v683 = vand.u32 %v429, 4294901760
        %684 = vmatprep.mubr.f32.mxu0 %v683
        %v685 = vand.u32 %v425, 4294901760
        %686 = vmatmul.mubr.f32.gmra.mxu0 %v685
        %v687 = vpop.f32.mrf.mxu0
        %v688 = vadd.f32 %v526, %v687
        %v689 = vpop.f32.mrf.mxu0
        %690 = vdwg.mxu0
        %691 = vmatprep.subr.mxu0 0.0
        %v692 = vand.u32 %v375, 4294901760
        %v693 = vsub.f32 %v375, %v692
        %694 = vmatpush1.msra.mxu0 %v693
        %695 = vmatprep.subr.mxu0 0.0
        %v696 = vand.u32 %v374, 4294901760
        %v697 = vsub.f32 %v374, %v696
        %698 = vmatpush1.msra.mxu0 %v697
        %699 = vmatprep.subr.mxu0 0.0
        %v700 = vand.u32 %v373, 4294901760
        %v701 = vsub.f32 %v373, %v700
        %702 = vmatpush1.msra.mxu0 %v701
        %703 = vmatprep.subr.mxu0 0.0
        %v704 = vand.u32 %v372, 4294901760
        %v705 = vsub.f32 %v372, %v704
        %706 = vmatpush1.msra.mxu0 %v705
        %707 = vmatprep.subr.mxu0 0.0
        %v708 = vand.u32 %v371, 4294901760
        %v709 = vsub.f32 %v371, %v708
        %710 = vmatpush1.msra.mxu0 %v709
        %711 = vmatprep.subr.mxu0 0.0
        %v712 = vand.u32 %v370, 4294901760
        %v713 = vsub.f32 %v370, %v712
        %714 = vmatpush1.msra.mxu0 %v713
        %715 = vmatprep.subr.mxu0 0.0
        %v716 = vand.u32 %v369, 4294901760
        %v717 = vsub.f32 %v369, %v716
        %718 = vmatpush1.msra.mxu0 %v717
        %719 = vmatprep.subr.mxu0 0.0
        %v720 = vand.u32 %v368, 4294901760
        %v721 = vsub.f32 %v368, %v720
        %722 = vmatpush1.msra.mxu0 %v721
        %723 = vmatprep.subr.mxu0 0.0
        %v724 = vand.u32 %v367, 4294901760
        %v725 = vsub.f32 %v367, %v724
        %726 = vmatpush1.msra.mxu0 %v725
        %727 = vmatprep.subr.mxu0 0.0
        %v728 = vand.u32 %v366, 4294901760
        %v729 = vsub.f32 %v366, %v728
        %730 = vmatpush1.msra.mxu0 %v729
        %731 = vmatprep.subr.mxu0 0.0
        %v732 = vand.u32 %v365, 4294901760
        %v733 = vsub.f32 %v365, %v732
        %734 = vmatpush1.msra.mxu0 %v733
        %735 = vmatprep.subr.mxu0 0.0
        %v736 = vand.u32 %v364, 4294901760
        %v737 = vsub.f32 %v364, %v736
        %738 = vmatpush1.msra.mxu0 %v737
        %739 = vmatprep.subr.mxu0 0.0
        %v740 = vand.u32 %v363, 4294901760
        %v741 = vsub.f32 %v363, %v740
        %742 = vmatpush1.msra.mxu0 %v741
        %743 = vmatprep.subr.mxu0 0.0
        %v744 = vand.u32 %v362, 4294901760
        %v745 = vsub.f32 %v362, %v744
        %746 = vmatpush1.msra.mxu0 %v745
        %747 = vmatprep.subr.mxu0 0.0
        %v748 = vand.u32 %v361, 4294901760
        %v749 = vsub.f32 %v361, %v748
        %750 = vmatpush1.msra.mxu0 %v749
        %751 = vmatprep.subr.mxu0 0.0
        %v752 = vand.u32 %v360, 4294901760
        %v753 = vsub.f32 %v360, %v752
        %754 = vmatpush1.msra.mxu0 %v753
        %755 = vmatprep.subr.mxu0 0.0
        %756 = vmatpush2.msra.mxu0 0.0
        %757 = vmatprep.subr.mxu0 0.0
        %758 = vmatpush2.msra.mxu0 0.0
        %759 = vmatprep.subr.mxu0 0.0
        %760 = vmatpush2.msra.mxu0 0.0
        %761 = vmatprep.subr.mxu0 0.0
        %762 = vmatpush2.msra.mxu0 0.0
        %763 = vmatprep.subr.mxu0 0.0
        %764 = vmatpush2.msra.mxu0 0.0
        %765 = vmatprep.subr.mxu0 0.0
        %766 = vmatpush2.msra.mxu0 0.0
        %767 = vmatprep.subr.mxu0 0.0
        %768 = vmatpush2.msra.mxu0 0.0
        %769 = vmatprep.subr.mxu0 0.0
        %770 = vmatpush2.msra.mxu0 0.0
        %771 = vmatprep.subr.mxu0 0.0
        %772 = vmatpush2.msra.mxu0 0.0
        %773 = vmatprep.subr.mxu0 0.0
        %774 = vmatpush2.msra.mxu0 0.0
        %775 = vmatprep.subr.mxu0 0.0
        %776 = vmatpush2.msra.mxu0 0.0
        %777 = vmatprep.subr.mxu0 0.0
        %778 = vmatpush2.msra.mxu0 0.0
        %779 = vmatprep.subr.mxu0 0.0
        %780 = vmatpush2.msra.mxu0 0.0
        %781 = vmatprep.subr.mxu0 0.0
        %782 = vmatpush2.msra.mxu0 0.0
        %783 = vmatprep.subr.mxu0 0.0
        %v784 = vand.u32 %v377, 4294901760
        %v785 = vsub.f32 %v377, %v784
        %786 = vmatpush2.msra.mxu0 %v785
        %787 = vmatprep.subr.mxu0 0.0
        %v788 = vand.u32 %v376, 4294901760
        %v789 = vsub.f32 %v376, %v788
        %790 = vmatpush2.msra.mxu0 %v789
        %v791 = vand.u32 %v429, 4294901760
        %v792 = vsub.f32 %v429, %v791
        %793 = vmatprep.mubr.f32.mxu0 %v792
        %v794 = vand.u32 %v425, 4294901760
        %v795 = vsub.f32 %v425, %v794
        %796 = vmatmul.mubr.f32.gmra.mxu0 %v795
        %v797 = vpop.f32.mrf.mxu0
        %v798 = vadd.f32 %v688, %v797
        %v799 = vpop.f32.mrf.mxu0
        %800 = vdwg.mxu0
        %801 = vmatprep.subr.mxu0 0.0
        %v802 = vand.u32 %v375, 4294901760
        %803 = vmatpush1.msra.mxu0 %v802
        %804 = vmatprep.subr.mxu0 0.0
        %v805 = vand.u32 %v374, 4294901760
        %806 = vmatpush1.msra.mxu0 %v805
        %807 = vmatprep.subr.mxu0 0.0
        %v808 = vand.u32 %v373, 4294901760
        %809 = vmatpush1.msra.mxu0 %v808
        %810 = vmatprep.subr.mxu0 0.0
        %v811 = vand.u32 %v372, 4294901760
        %812 = vmatpush1.msra.mxu0 %v811
        %813 = vmatprep.subr.mxu0 0.0
        %v814 = vand.u32 %v371, 4294901760
        %815 = vmatpush1.msra.mxu0 %v814
        %816 = vmatprep.subr.mxu0 0.0
        %v817 = vand.u32 %v370, 4294901760
        %818 = vmatpush1.msra.mxu0 %v817
        %819 = vmatprep.subr.mxu0 0.0
        %v820 = vand.u32 %v369, 4294901760
        %821 = vmatpush1.msra.mxu0 %v820
        %822 = vmatprep.subr.mxu0 0.0
        %v823 = vand.u32 %v368, 4294901760
        %824 = vmatpush1.msra.mxu0 %v823
        %825 = vmatprep.subr.mxu0 0.0
        %v826 = vand.u32 %v367, 4294901760
        %827 = vmatpush1.msra.mxu0 %v826
        %828 = vmatprep.subr.mxu0 0.0
        %v829 = vand.u32 %v366, 4294901760
        %830 = vmatpush1.msra.mxu0 %v829
        %831 = vmatprep.subr.mxu0 0.0
        %v832 = vand.u32 %v365, 4294901760
        %833 = vmatpush1.msra.mxu0 %v832
        %834 = vmatprep.subr.mxu0 0.0
        %v835 = vand.u32 %v364, 4294901760
        %836 = vmatpush1.msra.mxu0 %v835
        %837 = vmatprep.subr.mxu0 0.0
        %v838 = vand.u32 %v363, 4294901760
        %839 = vmatpush1.msra.mxu0 %v838
        %840 = vmatprep.subr.mxu0 0.0
        %v841 = vand.u32 %v362, 4294901760
        %842 = vmatpush1.msra.mxu0 %v841
        %843 = vmatprep.subr.mxu0 0.0
        %v844 = vand.u32 %v361, 4294901760
        %845 = vmatpush1.msra.mxu0 %v844
        %846 = vmatprep.subr.mxu0 0.0
        %v847 = vand.u32 %v360, 4294901760
        %848 = vmatpush1.msra.mxu0 %v847
        %849 = vmatprep.subr.mxu0 0.0
        %850 = vmatpush2.msra.mxu0 0.0
        %851 = vmatprep.subr.mxu0 0.0
        %852 = vmatpush2.msra.mxu0 0.0
        %853 = vmatprep.subr.mxu0 0.0
        %854 = vmatpush2.msra.mxu0 0.0
        %855 = vmatprep.subr.mxu0 0.0
        %856 = vmatpush2.msra.mxu0 0.0
        %857 = vmatprep.subr.mxu0 0.0
        %858 = vmatpush2.msra.mxu0 0.0
        %859 = vmatprep.subr.mxu0 0.0
        %860 = vmatpush2.msra.mxu0 0.0
        %861 = vmatprep.subr.mxu0 0.0
        %862 = vmatpush2.msra.mxu0 0.0
        %863 = vmatprep.subr.mxu0 0.0
        %864 = vmatpush2.msra.mxu0 0.0
        %865 = vmatprep.subr.mxu0 0.0
        %866 = vmatpush2.msra.mxu0 0.0
        %867 = vmatprep.subr.mxu0 0.0
        %868 = vmatpush2.msra.mxu0 0.0
        %869 = vmatprep.subr.mxu0 0.0
        %870 = vmatpush2.msra.mxu0 0.0
        %871 = vmatprep.subr.mxu0 0.0
        %872 = vmatpush2.msra.mxu0 0.0
        %873 = vmatprep.subr.mxu0 0.0
        %874 = vmatpush2.msra.mxu0 0.0
        %875 = vmatprep.subr.mxu0 0.0
        %876 = vmatpush2.msra.mxu0 0.0
        %877 = vmatprep.subr.mxu0 0.0
        %v878 = vand.u32 %v377, 4294901760
        %879 = vmatpush2.msra.mxu0 %v878
        %880 = vmatprep.subr.mxu0 0.0
        %v881 = vand.u32 %v376, 4294901760
        %882 = vmatpush2.msra.mxu0 %v881
        %v883 = vand.u32 %v429, 4294901760
        %v884 = vsub.f32 %v429, %v883
        %v885 = vand.u32 %v884, 4294901760
        %886 = vmatprep.mubr.f32.mxu0 %v885
        %v887 = vand.u32 %v425, 4294901760
        %v888 = vsub.f32 %v425, %v887
        %v889 = vand.u32 %v888, 4294901760
        %890 = vmatmul.mubr.f32.gmra.mxu0 %v889
        %v891 = vpop.f32.mrf.mxu0
        %v892 = vadd.f32 %v798, %v891
        %v893 = vpop.f32.mrf.mxu0
        %894 = vdwg.mxu0
        %895 = vmatprep.subr.mxu0 0.0
        %v896 = vand.u32 %v375, 4294901760
        %v897 = vsub.f32 %v375, %v896
        %v898 = vand.u32 %v897, 4294901760
        %899 = vmatpush1.msra.mxu0 %v898
        %900 = vmatprep.subr.mxu0 0.0
        %v901 = vand.u32 %v374, 4294901760
        %v902 = vsub.f32 %v374, %v901
        %v903 = vand.u32 %v902, 4294901760
        %904 = vmatpush1.msra.mxu0 %v903
        %905 = vmatprep.subr.mxu0 0.0
        %v906 = vand.u32 %v373, 4294901760
        %v907 = vsub.f32 %v373, %v906
        %v908 = vand.u32 %v907, 4294901760
        %909 = vmatpush1.msra.mxu0 %v908
        %910 = vmatprep.subr.mxu0 0.0
        %v911 = vand.u32 %v372, 4294901760
        %v912 = vsub.f32 %v372, %v911
        %v913 = vand.u32 %v912, 4294901760
        %914 = vmatpush1.msra.mxu0 %v913
        %915 = vmatprep.subr.mxu0 0.0
        %v916 = vand.u32 %v371, 4294901760
        %v917 = vsub.f32 %v371, %v916
        %v918 = vand.u32 %v917, 4294901760
        %919 = vmatpush1.msra.mxu0 %v918
        %920 = vmatprep.subr.mxu0 0.0
        %v921 = vand.u32 %v370, 4294901760
        %v922 = vsub.f32 %v370, %v921
        %v923 = vand.u32 %v922, 4294901760
        %924 = vmatpush1.msra.mxu0 %v923
        %925 = vmatprep.subr.mxu0 0.0
        %v926 = vand.u32 %v369, 4294901760
        %v927 = vsub.f32 %v369, %v926
        %v928 = vand.u32 %v927, 4294901760
        %929 = vmatpush1.msra.mxu0 %v928
        %930 = vmatprep.subr.mxu0 0.0
        %v931 = vand.u32 %v368, 4294901760
        %v932 = vsub.f32 %v368, %v931
        %v933 = vand.u32 %v932, 4294901760
        %934 = vmatpush1.msra.mxu0 %v933
        %935 = vmatprep.subr.mxu0 0.0
        %v936 = vand.u32 %v367, 4294901760
        %v937 = vsub.f32 %v367, %v936
        %v938 = vand.u32 %v937, 4294901760
        %939 = vmatpush1.msra.mxu0 %v938
        %940 = vmatprep.subr.mxu0 0.0
        %v941 = vand.u32 %v366, 4294901760
        %v942 = vsub.f32 %v366, %v941
        %v943 = vand.u32 %v942, 4294901760
        %944 = vmatpush1.msra.mxu0 %v943
        %945 = vmatprep.subr.mxu0 0.0
        %v946 = vand.u32 %v365, 4294901760
        %v947 = vsub.f32 %v365, %v946
        %v948 = vand.u32 %v947, 4294901760
        %949 = vmatpush1.msra.mxu0 %v948
        %950 = vmatprep.subr.mxu0 0.0
        %v951 = vand.u32 %v364, 4294901760
        %v952 = vsub.f32 %v364, %v951
        %v953 = vand.u32 %v952, 4294901760
        %954 = vmatpush1.msra.mxu0 %v953
        %955 = vmatprep.subr.mxu0 0.0
        %v956 = vand.u32 %v363, 4294901760
        %v957 = vsub.f32 %v363, %v956
        %v958 = vand.u32 %v957, 4294901760
        %959 = vmatpush1.msra.mxu0 %v958
        %960 = vmatprep.subr.mxu0 0.0
        %v961 = vand.u32 %v362, 4294901760
        %v962 = vsub.f32 %v362, %v961
        %v963 = vand.u32 %v962, 4294901760
        %964 = vmatpush1.msra.mxu0 %v963
        %965 = vmatprep.subr.mxu0 0.0
        %v966 = vand.u32 %v361, 4294901760
        %v967 = vsub.f32 %v361, %v966
        %v968 = vand.u32 %v967, 4294901760
        %969 = vmatpush1.msra.mxu0 %v968
        %970 = vmatprep.subr.mxu0 0.0
        %v971 = vand.u32 %v360, 4294901760
        %v972 = vsub.f32 %v360, %v971
        %v973 = vand.u32 %v972, 4294901760
        %974 = vmatpush1.msra.mxu0 %v973
        %975 = vmatprep.subr.mxu0 0.0
        %976 = vmatpush2.msra.mxu0 0.0
        %977 = vmatprep.subr.mxu0 0.0
        %978 = vmatpush2.msra.mxu0 0.0
        %979 = vmatprep.subr.mxu0 0.0
        %980 = vmatpush2.msra.mxu0 0.0
        %981 = vmatprep.subr.mxu0 0.0
        %982 = vmatpush2.msra.mxu0 0.0
        %983 = vmatprep.subr.mxu0 0.0
        %984 = vmatpush2.msra.mxu0 0.0
        %985 = vmatprep.subr.mxu0 0.0
        %986 = vmatpush2.msra.mxu0 0.0
        %987 = vmatprep.subr.mxu0 0.0
        %988 = vmatpush2.msra.mxu0 0.0
        %989 = vmatprep.subr.mxu0 0.0
        %990 = vmatpush2.msra.mxu0 0.0
        %991 = vmatprep.subr.mxu0 0.0
        %992 = vmatpush2.msra.mxu0 0.0
        %993 = vmatprep.subr.mxu0 0.0
        %994 = vmatpush2.msra.mxu0 0.0
        %995 = vmatprep.subr.mxu0 0.0
        %996 = vmatpush2.msra.mxu0 0.0
        %997 = vmatprep.subr.mxu0 0.0
        %998 = vmatpush2.msra.mxu0 0.0
        %999 = vmatprep.subr.mxu0 0.0
        %1000 = vmatpush2.msra.mxu0 0.0
        %1001 = vmatprep.subr.mxu0 0.0
        %1002 = vmatpush2.msra.mxu0 0.0
        %1003 = vmatprep.subr.mxu0 0.0
        %v1004 = vand.u32 %v377, 4294901760
        %v1005 = vsub.f32 %v377, %v1004
        %v1006 = vand.u32 %v1005, 4294901760
        %1007 = vmatpush2.msra.mxu0 %v1006
        %1008 = vmatprep.subr.mxu0 0.0
        %v1009 = vand.u32 %v376, 4294901760
        %v1010 = vsub.f32 %v376, %v1009
        %v1011 = vand.u32 %v1010, 4294901760
        %1012 = vmatpush2.msra.mxu0 %v1011
        %v1013 = vand.u32 %v429, 4294901760
        %1014 = vmatprep.mubr.f32.mxu0 %v1013
        %v1015 = vand.u32 %v425, 4294901760
        %1016 = vmatmul.mubr.f32.gmra.mxu0 %v1015
        %v1017 = vpop.f32.mrf.mxu0
        %v1018 = vadd.f32 %v892, %v1017
        %v1019 = vpop.f32.mrf.mxu0
        %1020 = vdwg.mxu0
        %1021 = vmatprep.subr.mxu0 0.0
        %v1022 = vand.u32 %v375, 4294901760
        %1023 = vmatpush1.msra.mxu0 %v1022
        %1024 = vmatprep.subr.mxu0 0.0
        %v1025 = vand.u32 %v374, 4294901760
        %1026 = vmatpush1.msra.mxu0 %v1025
        %1027 = vmatprep.subr.mxu0 0.0
        %v1028 = vand.u32 %v373, 4294901760
        %1029 = vmatpush1.msra.mxu0 %v1028
        %1030 = vmatprep.subr.mxu0 0.0
        %v1031 = vand.u32 %v372, 4294901760
        %1032 = vmatpush1.msra.mxu0 %v1031
        %1033 = vmatprep.subr.mxu0 0.0
        %v1034 = vand.u32 %v371, 4294901760
        %1035 = vmatpush1.msra.mxu0 %v1034
        %1036 = vmatprep.subr.mxu0 0.0
        %v1037 = vand.u32 %v370, 4294901760
        %1038 = vmatpush1.msra.mxu0 %v1037
        %1039 = vmatprep.subr.mxu0 0.0
        %v1040 = vand.u32 %v369, 4294901760
        %1041 = vmatpush1.msra.mxu0 %v1040
        %1042 = vmatprep.subr.mxu0 0.0
        %v1043 = vand.u32 %v368, 4294901760
        %1044 = vmatpush1.msra.mxu0 %v1043
        %1045 = vmatprep.subr.mxu0 0.0
        %v1046 = vand.u32 %v367, 4294901760
        %1047 = vmatpush1.msra.mxu0 %v1046
        %1048 = vmatprep.subr.mxu0 0.0
        %v1049 = vand.u32 %v366, 4294901760
        %1050 = vmatpush1.msra.mxu0 %v1049
        %1051 = vmatprep.subr.mxu0 0.0
        %v1052 = vand.u32 %v365, 4294901760
        %1053 = vmatpush1.msra.mxu0 %v1052
        %1054 = vmatprep.subr.mxu0 0.0
        %v1055 = vand.u32 %v364, 4294901760
        %1056 = vmatpush1.msra.mxu0 %v1055
        %1057 = vmatprep.subr.mxu0 0.0
        %v1058 = vand.u32 %v363, 4294901760
        %1059 = vmatpush1.msra.mxu0 %v1058
        %1060 = vmatprep.subr.mxu0 0.0
        %v1061 = vand.u32 %v362, 4294901760
        %1062 = vmatpush1.msra.mxu0 %v1061
        %1063 = vmatprep.subr.mxu0 0.0
        %v1064 = vand.u32 %v361, 4294901760
        %1065 = vmatpush1.msra.mxu0 %v1064
        %1066 = vmatprep.subr.mxu0 0.0
        %v1067 = vand.u32 %v360, 4294901760
        %1068 = vmatpush1.msra.mxu0 %v1067
        %1069 = vmatprep.subr.mxu0 0.0
        %1070 = vmatpush2.msra.mxu0 0.0
        %1071 = vmatprep.subr.mxu0 0.0
        %1072 = vmatpush2.msra.mxu0 0.0
        %1073 = vmatprep.subr.mxu0 0.0
        %1074 = vmatpush2.msra.mxu0 0.0
        %1075 = vmatprep.subr.mxu0 0.0
        %1076 = vmatpush2.msra.mxu0 0.0
        %1077 = vmatprep.subr.mxu0 0.0
        %1078 = vmatpush2.msra.mxu0 0.0
        %1079 = vmatprep.subr.mxu0 0.0
        %1080 = vmatpush2.msra.mxu0 0.0
        %1081 = vmatprep.subr.mxu0 0.0
        %1082 = vmatpush2.msra.mxu0 0.0
        %1083 = vmatprep.subr.mxu0 0.0
        %1084 = vmatpush2.msra.mxu0 0.0
        %1085 = vmatprep.subr.mxu0 0.0
        %1086 = vmatpush2.msra.mxu0 0.0
        %1087 = vmatprep.subr.mxu0 0.0
        %1088 = vmatpush2.msra.mxu0 0.0
        %1089 = vmatprep.subr.mxu0 0.0
        %1090 = vmatpush2.msra.mxu0 0.0
        %1091 = vmatprep.subr.mxu0 0.0
        %1092 = vmatpush2.msra.mxu0 0.0
        %1093 = vmatprep.subr.mxu0 0.0
        %1094 = vmatpush2.msra.mxu0 0.0
        %1095 = vmatprep.subr.mxu0 0.0
        %1096 = vmatpush2.msra.mxu0 0.0
        %1097 = vmatprep.subr.mxu0 0.0
        %v1098 = vand.u32 %v377, 4294901760
        %1099 = vmatpush2.msra.mxu0 %v1098
        %1100 = vmatprep.subr.mxu0 0.0
        %v1101 = vand.u32 %v376, 4294901760
        %1102 = vmatpush2.msra.mxu0 %v1101
        %v1103 = vand.u32 %v429, 4294901760
        %1104 = vmatprep.mubr.f32.mxu0 %v1103
        %v1105 = vand.u32 %v425, 4294901760
        %1106 = vmatmul.mubr.f32.gmra.mxu0 %v1105
        %v1107 = vpop.f32.mrf.mxu0
        %v1108 = vadd.f32 %v1018, %v1107
        %v1109 = vpop.f32.mrf.mxu0
        %1110 = vdwg.mxu0
        %1111 = vst [vmem:[%s349] sm:$0xff] %v1108
        %v1112 = vld [vmem:[%s297] sm:$0xff]
        %v1113 = vld [vmem:[%s297 + $0x8] sm:$0xff]
        %v1114 = vld [vmem:[%s297 + $0x10] sm:$0xff]
        %1118 = vrot.lane.b32.xlu0 %v1112, 8
        %v1119 = vpop.permute.xlu0 %1118
        %1120 = vrot.lane.b32.xlu0 %v1113, 8
        %v1121 = vpop.permute.xlu0 %1120
        %1122 = vrot.lane.b32.xlu0 %v1114, 8
        %v1123 = vpop.permute.xlu0 %1122
        %v1124 = vsel %vm424, %v1119, %v1121
        %v1125 = vsel %vm424, %v1121, %v1123
        %v1127 = vsel %vm428, %v1125, 0
        %1129 = vmatprep.subr.mxu0 0.0
        %v1130 = vand.u32 %v375, 4294901760
        %1131 = vmatpush1.msra.mxu0 %v1130
        %1132 = vmatprep.subr.mxu0 0.0
        %v1133 = vand.u32 %v374, 4294901760
        %1134 = vmatpush1.msra.mxu0 %v1133
        %1135 = vmatprep.subr.mxu0 0.0
        %v1136 = vand.u32 %v373, 4294901760
        %1137 = vmatpush1.msra.mxu0 %v1136
        %1138 = vmatprep.subr.mxu0 0.0
        %v1139 = vand.u32 %v372, 4294901760
        %1140 = vmatpush1.msra.mxu0 %v1139
        %1141 = vmatprep.subr.mxu0 0.0
        %v1142 = vand.u32 %v371, 4294901760
        %1143 = vmatpush1.msra.mxu0 %v1142
        %1144 = vmatprep.subr.mxu0 0.0
        %v1145 = vand.u32 %v370, 4294901760
        %1146 = vmatpush1.msra.mxu0 %v1145
        %1147 = vmatprep.subr.mxu0 0.0
        %v1148 = vand.u32 %v369, 4294901760
        %1149 = vmatpush1.msra.mxu0 %v1148
        %1150 = vmatprep.subr.mxu0 0.0
        %v1151 = vand.u32 %v368, 4294901760
        %1152 = vmatpush1.msra.mxu0 %v1151
        %1153 = vmatprep.subr.mxu0 0.0
        %v1154 = vand.u32 %v367, 4294901760
        %1155 = vmatpush1.msra.mxu0 %v1154
        %1156 = vmatprep.subr.mxu0 0.0
        %v1157 = vand.u32 %v366, 4294901760
        %1158 = vmatpush1.msra.mxu0 %v1157
        %1159 = vmatprep.subr.mxu0 0.0
        %v1160 = vand.u32 %v365, 4294901760
        %1161 = vmatpush1.msra.mxu0 %v1160
        %1162 = vmatprep.subr.mxu0 0.0
        %v1163 = vand.u32 %v364, 4294901760
        %1164 = vmatpush1.msra.mxu0 %v1163
        %1165 = vmatprep.subr.mxu0 0.0
        %v1166 = vand.u32 %v363, 4294901760
        %1167 = vmatpush1.msra.mxu0 %v1166
        %1168 = vmatprep.subr.mxu0 0.0
        %v1169 = vand.u32 %v362, 4294901760
        %1170 = vmatpush1.msra.mxu0 %v1169
        %1171 = vmatprep.subr.mxu0 0.0
        %v1172 = vand.u32 %v361, 4294901760
        %1173 = vmatpush1.msra.mxu0 %v1172
        %1174 = vmatprep.subr.mxu0 0.0
        %v1175 = vand.u32 %v360, 4294901760
        %1176 = vmatpush1.msra.mxu0 %v1175
        %1177 = vmatprep.subr.mxu0 0.0
        %1178 = vmatpush2.msra.mxu0 0.0
        %1179 = vmatprep.subr.mxu0 0.0
        %1180 = vmatpush2.msra.mxu0 0.0
        %1181 = vmatprep.subr.mxu0 0.0
        %1182 = vmatpush2.msra.mxu0 0.0
        %1183 = vmatprep.subr.mxu0 0.0
        %1184 = vmatpush2.msra.mxu0 0.0
        %1185 = vmatprep.subr.mxu0 0.0
        %1186 = vmatpush2.msra.mxu0 0.0
        %1187 = vmatprep.subr.mxu0 0.0
        %1188 = vmatpush2.msra.mxu0 0.0
        %1189 = vmatprep.subr.mxu0 0.0
        %1190 = vmatpush2.msra.mxu0 0.0
        %1191 = vmatprep.subr.mxu0 0.0
        %1192 = vmatpush2.msra.mxu0 0.0
        %1193 = vmatprep.subr.mxu0 0.0
        %1194 = vmatpush2.msra.mxu0 0.0
        %1195 = vmatprep.subr.mxu0 0.0
        %1196 = vmatpush2.msra.mxu0 0.0
        %1197 = vmatprep.subr.mxu0 0.0
        %1198 = vmatpush2.msra.mxu0 0.0
        %1199 = vmatprep.subr.mxu0 0.0
        %1200 = vmatpush2.msra.mxu0 0.0
        %1201 = vmatprep.subr.mxu0 0.0
        %1202 = vmatpush2.msra.mxu0 0.0
        %1203 = vmatprep.subr.mxu0 0.0
        %1204 = vmatpush2.msra.mxu0 0.0
        %1205 = vmatprep.subr.mxu0 0.0
        %v1206 = vand.u32 %v377, 4294901760
        %1207 = vmatpush2.msra.mxu0 %v1206
        %1208 = vmatprep.subr.mxu0 0.0
        %v1209 = vand.u32 %v376, 4294901760
        %1210 = vmatpush2.msra.mxu0 %v1209
        %v1211 = vand.u32 %v1127, 4294901760
        %v1212 = vsub.f32 %v1127, %v1211
        %v1213 = vand.u32 %v1212, 4294901760
        %v1214 = vsub.f32 %v1212, %v1213
        %v1215 = vand.u32 %v1214, 4294901760
        %1216 = vmatprep.mubr.f32.mxu0 %v1215
        %v1217 = vand.u32 %v1124, 4294901760
        %v1218 = vsub.f32 %v1124, %v1217
        %v1219 = vand.u32 %v1218, 4294901760
        %v1220 = vsub.f32 %v1218, %v1219
        %v1221 = vand.u32 %v1220, 4294901760
        %1222 = vmatmul.mubr.f32.gmra.mxu0 %v1221
        %v1223 = vpop.f32.mrf.mxu0
        %v1224 = vadd.f32 0.0, %v1223
        %v1225 = vpop.f32.mrf.mxu0
        %1226 = vdwg.mxu0
        %1227 = vmatprep.subr.mxu0 0.0
        %v1228 = vand.u32 %v375, 4294901760
        %v1229 = vsub.f32 %v375, %v1228
        %v1230 = vand.u32 %v1229, 4294901760
        %v1231 = vsub.f32 %v1229, %v1230
        %v1232 = vand.u32 %v1231, 4294901760
        %1233 = vmatpush1.msra.mxu0 %v1232
        %1234 = vmatprep.subr.mxu0 0.0
        %v1235 = vand.u32 %v374, 4294901760
        %v1236 = vsub.f32 %v374, %v1235
        %v1237 = vand.u32 %v1236, 4294901760
        %v1238 = vsub.f32 %v1236, %v1237
        %v1239 = vand.u32 %v1238, 4294901760
        %1240 = vmatpush1.msra.mxu0 %v1239
        %1241 = vmatprep.subr.mxu0 0.0
        %v1242 = vand.u32 %v373, 4294901760
        %v1243 = vsub.f32 %v373, %v1242
        %v1244 = vand.u32 %v1243, 4294901760
        %v1245 = vsub.f32 %v1243, %v1244
        %v1246 = vand.u32 %v1245, 4294901760
        %1247 = vmatpush1.msra.mxu0 %v1246
        %1248 = vmatprep.subr.mxu0 0.0
        %v1249 = vand.u32 %v372, 4294901760
        %v1250 = vsub.f32 %v372, %v1249
        %v1251 = vand.u32 %v1250, 4294901760
        %v1252 = vsub.f32 %v1250, %v1251
        %v1253 = vand.u32 %v1252, 4294901760
        %1254 = vmatpush1.msra.mxu0 %v1253
        %1255 = vmatprep.subr.mxu0 0.0
        %v1256 = vand.u32 %v371, 4294901760
        %v1257 = vsub.f32 %v371, %v1256
        %v1258 = vand.u32 %v1257, 4294901760
        %v1259 = vsub.f32 %v1257, %v1258
        %v1260 = vand.u32 %v1259, 4294901760
        %1261 = vmatpush1.msra.mxu0 %v1260
        %1262 = vmatprep.subr.mxu0 0.0
        %v1263 = vand.u32 %v370, 4294901760
        %v1264 = vsub.f32 %v370, %v1263
        %v1265 = vand.u32 %v1264, 4294901760
        %v1266 = vsub.f32 %v1264, %v1265
        %v1267 = vand.u32 %v1266, 4294901760
        %1268 = vmatpush1.msra.mxu0 %v1267
        %1269 = vmatprep.subr.mxu0 0.0
        %v1270 = vand.u32 %v369, 4294901760
        %v1271 = vsub.f32 %v369, %v1270
        %v1272 = vand.u32 %v1271, 4294901760
        %v1273 = vsub.f32 %v1271, %v1272
        %v1274 = vand.u32 %v1273, 4294901760
        %1275 = vmatpush1.msra.mxu0 %v1274
        %1276 = vmatprep.subr.mxu0 0.0
        %v1277 = vand.u32 %v368, 4294901760
        %v1278 = vsub.f32 %v368, %v1277
        %v1279 = vand.u32 %v1278, 4294901760
        %v1280 = vsub.f32 %v1278, %v1279
        %v1281 = vand.u32 %v1280, 4294901760
        %1282 = vmatpush1.msra.mxu0 %v1281
        %1283 = vmatprep.subr.mxu0 0.0
        %v1284 = vand.u32 %v367, 4294901760
        %v1285 = vsub.f32 %v367, %v1284
        %v1286 = vand.u32 %v1285, 4294901760
        %v1287 = vsub.f32 %v1285, %v1286
        %v1288 = vand.u32 %v1287, 4294901760
        %1289 = vmatpush1.msra.mxu0 %v1288
        %1290 = vmatprep.subr.mxu0 0.0
        %v1291 = vand.u32 %v366, 4294901760
        %v1292 = vsub.f32 %v366, %v1291
        %v1293 = vand.u32 %v1292, 4294901760
        %v1294 = vsub.f32 %v1292, %v1293
        %v1295 = vand.u32 %v1294, 4294901760
        %1296 = vmatpush1.msra.mxu0 %v1295
        %1297 = vmatprep.subr.mxu0 0.0
        %v1298 = vand.u32 %v365, 4294901760
        %v1299 = vsub.f32 %v365, %v1298
        %v1300 = vand.u32 %v1299, 4294901760
        %v1301 = vsub.f32 %v1299, %v1300
        %v1302 = vand.u32 %v1301, 4294901760
        %1303 = vmatpush1.msra.mxu0 %v1302
        %1304 = vmatprep.subr.mxu0 0.0
        %v1305 = vand.u32 %v364, 4294901760
        %v1306 = vsub.f32 %v364, %v1305
        %v1307 = vand.u32 %v1306, 4294901760
        %v1308 = vsub.f32 %v1306, %v1307
        %v1309 = vand.u32 %v1308, 4294901760
        %1310 = vmatpush1.msra.mxu0 %v1309
        %1311 = vmatprep.subr.mxu0 0.0
        %v1312 = vand.u32 %v363, 4294901760
        %v1313 = vsub.f32 %v363, %v1312
        %v1314 = vand.u32 %v1313, 4294901760
        %v1315 = vsub.f32 %v1313, %v1314
        %v1316 = vand.u32 %v1315, 4294901760
        %1317 = vmatpush1.msra.mxu0 %v1316
        %1318 = vmatprep.subr.mxu0 0.0
        %v1319 = vand.u32 %v362, 4294901760
        %v1320 = vsub.f32 %v362, %v1319
        %v1321 = vand.u32 %v1320, 4294901760
        %v1322 = vsub.f32 %v1320, %v1321
        %v1323 = vand.u32 %v1322, 4294901760
        %1324 = vmatpush1.msra.mxu0 %v1323
        %1325 = vmatprep.subr.mxu0 0.0
        %v1326 = vand.u32 %v361, 4294901760
        %v1327 = vsub.f32 %v361, %v1326
        %v1328 = vand.u32 %v1327, 4294901760
        %v1329 = vsub.f32 %v1327, %v1328
        %v1330 = vand.u32 %v1329, 4294901760
        %1331 = vmatpush1.msra.mxu0 %v1330
        %1332 = vmatprep.subr.mxu0 0.0
        %v1333 = vand.u32 %v360, 4294901760
        %v1334 = vsub.f32 %v360, %v1333
        %v1335 = vand.u32 %v1334, 4294901760
        %v1336 = vsub.f32 %v1334, %v1335
        %v1337 = vand.u32 %v1336, 4294901760
        %1338 = vmatpush1.msra.mxu0 %v1337
        %1339 = vmatprep.subr.mxu0 0.0
        %1340 = vmatpush2.msra.mxu0 0.0
        %1341 = vmatprep.subr.mxu0 0.0
        %1342 = vmatpush2.msra.mxu0 0.0
        %1343 = vmatprep.subr.mxu0 0.0
        %1344 = vmatpush2.msra.mxu0 0.0
        %1345 = vmatprep.subr.mxu0 0.0
        %1346 = vmatpush2.msra.mxu0 0.0
        %1347 = vmatprep.subr.mxu0 0.0
        %1348 = vmatpush2.msra.mxu0 0.0
        %1349 = vmatprep.subr.mxu0 0.0
        %1350 = vmatpush2.msra.mxu0 0.0
        %1351 = vmatprep.subr.mxu0 0.0
        %1352 = vmatpush2.msra.mxu0 0.0
        %1353 = vmatprep.subr.mxu0 0.0
        %1354 = vmatpush2.msra.mxu0 0.0
        %1355 = vmatprep.subr.mxu0 0.0
        %1356 = vmatpush2.msra.mxu0 0.0
        %1357 = vmatprep.subr.mxu0 0.0
        %1358 = vmatpush2.msra.mxu0 0.0
        %1359 = vmatprep.subr.mxu0 0.0
        %1360 = vmatpush2.msra.mxu0 0.0
        %1361 = vmatprep.subr.mxu0 0.0
        %1362 = vmatpush2.msra.mxu0 0.0
        %1363 = vmatprep.subr.mxu0 0.0
        %1364 = vmatpush2.msra.mxu0 0.0
        %1365 = vmatprep.subr.mxu0 0.0
        %1366 = vmatpush2.msra.mxu0 0.0
        %1367 = vmatprep.subr.mxu0 0.0
        %v1368 = vand.u32 %v377, 4294901760
        %v1369 = vsub.f32 %v377, %v1368
        %v1370 = vand.u32 %v1369, 4294901760
        %v1371 = vsub.f32 %v1369, %v1370
        %v1372 = vand.u32 %v1371, 4294901760
        %1373 = vmatpush2.msra.mxu0 %v1372
        %1374 = vmatprep.subr.mxu0 0.0
        %v1375 = vand.u32 %v376, 4294901760
        %v1376 = vsub.f32 %v376, %v1375
        %v1377 = vand.u32 %v1376, 4294901760
        %v1378 = vsub.f32 %v1376, %v1377
        %v1379 = vand.u32 %v1378, 4294901760
        %1380 = vmatpush2.msra.mxu0 %v1379
        %v1381 = vand.u32 %v1127, 4294901760
        %1382 = vmatprep.mubr.f32.mxu0 %v1381
        %v1383 = vand.u32 %v1124, 4294901760
        %1384 = vmatmul.mubr.f32.gmra.mxu0 %v1383
        %v1385 = vpop.f32.mrf.mxu0
        %v1386 = vadd.f32 %v1224, %v1385
        %v1387 = vpop.f32.mrf.mxu0
        %1388 = vdwg.mxu0
        %1389 = vmatprep.subr.mxu0 0.0
        %v1390 = vand.u32 %v375, 4294901760
        %v1391 = vsub.f32 %v375, %v1390
        %1392 = vmatpush1.msra.mxu0 %v1391
        %1393 = vmatprep.subr.mxu0 0.0
        %v1394 = vand.u32 %v374, 4294901760
        %v1395 = vsub.f32 %v374, %v1394
        %1396 = vmatpush1.msra.mxu0 %v1395
        %1397 = vmatprep.subr.mxu0 0.0
        %v1398 = vand.u32 %v373, 4294901760
        %v1399 = vsub.f32 %v373, %v1398
        %1400 = vmatpush1.msra.mxu0 %v1399
        %1401 = vmatprep.subr.mxu0 0.0
        %v1402 = vand.u32 %v372, 4294901760
        %v1403 = vsub.f32 %v372, %v1402
        %1404 = vmatpush1.msra.mxu0 %v1403
        %1405 = vmatprep.subr.mxu0 0.0
        %v1406 = vand.u32 %v371, 4294901760
        %v1407 = vsub.f32 %v371, %v1406
        %1408 = vmatpush1.msra.mxu0 %v1407
        %1409 = vmatprep.subr.mxu0 0.0
        %v1410 = vand.u32 %v370, 4294901760
        %v1411 = vsub.f32 %v370, %v1410
        %1412 = vmatpush1.msra.mxu0 %v1411
        %1413 = vmatprep.subr.mxu0 0.0
        %v1414 = vand.u32 %v369, 4294901760
        %v1415 = vsub.f32 %v369, %v1414
        %1416 = vmatpush1.msra.mxu0 %v1415
        %1417 = vmatprep.subr.mxu0 0.0
        %v1418 = vand.u32 %v368, 4294901760
        %v1419 = vsub.f32 %v368, %v1418
        %1420 = vmatpush1.msra.mxu0 %v1419
        %1421 = vmatprep.subr.mxu0 0.0
        %v1422 = vand.u32 %v367, 4294901760
        %v1423 = vsub.f32 %v367, %v1422
        %1424 = vmatpush1.msra.mxu0 %v1423
        %1425 = vmatprep.subr.mxu0 0.0
        %v1426 = vand.u32 %v366, 4294901760
        %v1427 = vsub.f32 %v366, %v1426
        %1428 = vmatpush1.msra.mxu0 %v1427
        %1429 = vmatprep.subr.mxu0 0.0
        %v1430 = vand.u32 %v365, 4294901760
        %v1431 = vsub.f32 %v365, %v1430
        %1432 = vmatpush1.msra.mxu0 %v1431
        %1433 = vmatprep.subr.mxu0 0.0
        %v1434 = vand.u32 %v364, 4294901760
        %v1435 = vsub.f32 %v364, %v1434
        %1436 = vmatpush1.msra.mxu0 %v1435
        %1437 = vmatprep.subr.mxu0 0.0
        %v1438 = vand.u32 %v363, 4294901760
        %v1439 = vsub.f32 %v363, %v1438
        %1440 = vmatpush1.msra.mxu0 %v1439
        %1441 = vmatprep.subr.mxu0 0.0
        %v1442 = vand.u32 %v362, 4294901760
        %v1443 = vsub.f32 %v362, %v1442
        %1444 = vmatpush1.msra.mxu0 %v1443
        %1445 = vmatprep.subr.mxu0 0.0
        %v1446 = vand.u32 %v361, 4294901760
        %v1447 = vsub.f32 %v361, %v1446
        %1448 = vmatpush1.msra.mxu0 %v1447
        %1449 = vmatprep.subr.mxu0 0.0
        %v1450 = vand.u32 %v360, 4294901760
        %v1451 = vsub.f32 %v360, %v1450
        %1452 = vmatpush1.msra.mxu0 %v1451
        %1453 = vmatprep.subr.mxu0 0.0
        %1454 = vmatpush2.msra.mxu0 0.0
        %1455 = vmatprep.subr.mxu0 0.0
        %1456 = vmatpush2.msra.mxu0 0.0
        %1457 = vmatprep.subr.mxu0 0.0
        %1458 = vmatpush2.msra.mxu0 0.0
        %1459 = vmatprep.subr.mxu0 0.0
        %1460 = vmatpush2.msra.mxu0 0.0
        %1461 = vmatprep.subr.mxu0 0.0
        %1462 = vmatpush2.msra.mxu0 0.0
        %1463 = vmatprep.subr.mxu0 0.0
        %1464 = vmatpush2.msra.mxu0 0.0
        %1465 = vmatprep.subr.mxu0 0.0
        %1466 = vmatpush2.msra.mxu0 0.0
        %1467 = vmatprep.subr.mxu0 0.0
        %1468 = vmatpush2.msra.mxu0 0.0
        %1469 = vmatprep.subr.mxu0 0.0
        %1470 = vmatpush2.msra.mxu0 0.0
        %1471 = vmatprep.subr.mxu0 0.0
        %1472 = vmatpush2.msra.mxu0 0.0
        %1473 = vmatprep.subr.mxu0 0.0
        %1474 = vmatpush2.msra.mxu0 0.0
        %1475 = vmatprep.subr.mxu0 0.0
        %1476 = vmatpush2.msra.mxu0 0.0
        %1477 = vmatprep.subr.mxu0 0.0
        %1478 = vmatpush2.msra.mxu0 0.0
        %1479 = vmatprep.subr.mxu0 0.0
        %1480 = vmatpush2.msra.mxu0 0.0
        %1481 = vmatprep.subr.mxu0 0.0
        %v1482 = vand.u32 %v377, 4294901760
        %v1483 = vsub.f32 %v377, %v1482
        %1484 = vmatpush2.msra.mxu0 %v1483
        %1485 = vmatprep.subr.mxu0 0.0
        %v1486 = vand.u32 %v376, 4294901760
        %v1487 = vsub.f32 %v376, %v1486
        %1488 = vmatpush2.msra.mxu0 %v1487
        %v1489 = vand.u32 %v1127, 4294901760
        %v1490 = vsub.f32 %v1127, %v1489
        %1491 = vmatprep.mubr.f32.mxu0 %v1490
        %v1492 = vand.u32 %v1124, 4294901760
        %v1493 = vsub.f32 %v1124, %v1492
        %1494 = vmatmul.mubr.f32.gmra.mxu0 %v1493
        %v1495 = vpop.f32.mrf.mxu0
        %v1496 = vadd.f32 %v1386, %v1495
        %v1497 = vpop.f32.mrf.mxu0
        %1498 = vdwg.mxu0
        %1499 = vmatprep.subr.mxu0 0.0
        %v1500 = vand.u32 %v375, 4294901760
        %1501 = vmatpush1.msra.mxu0 %v1500
        %1502 = vmatprep.subr.mxu0 0.0
        %v1503 = vand.u32 %v374, 4294901760
        %1504 = vmatpush1.msra.mxu0 %v1503
        %1505 = vmatprep.subr.mxu0 0.0
        %v1506 = vand.u32 %v373, 4294901760
        %1507 = vmatpush1.msra.mxu0 %v1506
        %1508 = vmatprep.subr.mxu0 0.0
        %v1509 = vand.u32 %v372, 4294901760
        %1510 = vmatpush1.msra.mxu0 %v1509
        %1511 = vmatprep.subr.mxu0 0.0
        %v1512 = vand.u32 %v371, 4294901760
        %1513 = vmatpush1.msra.mxu0 %v1512
        %1514 = vmatprep.subr.mxu0 0.0
        %v1515 = vand.u32 %v370, 4294901760
        %1516 = vmatpush1.msra.mxu0 %v1515
        %1517 = vmatprep.subr.mxu0 0.0
        %v1518 = vand.u32 %v369, 4294901760
        %1519 = vmatpush1.msra.mxu0 %v1518
        %1520 = vmatprep.subr.mxu0 0.0
        %v1521 = vand.u32 %v368, 4294901760
        %1522 = vmatpush1.msra.mxu0 %v1521
        %1523 = vmatprep.subr.mxu0 0.0
        %v1524 = vand.u32 %v367, 4294901760
        %1525 = vmatpush1.msra.mxu0 %v1524
        %1526 = vmatprep.subr.mxu0 0.0
        %v1527 = vand.u32 %v366, 4294901760
        %1528 = vmatpush1.msra.mxu0 %v1527
        %1529 = vmatprep.subr.mxu0 0.0
        %v1530 = vand.u32 %v365, 4294901760
        %1531 = vmatpush1.msra.mxu0 %v1530
        %1532 = vmatprep.subr.mxu0 0.0
        %v1533 = vand.u32 %v364, 4294901760
        %1534 = vmatpush1.msra.mxu0 %v1533
        %1535 = vmatprep.subr.mxu0 0.0
        %v1536 = vand.u32 %v363, 4294901760
        %1537 = vmatpush1.msra.mxu0 %v1536
        %1538 = vmatprep.subr.mxu0 0.0
        %v1539 = vand.u32 %v362, 4294901760
        %1540 = vmatpush1.msra.mxu0 %v1539
        %1541 = vmatprep.subr.mxu0 0.0
        %v1542 = vand.u32 %v361, 4294901760
        %1543 = vmatpush1.msra.mxu0 %v1542
        %1544 = vmatprep.subr.mxu0 0.0
        %v1545 = vand.u32 %v360, 4294901760
        %1546 = vmatpush1.msra.mxu0 %v1545
        %1547 = vmatprep.subr.mxu0 0.0
        %1548 = vmatpush2.msra.mxu0 0.0
        %1549 = vmatprep.subr.mxu0 0.0
        %1550 = vmatpush2.msra.mxu0 0.0
        %1551 = vmatprep.subr.mxu0 0.0
        %1552 = vmatpush2.msra.mxu0 0.0
        %1553 = vmatprep.subr.mxu0 0.0
        %1554 = vmatpush2.msra.mxu0 0.0
        %1555 = vmatprep.subr.mxu0 0.0
        %1556 = vmatpush2.msra.mxu0 0.0
        %1557 = vmatprep.subr.mxu0 0.0
        %1558 = vmatpush2.msra.mxu0 0.0
        %1559 = vmatprep.subr.mxu0 0.0
        %1560 = vmatpush2.msra.mxu0 0.0
        %1561 = vmatprep.subr.mxu0 0.0
        %1562 = vmatpush2.msra.mxu0 0.0
        %1563 = vmatprep.subr.mxu0 0.0
        %1564 = vmatpush2.msra.mxu0 0.0
        %1565 = vmatprep.subr.mxu0 0.0
        %1566 = vmatpush2.msra.mxu0 0.0
        %1567 = vmatprep.subr.mxu0 0.0
        %1568 = vmatpush2.msra.mxu0 0.0
        %1569 = vmatprep.subr.mxu0 0.0
        %1570 = vmatpush2.msra.mxu0 0.0
        %1571 = vmatprep.subr.mxu0 0.0
        %1572 = vmatpush2.msra.mxu0 0.0
        %1573 = vmatprep.subr.mxu0 0.0
        %1574 = vmatpush2.msra.mxu0 0.0
        %1575 = vmatprep.subr.mxu0 0.0
        %v1576 = vand.u32 %v377, 4294901760
        %1577 = vmatpush2.msra.mxu0 %v1576
        %1578 = vmatprep.subr.mxu0 0.0
        %v1579 = vand.u32 %v376, 4294901760
        %1580 = vmatpush2.msra.mxu0 %v1579
        %v1581 = vand.u32 %v1127, 4294901760
        %v1582 = vsub.f32 %v1127, %v1581
        %v1583 = vand.u32 %v1582, 4294901760
        %1584 = vmatprep.mubr.f32.mxu0 %v1583
        %v1585 = vand.u32 %v1124, 4294901760
        %v1586 = vsub.f32 %v1124, %v1585
        %v1587 = vand.u32 %v1586, 4294901760
        %1588 = vmatmul.mubr.f32.gmra.mxu0 %v1587
        %v1589 = vpop.f32.mrf.mxu0
        %v1590 = vadd.f32 %v1496, %v1589
        %v1591 = vpop.f32.mrf.mxu0
        %1592 = vdwg.mxu0
        %1593 = vmatprep.subr.mxu0 0.0
        %v1594 = vand.u32 %v375, 4294901760
        %v1595 = vsub.f32 %v375, %v1594
        %v1596 = vand.u32 %v1595, 4294901760
        %1597 = vmatpush1.msra.mxu0 %v1596
        %1598 = vmatprep.subr.mxu0 0.0
        %v1599 = vand.u32 %v374, 4294901760
        %v1600 = vsub.f32 %v374, %v1599
        %v1601 = vand.u32 %v1600, 4294901760
        %1602 = vmatpush1.msra.mxu0 %v1601
        %1603 = vmatprep.subr.mxu0 0.0
        %v1604 = vand.u32 %v373, 4294901760
        %v1605 = vsub.f32 %v373, %v1604
        %v1606 = vand.u32 %v1605, 4294901760
        %1607 = vmatpush1.msra.mxu0 %v1606
        %1608 = vmatprep.subr.mxu0 0.0
        %v1609 = vand.u32 %v372, 4294901760
        %v1610 = vsub.f32 %v372, %v1609
        %v1611 = vand.u32 %v1610, 4294901760
        %1612 = vmatpush1.msra.mxu0 %v1611
        %1613 = vmatprep.subr.mxu0 0.0
        %v1614 = vand.u32 %v371, 4294901760
        %v1615 = vsub.f32 %v371, %v1614
        %v1616 = vand.u32 %v1615, 4294901760
        %1617 = vmatpush1.msra.mxu0 %v1616
        %1618 = vmatprep.subr.mxu0 0.0
        %v1619 = vand.u32 %v370, 4294901760
        %v1620 = vsub.f32 %v370, %v1619
        %v1621 = vand.u32 %v1620, 4294901760
        %1622 = vmatpush1.msra.mxu0 %v1621
        %1623 = vmatprep.subr.mxu0 0.0
        %v1624 = vand.u32 %v369, 4294901760
        %v1625 = vsub.f32 %v369, %v1624
        %v1626 = vand.u32 %v1625, 4294901760
        %1627 = vmatpush1.msra.mxu0 %v1626
        %1628 = vmatprep.subr.mxu0 0.0
        %v1629 = vand.u32 %v368, 4294901760
        %v1630 = vsub.f32 %v368, %v1629
        %v1631 = vand.u32 %v1630, 4294901760
        %1632 = vmatpush1.msra.mxu0 %v1631
        %1633 = vmatprep.subr.mxu0 0.0
        %v1634 = vand.u32 %v367, 4294901760
        %v1635 = vsub.f32 %v367, %v1634
        %v1636 = vand.u32 %v1635, 4294901760
        %1637 = vmatpush1.msra.mxu0 %v1636
        %1638 = vmatprep.subr.mxu0 0.0
        %v1639 = vand.u32 %v366, 4294901760
        %v1640 = vsub.f32 %v366, %v1639
        %v1641 = vand.u32 %v1640, 4294901760
        %1642 = vmatpush1.msra.mxu0 %v1641
        %1643 = vmatprep.subr.mxu0 0.0
        %v1644 = vand.u32 %v365, 4294901760
        %v1645 = vsub.f32 %v365, %v1644
        %v1646 = vand.u32 %v1645, 4294901760
        %1647 = vmatpush1.msra.mxu0 %v1646
        %1648 = vmatprep.subr.mxu0 0.0
        %v1649 = vand.u32 %v364, 4294901760
        %v1650 = vsub.f32 %v364, %v1649
        %v1651 = vand.u32 %v1650, 4294901760
        %1652 = vmatpush1.msra.mxu0 %v1651
        %1653 = vmatprep.subr.mxu0 0.0
        %v1654 = vand.u32 %v363, 4294901760
        %v1655 = vsub.f32 %v363, %v1654
        %v1656 = vand.u32 %v1655, 4294901760
        %1657 = vmatpush1.msra.mxu0 %v1656
        %1658 = vmatprep.subr.mxu0 0.0
        %v1659 = vand.u32 %v362, 4294901760
        %v1660 = vsub.f32 %v362, %v1659
        %v1661 = vand.u32 %v1660, 4294901760
        %1662 = vmatpush1.msra.mxu0 %v1661
        %1663 = vmatprep.subr.mxu0 0.0
        %v1664 = vand.u32 %v361, 4294901760
        %v1665 = vsub.f32 %v361, %v1664
        %v1666 = vand.u32 %v1665, 4294901760
        %1667 = vmatpush1.msra.mxu0 %v1666
        %1668 = vmatprep.subr.mxu0 0.0
        %v1669 = vand.u32 %v360, 4294901760
        %v1670 = vsub.f32 %v360, %v1669
        %v1671 = vand.u32 %v1670, 4294901760
        %1672 = vmatpush1.msra.mxu0 %v1671
        %1673 = vmatprep.subr.mxu0 0.0
        %1674 = vmatpush2.msra.mxu0 0.0
        %1675 = vmatprep.subr.mxu0 0.0
        %1676 = vmatpush2.msra.mxu0 0.0
        %1677 = vmatprep.subr.mxu0 0.0
        %1678 = vmatpush2.msra.mxu0 0.0
        %1679 = vmatprep.subr.mxu0 0.0
        %1680 = vmatpush2.msra.mxu0 0.0
        %1681 = vmatprep.subr.mxu0 0.0
        %1682 = vmatpush2.msra.mxu0 0.0
        %1683 = vmatprep.subr.mxu0 0.0
        %1684 = vmatpush2.msra.mxu0 0.0
        %1685 = vmatprep.subr.mxu0 0.0
        %1686 = vmatpush2.msra.mxu0 0.0
        %1687 = vmatprep.subr.mxu0 0.0
        %1688 = vmatpush2.msra.mxu0 0.0
        %1689 = vmatprep.subr.mxu0 0.0
        %1690 = vmatpush2.msra.mxu0 0.0
        %1691 = vmatprep.subr.mxu0 0.0
        %1692 = vmatpush2.msra.mxu0 0.0
        %1693 = vmatprep.subr.mxu0 0.0
        %1694 = vmatpush2.msra.mxu0 0.0
        %1695 = vmatprep.subr.mxu0 0.0
        %1696 = vmatpush2.msra.mxu0 0.0
        %1697 = vmatprep.subr.mxu0 0.0
        %1698 = vmatpush2.msra.mxu0 0.0
        %1699 = vmatprep.subr.mxu0 0.0
        %1700 = vmatpush2.msra.mxu0 0.0
        %1701 = vmatprep.subr.mxu0 0.0
        %v1702 = vand.u32 %v377, 4294901760
        %v1703 = vsub.f32 %v377, %v1702
        %v1704 = vand.u32 %v1703, 4294901760
        %1705 = vmatpush2.msra.mxu0 %v1704
        %1706 = vmatprep.subr.mxu0 0.0
        %v1707 = vand.u32 %v376, 4294901760
        %v1708 = vsub.f32 %v376, %v1707
        %v1709 = vand.u32 %v1708, 4294901760
        %1710 = vmatpush2.msra.mxu0 %v1709
        %v1711 = vand.u32 %v1127, 4294901760
        %1712 = vmatprep.mubr.f32.mxu0 %v1711
        %v1713 = vand.u32 %v1124, 4294901760
        %1714 = vmatmul.mubr.f32.gmra.mxu0 %v1713
        %v1715 = vpop.f32.mrf.mxu0
        %v1716 = vadd.f32 %v1590, %v1715
        %v1717 = vpop.f32.mrf.mxu0
        %1718 = vdwg.mxu0
        %1719 = vmatprep.subr.mxu0 0.0
        %v1720 = vand.u32 %v375, 4294901760
        %1721 = vmatpush1.msra.mxu0 %v1720
        %1722 = vmatprep.subr.mxu0 0.0
        %v1723 = vand.u32 %v374, 4294901760
        %1724 = vmatpush1.msra.mxu0 %v1723
        %1725 = vmatprep.subr.mxu0 0.0
        %v1726 = vand.u32 %v373, 4294901760
        %1727 = vmatpush1.msra.mxu0 %v1726
        %1728 = vmatprep.subr.mxu0 0.0
        %v1729 = vand.u32 %v372, 4294901760
        %1730 = vmatpush1.msra.mxu0 %v1729
        %1731 = vmatprep.subr.mxu0 0.0
        %v1732 = vand.u32 %v371, 4294901760
        %1733 = vmatpush1.msra.mxu0 %v1732
        %1734 = vmatprep.subr.mxu0 0.0
        %v1735 = vand.u32 %v370, 4294901760
        %1736 = vmatpush1.msra.mxu0 %v1735
        %1737 = vmatprep.subr.mxu0 0.0
        %v1738 = vand.u32 %v369, 4294901760
        %1739 = vmatpush1.msra.mxu0 %v1738
        %1740 = vmatprep.subr.mxu0 0.0
        %v1741 = vand.u32 %v368, 4294901760
        %1742 = vmatpush1.msra.mxu0 %v1741
        %1743 = vmatprep.subr.mxu0 0.0
        %v1744 = vand.u32 %v367, 4294901760
        %1745 = vmatpush1.msra.mxu0 %v1744
        %1746 = vmatprep.subr.mxu0 0.0
        %v1747 = vand.u32 %v366, 4294901760
        %1748 = vmatpush1.msra.mxu0 %v1747
        %1749 = vmatprep.subr.mxu0 0.0
        %v1750 = vand.u32 %v365, 4294901760
        %1751 = vmatpush1.msra.mxu0 %v1750
        %1752 = vmatprep.subr.mxu0 0.0
        %v1753 = vand.u32 %v364, 4294901760
        %1754 = vmatpush1.msra.mxu0 %v1753
        %1755 = vmatprep.subr.mxu0 0.0
        %v1756 = vand.u32 %v363, 4294901760
        %1757 = vmatpush1.msra.mxu0 %v1756
        %1758 = vmatprep.subr.mxu0 0.0
        %v1759 = vand.u32 %v362, 4294901760
        %1760 = vmatpush1.msra.mxu0 %v1759
        %1761 = vmatprep.subr.mxu0 0.0
        %v1762 = vand.u32 %v361, 4294901760
        %1763 = vmatpush1.msra.mxu0 %v1762
        %1764 = vmatprep.subr.mxu0 0.0
        %v1765 = vand.u32 %v360, 4294901760
        %1766 = vmatpush1.msra.mxu0 %v1765
        %1767 = vmatprep.subr.mxu0 0.0
        %1768 = vmatpush2.msra.mxu0 0.0
        %1769 = vmatprep.subr.mxu0 0.0
        %1770 = vmatpush2.msra.mxu0 0.0
        %1771 = vmatprep.subr.mxu0 0.0
        %1772 = vmatpush2.msra.mxu0 0.0
        %1773 = vmatprep.subr.mxu0 0.0
        %1774 = vmatpush2.msra.mxu0 0.0
        %1775 = vmatprep.subr.mxu0 0.0
        %1776 = vmatpush2.msra.mxu0 0.0
        %1777 = vmatprep.subr.mxu0 0.0
        %1778 = vmatpush2.msra.mxu0 0.0
        %1779 = vmatprep.subr.mxu0 0.0
        %1780 = vmatpush2.msra.mxu0 0.0
        %1781 = vmatprep.subr.mxu0 0.0
        %1782 = vmatpush2.msra.mxu0 0.0
        %1783 = vmatprep.subr.mxu0 0.0
        %1784 = vmatpush2.msra.mxu0 0.0
        %1785 = vmatprep.subr.mxu0 0.0
        %1786 = vmatpush2.msra.mxu0 0.0
        %1787 = vmatprep.subr.mxu0 0.0
        %1788 = vmatpush2.msra.mxu0 0.0
        %1789 = vmatprep.subr.mxu0 0.0
        %1790 = vmatpush2.msra.mxu0 0.0
        %1791 = vmatprep.subr.mxu0 0.0
        %1792 = vmatpush2.msra.mxu0 0.0
        %1793 = vmatprep.subr.mxu0 0.0
        %1794 = vmatpush2.msra.mxu0 0.0
        %1795 = vmatprep.subr.mxu0 0.0
        %v1796 = vand.u32 %v377, 4294901760
        %1797 = vmatpush2.msra.mxu0 %v1796
        %1798 = vmatprep.subr.mxu0 0.0
        %v1799 = vand.u32 %v376, 4294901760
        %1800 = vmatpush2.msra.mxu0 %v1799
        %v1801 = vand.u32 %v1127, 4294901760
        %1802 = vmatprep.mubr.f32.mxu0 %v1801
        %v1803 = vand.u32 %v1124, 4294901760
        %1804 = vmatmul.mubr.f32.gmra.mxu0 %v1803
        %v1805 = vpop.f32.mrf.mxu0
        %v1806 = vadd.f32 %v1716, %v1805
        %v1807 = vpop.f32.mrf.mxu0
        %1808 = vdwg.mxu0
        %1809 = vst [vmem:[%s349 + $0x8] sm:$0xff] %v1806
        %v1810 = vld [vmem:[%s297 + $0x8] sm:$0xff]
        %v1811 = vld [vmem:[%s297 + $0x10] sm:$0xff]
        %v1812 = vld [vmem:[%s297 + $0x18] sm:$0xff]
        %1816 = vrot.lane.b32.xlu0 %v1810, 8
        %v1817 = vpop.permute.xlu0 %1816
        %1818 = vrot.lane.b32.xlu0 %v1811, 8
        %v1819 = vpop.permute.xlu0 %1818
        %1820 = vrot.lane.b32.xlu0 %v1812, 8
        %v1821 = vpop.permute.xlu0 %1820
        %v1822 = vsel %vm424, %v1817, %v1819
        %v1823 = vsel %vm424, %v1819, %v1821
        %v1825 = vsel %vm428, %v1823, 0
        %1827 = vmatprep.subr.mxu0 0.0
        %v1828 = vand.u32 %v375, 4294901760
        %1829 = vmatpush1.msra.mxu0 %v1828
        %1830 = vmatprep.subr.mxu0 0.0
        %v1831 = vand.u32 %v374, 4294901760
        %1832 = vmatpush1.msra.mxu0 %v1831
        %1833 = vmatprep.subr.mxu0 0.0
        %v1834 = vand.u32 %v373, 4294901760
        %1835 = vmatpush1.msra.mxu0 %v1834
        %1836 = vmatprep.subr.mxu0 0.0
        %v1837 = vand.u32 %v372, 4294901760
        %1838 = vmatpush1.msra.mxu0 %v1837
        %1839 = vmatprep.subr.mxu0 0.0
        %v1840 = vand.u32 %v371, 4294901760
        %1841 = vmatpush1.msra.mxu0 %v1840
        %1842 = vmatprep.subr.mxu0 0.0
        %v1843 = vand.u32 %v370, 4294901760
        %1844 = vmatpush1.msra.mxu0 %v1843
        %1845 = vmatprep.subr.mxu0 0.0
        %v1846 = vand.u32 %v369, 4294901760
        %1847 = vmatpush1.msra.mxu0 %v1846
        %1848 = vmatprep.subr.mxu0 0.0
        %v1849 = vand.u32 %v368, 4294901760
        %1850 = vmatpush1.msra.mxu0 %v1849
        %1851 = vmatprep.subr.mxu0 0.0
        %v1852 = vand.u32 %v367, 4294901760
        %1853 = vmatpush1.msra.mxu0 %v1852
        %1854 = vmatprep.subr.mxu0 0.0
        %v1855 = vand.u32 %v366, 4294901760
        %1856 = vmatpush1.msra.mxu0 %v1855
        %1857 = vmatprep.subr.mxu0 0.0
        %v1858 = vand.u32 %v365, 4294901760
        %1859 = vmatpush1.msra.mxu0 %v1858
        %1860 = vmatprep.subr.mxu0 0.0
        %v1861 = vand.u32 %v364, 4294901760
        %1862 = vmatpush1.msra.mxu0 %v1861
        %1863 = vmatprep.subr.mxu0 0.0
        %v1864 = vand.u32 %v363, 4294901760
        %1865 = vmatpush1.msra.mxu0 %v1864
        %1866 = vmatprep.subr.mxu0 0.0
        %v1867 = vand.u32 %v362, 4294901760
        %1868 = vmatpush1.msra.mxu0 %v1867
        %1869 = vmatprep.subr.mxu0 0.0
        %v1870 = vand.u32 %v361, 4294901760
        %1871 = vmatpush1.msra.mxu0 %v1870
        %1872 = vmatprep.subr.mxu0 0.0
        %v1873 = vand.u32 %v360, 4294901760
        %1874 = vmatpush1.msra.mxu0 %v1873
        %1875 = vmatprep.subr.mxu0 0.0
        %1876 = vmatpush2.msra.mxu0 0.0
        %1877 = vmatprep.subr.mxu0 0.0
        %1878 = vmatpush2.msra.mxu0 0.0
        %1879 = vmatprep.subr.mxu0 0.0
        %1880 = vmatpush2.msra.mxu0 0.0
        %1881 = vmatprep.subr.mxu0 0.0
        %1882 = vmatpush2.msra.mxu0 0.0
        %1883 = vmatprep.subr.mxu0 0.0
        %1884 = vmatpush2.msra.mxu0 0.0
        %1885 = vmatprep.subr.mxu0 0.0
        %1886 = vmatpush2.msra.mxu0 0.0
        %1887 = vmatprep.subr.mxu0 0.0
        %1888 = vmatpush2.msra.mxu0 0.0
        %1889 = vmatprep.subr.mxu0 0.0
        %1890 = vmatpush2.msra.mxu0 0.0
        %1891 = vmatprep.subr.mxu0 0.0
        %1892 = vmatpush2.msra.mxu0 0.0
        %1893 = vmatprep.subr.mxu0 0.0
        %1894 = vmatpush2.msra.mxu0 0.0
        %1895 = vmatprep.subr.mxu0 0.0
        %1896 = vmatpush2.msra.mxu0 0.0
        %1897 = vmatprep.subr.mxu0 0.0
        %1898 = vmatpush2.msra.mxu0 0.0
        %1899 = vmatprep.subr.mxu0 0.0
        %1900 = vmatpush2.msra.mxu0 0.0
        %1901 = vmatprep.subr.mxu0 0.0
        %1902 = vmatpush2.msra.mxu0 0.0
        %1903 = vmatprep.subr.mxu0 0.0
        %v1904 = vand.u32 %v377, 4294901760
        %1905 = vmatpush2.msra.mxu0 %v1904
        %1906 = vmatprep.subr.mxu0 0.0
        %v1907 = vand.u32 %v376, 4294901760
        %1908 = vmatpush2.msra.mxu0 %v1907
        %v1909 = vand.u32 %v1825, 4294901760
        %v1910 = vsub.f32 %v1825, %v1909
        %v1911 = vand.u32 %v1910, 4294901760
        %v1912 = vsub.f32 %v1910, %v1911
        %v1913 = vand.u32 %v1912, 4294901760
        %1914 = vmatprep.mubr.f32.mxu0 %v1913
        %v1915 = vand.u32 %v1822, 4294901760
        %v1916 = vsub.f32 %v1822, %v1915
        %v1917 = vand.u32 %v1916, 4294901760
        %v1918 = vsub.f32 %v1916, %v1917
        %v1919 = vand.u32 %v1918, 4294901760
        %1920 = vmatmul.mubr.f32.gmra.mxu0 %v1919
        %v1921 = vpop.f32.mrf.mxu0
        %v1922 = vadd.f32 0.0, %v1921
        %v1923 = vpop.f32.mrf.mxu0
        %1924 = vdwg.mxu0
        %1925 = vmatprep.subr.mxu0 0.0
        %v1926 = vand.u32 %v375, 4294901760
        %v1927 = vsub.f32 %v375, %v1926
        %v1928 = vand.u32 %v1927, 4294901760
        %v1929 = vsub.f32 %v1927, %v1928
        %v1930 = vand.u32 %v1929, 4294901760
        %1931 = vmatpush1.msra.mxu0 %v1930
        %1932 = vmatprep.subr.mxu0 0.0
        %v1933 = vand.u32 %v374, 4294901760
        %v1934 = vsub.f32 %v374, %v1933
        %v1935 = vand.u32 %v1934, 4294901760
        %v1936 = vsub.f32 %v1934, %v1935
        %v1937 = vand.u32 %v1936, 4294901760
        %1938 = vmatpush1.msra.mxu0 %v1937
        %1939 = vmatprep.subr.mxu0 0.0
        %v1940 = vand.u32 %v373, 4294901760
        %v1941 = vsub.f32 %v373, %v1940
        %v1942 = vand.u32 %v1941, 4294901760
        %v1943 = vsub.f32 %v1941, %v1942
        %v1944 = vand.u32 %v1943, 4294901760
        %1945 = vmatpush1.msra.mxu0 %v1944
        %1946 = vmatprep.subr.mxu0 0.0
        %v1947 = vand.u32 %v372, 4294901760
        %v1948 = vsub.f32 %v372, %v1947
        %v1949 = vand.u32 %v1948, 4294901760
        %v1950 = vsub.f32 %v1948, %v1949
        %v1951 = vand.u32 %v1950, 4294901760
        %1952 = vmatpush1.msra.mxu0 %v1951
        %1953 = vmatprep.subr.mxu0 0.0
        %v1954 = vand.u32 %v371, 4294901760
        %v1955 = vsub.f32 %v371, %v1954
        %v1956 = vand.u32 %v1955, 4294901760
        %v1957 = vsub.f32 %v1955, %v1956
        %v1958 = vand.u32 %v1957, 4294901760
        %1959 = vmatpush1.msra.mxu0 %v1958
        %1960 = vmatprep.subr.mxu0 0.0
        %v1961 = vand.u32 %v370, 4294901760
        %v1962 = vsub.f32 %v370, %v1961
        %v1963 = vand.u32 %v1962, 4294901760
        %v1964 = vsub.f32 %v1962, %v1963
        %v1965 = vand.u32 %v1964, 4294901760
        %1966 = vmatpush1.msra.mxu0 %v1965
        %1967 = vmatprep.subr.mxu0 0.0
        %v1968 = vand.u32 %v369, 4294901760
        %v1969 = vsub.f32 %v369, %v1968
        %v1970 = vand.u32 %v1969, 4294901760
        %v1971 = vsub.f32 %v1969, %v1970
        %v1972 = vand.u32 %v1971, 4294901760
        %1973 = vmatpush1.msra.mxu0 %v1972
        %1974 = vmatprep.subr.mxu0 0.0
        %v1975 = vand.u32 %v368, 4294901760
        %v1976 = vsub.f32 %v368, %v1975
        %v1977 = vand.u32 %v1976, 4294901760
        %v1978 = vsub.f32 %v1976, %v1977
        %v1979 = vand.u32 %v1978, 4294901760
        %1980 = vmatpush1.msra.mxu0 %v1979
        %1981 = vmatprep.subr.mxu0 0.0
        %v1982 = vand.u32 %v367, 4294901760
        %v1983 = vsub.f32 %v367, %v1982
        %v1984 = vand.u32 %v1983, 4294901760
        %v1985 = vsub.f32 %v1983, %v1984
        %v1986 = vand.u32 %v1985, 4294901760
        %1987 = vmatpush1.msra.mxu0 %v1986
        %1988 = vmatprep.subr.mxu0 0.0
        %v1989 = vand.u32 %v366, 4294901760
        %v1990 = vsub.f32 %v366, %v1989
        %v1991 = vand.u32 %v1990, 4294901760
        %v1992 = vsub.f32 %v1990, %v1991
        %v1993 = vand.u32 %v1992, 4294901760
        %1994 = vmatpush1.msra.mxu0 %v1993
        %1995 = vmatprep.subr.mxu0 0.0
        %v1996 = vand.u32 %v365, 4294901760
        %v1997 = vsub.f32 %v365, %v1996
        %v1998 = vand.u32 %v1997, 4294901760
        %v1999 = vsub.f32 %v1997, %v1998
        %v2000 = vand.u32 %v1999, 4294901760
        %2001 = vmatpush1.msra.mxu0 %v2000
        %2002 = vmatprep.subr.mxu0 0.0
        %v2003 = vand.u32 %v364, 4294901760
        %v2004 = vsub.f32 %v364, %v2003
        %v2005 = vand.u32 %v2004, 4294901760
        %v2006 = vsub.f32 %v2004, %v2005
        %v2007 = vand.u32 %v2006, 4294901760
        %2008 = vmatpush1.msra.mxu0 %v2007
        %2009 = vmatprep.subr.mxu0 0.0
        %v2010 = vand.u32 %v363, 4294901760
        %v2011 = vsub.f32 %v363, %v2010
        %v2012 = vand.u32 %v2011, 4294901760
        %v2013 = vsub.f32 %v2011, %v2012
        %v2014 = vand.u32 %v2013, 4294901760
        %2015 = vmatpush1.msra.mxu0 %v2014
        %2016 = vmatprep.subr.mxu0 0.0
        %v2017 = vand.u32 %v362, 4294901760
        %v2018 = vsub.f32 %v362, %v2017
        %v2019 = vand.u32 %v2018, 4294901760
        %v2020 = vsub.f32 %v2018, %v2019
        %v2021 = vand.u32 %v2020, 4294901760
        %2022 = vmatpush1.msra.mxu0 %v2021
        %2023 = vmatprep.subr.mxu0 0.0
        %v2024 = vand.u32 %v361, 4294901760
        %v2025 = vsub.f32 %v361, %v2024
        %v2026 = vand.u32 %v2025, 4294901760
        %v2027 = vsub.f32 %v2025, %v2026
        %v2028 = vand.u32 %v2027, 4294901760
        %2029 = vmatpush1.msra.mxu0 %v2028
        %2030 = vmatprep.subr.mxu0 0.0
        %v2031 = vand.u32 %v360, 4294901760
        %v2032 = vsub.f32 %v360, %v2031
        %v2033 = vand.u32 %v2032, 4294901760
        %v2034 = vsub.f32 %v2032, %v2033
        %v2035 = vand.u32 %v2034, 4294901760
        %2036 = vmatpush1.msra.mxu0 %v2035
        %2037 = vmatprep.subr.mxu0 0.0
        %2038 = vmatpush2.msra.mxu0 0.0
        %2039 = vmatprep.subr.mxu0 0.0
        %2040 = vmatpush2.msra.mxu0 0.0
        %2041 = vmatprep.subr.mxu0 0.0
        %2042 = vmatpush2.msra.mxu0 0.0
        %2043 = vmatprep.subr.mxu0 0.0
        %2044 = vmatpush2.msra.mxu0 0.0
        %2045 = vmatprep.subr.mxu0 0.0
        %2046 = vmatpush2.msra.mxu0 0.0
        %2047 = vmatprep.subr.mxu0 0.0
        %2048 = vmatpush2.msra.mxu0 0.0
        %2049 = vmatprep.subr.mxu0 0.0
        %2050 = vmatpush2.msra.mxu0 0.0
        %2051 = vmatprep.subr.mxu0 0.0
        %2052 = vmatpush2.msra.mxu0 0.0
        %2053 = vmatprep.subr.mxu0 0.0
        %2054 = vmatpush2.msra.mxu0 0.0
        %2055 = vmatprep.subr.mxu0 0.0
        %2056 = vmatpush2.msra.mxu0 0.0
        %2057 = vmatprep.subr.mxu0 0.0
        %2058 = vmatpush2.msra.mxu0 0.0
        %2059 = vmatprep.subr.mxu0 0.0
        %2060 = vmatpush2.msra.mxu0 0.0
        %2061 = vmatprep.subr.mxu0 0.0
        %2062 = vmatpush2.msra.mxu0 0.0
        %2063 = vmatprep.subr.mxu0 0.0
        %2064 = vmatpush2.msra.mxu0 0.0
        %2065 = vmatprep.subr.mxu0 0.0
        %v2066 = vand.u32 %v377, 4294901760
        %v2067 = vsub.f32 %v377, %v2066
        %v2068 = vand.u32 %v2067, 4294901760
        %v2069 = vsub.f32 %v2067, %v2068
        %v2070 = vand.u32 %v2069, 4294901760
        %2071 = vmatpush2.msra.mxu0 %v2070
        %2072 = vmatprep.subr.mxu0 0.0
        %v2073 = vand.u32 %v376, 4294901760
        %v2074 = vsub.f32 %v376, %v2073
        %v2075 = vand.u32 %v2074, 4294901760
        %v2076 = vsub.f32 %v2074, %v2075
        %v2077 = vand.u32 %v2076, 4294901760
        %2078 = vmatpush2.msra.mxu0 %v2077
        %v2079 = vand.u32 %v1825, 4294901760
        %2080 = vmatprep.mubr.f32.mxu0 %v2079
        %v2081 = vand.u32 %v1822, 4294901760
        %2082 = vmatmul.mubr.f32.gmra.mxu0 %v2081
        %v2083 = vpop.f32.mrf.mxu0
        %v2084 = vadd.f32 %v1922, %v2083
        %v2085 = vpop.f32.mrf.mxu0
        %2086 = vdwg.mxu0
        %2087 = vmatprep.subr.mxu0 0.0
        %v2088 = vand.u32 %v375, 4294901760
        %v2089 = vsub.f32 %v375, %v2088
        %2090 = vmatpush1.msra.mxu0 %v2089
        %2091 = vmatprep.subr.mxu0 0.0
        %v2092 = vand.u32 %v374, 4294901760
        %v2093 = vsub.f32 %v374, %v2092
        %2094 = vmatpush1.msra.mxu0 %v2093
        %2095 = vmatprep.subr.mxu0 0.0
        %v2096 = vand.u32 %v373, 4294901760
        %v2097 = vsub.f32 %v373, %v2096
        %2098 = vmatpush1.msra.mxu0 %v2097
        %2099 = vmatprep.subr.mxu0 0.0
        %v2100 = vand.u32 %v372, 4294901760
        %v2101 = vsub.f32 %v372, %v2100
        %2102 = vmatpush1.msra.mxu0 %v2101
        %2103 = vmatprep.subr.mxu0 0.0
        %v2104 = vand.u32 %v371, 4294901760
        %v2105 = vsub.f32 %v371, %v2104
        %2106 = vmatpush1.msra.mxu0 %v2105
        %2107 = vmatprep.subr.mxu0 0.0
        %v2108 = vand.u32 %v370, 4294901760
        %v2109 = vsub.f32 %v370, %v2108
        %2110 = vmatpush1.msra.mxu0 %v2109
        %2111 = vmatprep.subr.mxu0 0.0
        %v2112 = vand.u32 %v369, 4294901760
        %v2113 = vsub.f32 %v369, %v2112
        %2114 = vmatpush1.msra.mxu0 %v2113
        %2115 = vmatprep.subr.mxu0 0.0
        %v2116 = vand.u32 %v368, 4294901760
        %v2117 = vsub.f32 %v368, %v2116
        %2118 = vmatpush1.msra.mxu0 %v2117
        %2119 = vmatprep.subr.mxu0 0.0
        %v2120 = vand.u32 %v367, 4294901760
        %v2121 = vsub.f32 %v367, %v2120
        %2122 = vmatpush1.msra.mxu0 %v2121
        %2123 = vmatprep.subr.mxu0 0.0
        %v2124 = vand.u32 %v366, 4294901760
        %v2125 = vsub.f32 %v366, %v2124
        %2126 = vmatpush1.msra.mxu0 %v2125
        %2127 = vmatprep.subr.mxu0 0.0
        %v2128 = vand.u32 %v365, 4294901760
        %v2129 = vsub.f32 %v365, %v2128
        %2130 = vmatpush1.msra.mxu0 %v2129
        %2131 = vmatprep.subr.mxu0 0.0
        %v2132 = vand.u32 %v364, 4294901760
        %v2133 = vsub.f32 %v364, %v2132
        %2134 = vmatpush1.msra.mxu0 %v2133
        %2135 = vmatprep.subr.mxu0 0.0
        %v2136 = vand.u32 %v363, 4294901760
        %v2137 = vsub.f32 %v363, %v2136
        %2138 = vmatpush1.msra.mxu0 %v2137
        %2139 = vmatprep.subr.mxu0 0.0
        %v2140 = vand.u32 %v362, 4294901760
        %v2141 = vsub.f32 %v362, %v2140
        %2142 = vmatpush1.msra.mxu0 %v2141
        %2143 = vmatprep.subr.mxu0 0.0
        %v2144 = vand.u32 %v361, 4294901760
        %v2145 = vsub.f32 %v361, %v2144
        %2146 = vmatpush1.msra.mxu0 %v2145
        %2147 = vmatprep.subr.mxu0 0.0
        %v2148 = vand.u32 %v360, 4294901760
        %v2149 = vsub.f32 %v360, %v2148
        %2150 = vmatpush1.msra.mxu0 %v2149
        %2151 = vmatprep.subr.mxu0 0.0
        %2152 = vmatpush2.msra.mxu0 0.0
        %2153 = vmatprep.subr.mxu0 0.0
        %2154 = vmatpush2.msra.mxu0 0.0
        %2155 = vmatprep.subr.mxu0 0.0
        %2156 = vmatpush2.msra.mxu0 0.0
        %2157 = vmatprep.subr.mxu0 0.0
        %2158 = vmatpush2.msra.mxu0 0.0
        %2159 = vmatprep.subr.mxu0 0.0
        %2160 = vmatpush2.msra.mxu0 0.0
        %2161 = vmatprep.subr.mxu0 0.0
        %2162 = vmatpush2.msra.mxu0 0.0
        %2163 = vmatprep.subr.mxu0 0.0
        %2164 = vmatpush2.msra.mxu0 0.0
        %2165 = vmatprep.subr.mxu0 0.0
        %2166 = vmatpush2.msra.mxu0 0.0
        %2167 = vmatprep.subr.mxu0 0.0
        %2168 = vmatpush2.msra.mxu0 0.0
        %2169 = vmatprep.subr.mxu0 0.0
        %2170 = vmatpush2.msra.mxu0 0.0
        %2171 = vmatprep.subr.mxu0 0.0
        %2172 = vmatpush2.msra.mxu0 0.0
        %2173 = vmatprep.subr.mxu0 0.0
        %2174 = vmatpush2.msra.mxu0 0.0
        %2175 = vmatprep.subr.mxu0 0.0
        %2176 = vmatpush2.msra.mxu0 0.0
        %2177 = vmatprep.subr.mxu0 0.0
        %2178 = vmatpush2.msra.mxu0 0.0
        %2179 = vmatprep.subr.mxu0 0.0
        %v2180 = vand.u32 %v377, 4294901760
        %v2181 = vsub.f32 %v377, %v2180
        %2182 = vmatpush2.msra.mxu0 %v2181
        %2183 = vmatprep.subr.mxu0 0.0
        %v2184 = vand.u32 %v376, 4294901760
        %v2185 = vsub.f32 %v376, %v2184
        %2186 = vmatpush2.msra.mxu0 %v2185
        %v2187 = vand.u32 %v1825, 4294901760
        %v2188 = vsub.f32 %v1825, %v2187
        %2189 = vmatprep.mubr.f32.mxu0 %v2188
        %v2190 = vand.u32 %v1822, 4294901760
        %v2191 = vsub.f32 %v1822, %v2190
        %2192 = vmatmul.mubr.f32.gmra.mxu0 %v2191
        %v2193 = vpop.f32.mrf.mxu0
        %v2194 = vadd.f32 %v2084, %v2193
        %v2195 = vpop.f32.mrf.mxu0
        %2196 = vdwg.mxu0
        %2197 = vmatprep.subr.mxu0 0.0
        %v2198 = vand.u32 %v375, 4294901760
        %2199 = vmatpush1.msra.mxu0 %v2198
        %2200 = vmatprep.subr.mxu0 0.0
        %v2201 = vand.u32 %v374, 4294901760
        %2202 = vmatpush1.msra.mxu0 %v2201
        %2203 = vmatprep.subr.mxu0 0.0
        %v2204 = vand.u32 %v373, 4294901760
        %2205 = vmatpush1.msra.mxu0 %v2204
        %2206 = vmatprep.subr.mxu0 0.0
        %v2207 = vand.u32 %v372, 4294901760
        %2208 = vmatpush1.msra.mxu0 %v2207
        %2209 = vmatprep.subr.mxu0 0.0
        %v2210 = vand.u32 %v371, 4294901760
        %2211 = vmatpush1.msra.mxu0 %v2210
        %2212 = vmatprep.subr.mxu0 0.0
        %v2213 = vand.u32 %v370, 4294901760
        %2214 = vmatpush1.msra.mxu0 %v2213
        %2215 = vmatprep.subr.mxu0 0.0
        %v2216 = vand.u32 %v369, 4294901760
        %2217 = vmatpush1.msra.mxu0 %v2216
        %2218 = vmatprep.subr.mxu0 0.0
        %v2219 = vand.u32 %v368, 4294901760
        %2220 = vmatpush1.msra.mxu0 %v2219
        %2221 = vmatprep.subr.mxu0 0.0
        %v2222 = vand.u32 %v367, 4294901760
        %2223 = vmatpush1.msra.mxu0 %v2222
        %2224 = vmatprep.subr.mxu0 0.0
        %v2225 = vand.u32 %v366, 4294901760
        %2226 = vmatpush1.msra.mxu0 %v2225
        %2227 = vmatprep.subr.mxu0 0.0
        %v2228 = vand.u32 %v365, 4294901760
        %2229 = vmatpush1.msra.mxu0 %v2228
        %2230 = vmatprep.subr.mxu0 0.0
        %v2231 = vand.u32 %v364, 4294901760
        %2232 = vmatpush1.msra.mxu0 %v2231
        %2233 = vmatprep.subr.mxu0 0.0
        %v2234 = vand.u32 %v363, 4294901760
        %2235 = vmatpush1.msra.mxu0 %v2234
        %2236 = vmatprep.subr.mxu0 0.0
        %v2237 = vand.u32 %v362, 4294901760
        %2238 = vmatpush1.msra.mxu0 %v2237
        %2239 = vmatprep.subr.mxu0 0.0
        %v2240 = vand.u32 %v361, 4294901760
        %2241 = vmatpush1.msra.mxu0 %v2240
        %2242 = vmatprep.subr.mxu0 0.0
        %v2243 = vand.u32 %v360, 4294901760
        %2244 = vmatpush1.msra.mxu0 %v2243
        %2245 = vmatprep.subr.mxu0 0.0
        %2246 = vmatpush2.msra.mxu0 0.0
        %2247 = vmatprep.subr.mxu0 0.0
        %2248 = vmatpush2.msra.mxu0 0.0
        %2249 = vmatprep.subr.mxu0 0.0
        %2250 = vmatpush2.msra.mxu0 0.0
        %2251 = vmatprep.subr.mxu0 0.0
        %2252 = vmatpush2.msra.mxu0 0.0
        %2253 = vmatprep.subr.mxu0 0.0
        %2254 = vmatpush2.msra.mxu0 0.0
        %2255 = vmatprep.subr.mxu0 0.0
        %2256 = vmatpush2.msra.mxu0 0.0
        %2257 = vmatprep.subr.mxu0 0.0
        %2258 = vmatpush2.msra.mxu0 0.0
        %2259 = vmatprep.subr.mxu0 0.0
        %2260 = vmatpush2.msra.mxu0 0.0
        %2261 = vmatprep.subr.mxu0 0.0
        %2262 = vmatpush2.msra.mxu0 0.0
        %2263 = vmatprep.subr.mxu0 0.0
        %2264 = vmatpush2.msra.mxu0 0.0
        %2265 = vmatprep.subr.mxu0 0.0
        %2266 = vmatpush2.msra.mxu0 0.0
        %2267 = vmatprep.subr.mxu0 0.0
        %2268 = vmatpush2.msra.mxu0 0.0
        %2269 = vmatprep.subr.mxu0 0.0
        %2270 = vmatpush2.msra.mxu0 0.0
        %2271 = vmatprep.subr.mxu0 0.0
        %2272 = vmatpush2.msra.mxu0 0.0
        %2273 = vmatprep.subr.mxu0 0.0
        %v2274 = vand.u32 %v377, 4294901760
        %2275 = vmatpush2.msra.mxu0 %v2274
        %2276 = vmatprep.subr.mxu0 0.0
        %v2277 = vand.u32 %v376, 4294901760
        %2278 = vmatpush2.msra.mxu0 %v2277
        %v2279 = vand.u32 %v1825, 4294901760
        %v2280 = vsub.f32 %v1825, %v2279
        %v2281 = vand.u32 %v2280, 4294901760
        %2282 = vmatprep.mubr.f32.mxu0 %v2281
        %v2283 = vand.u32 %v1822, 4294901760
        %v2284 = vsub.f32 %v1822, %v2283
        %v2285 = vand.u32 %v2284, 4294901760
        %2286 = vmatmul.mubr.f32.gmra.mxu0 %v2285
        %v2287 = vpop.f32.mrf.mxu0
        %v2288 = vadd.f32 %v2194, %v2287
        %v2289 = vpop.f32.mrf.mxu0
        %2290 = vdwg.mxu0
        %2291 = vmatprep.subr.mxu0 0.0
        %v2292 = vand.u32 %v375, 4294901760
        %v2293 = vsub.f32 %v375, %v2292
        %v2294 = vand.u32 %v2293, 4294901760
        %2295 = vmatpush1.msra.mxu0 %v2294
        %2296 = vmatprep.subr.mxu0 0.0
        %v2297 = vand.u32 %v374, 4294901760
        %v2298 = vsub.f32 %v374, %v2297
        %v2299 = vand.u32 %v2298, 4294901760
        %2300 = vmatpush1.msra.mxu0 %v2299
        %2301 = vmatprep.subr.mxu0 0.0
        %v2302 = vand.u32 %v373, 4294901760
        %v2303 = vsub.f32 %v373, %v2302
        %v2304 = vand.u32 %v2303, 4294901760
        %2305 = vmatpush1.msra.mxu0 %v2304
        %2306 = vmatprep.subr.mxu0 0.0
        %v2307 = vand.u32 %v372, 4294901760
        %v2308 = vsub.f32 %v372, %v2307
        %v2309 = vand.u32 %v2308, 4294901760
        %2310 = vmatpush1.msra.mxu0 %v2309
        %2311 = vmatprep.subr.mxu0 0.0
        %v2312 = vand.u32 %v371, 4294901760
        %v2313 = vsub.f32 %v371, %v2312
        %v2314 = vand.u32 %v2313, 4294901760
        %2315 = vmatpush1.msra.mxu0 %v2314
        %2316 = vmatprep.subr.mxu0 0.0
        %v2317 = vand.u32 %v370, 4294901760
        %v2318 = vsub.f32 %v370, %v2317
        %v2319 = vand.u32 %v2318, 4294901760
        %2320 = vmatpush1.msra.mxu0 %v2319
        %2321 = vmatprep.subr.mxu0 0.0
        %v2322 = vand.u32 %v369, 4294901760
        %v2323 = vsub.f32 %v369, %v2322
        %v2324 = vand.u32 %v2323, 4294901760
        %2325 = vmatpush1.msra.mxu0 %v2324
        %2326 = vmatprep.subr.mxu0 0.0
        %v2327 = vand.u32 %v368, 4294901760
        %v2328 = vsub.f32 %v368, %v2327
        %v2329 = vand.u32 %v2328, 4294901760
        %2330 = vmatpush1.msra.mxu0 %v2329
        %2331 = vmatprep.subr.mxu0 0.0
        %v2332 = vand.u32 %v367, 4294901760
        %v2333 = vsub.f32 %v367, %v2332
        %v2334 = vand.u32 %v2333, 4294901760
        %2335 = vmatpush1.msra.mxu0 %v2334
        %2336 = vmatprep.subr.mxu0 0.0
        %v2337 = vand.u32 %v366, 4294901760
        %v2338 = vsub.f32 %v366, %v2337
        %v2339 = vand.u32 %v2338, 4294901760
        %2340 = vmatpush1.msra.mxu0 %v2339
        %2341 = vmatprep.subr.mxu0 0.0
        %v2342 = vand.u32 %v365, 4294901760
        %v2343 = vsub.f32 %v365, %v2342
        %v2344 = vand.u32 %v2343, 4294901760
        %2345 = vmatpush1.msra.mxu0 %v2344
        %2346 = vmatprep.subr.mxu0 0.0
        %v2347 = vand.u32 %v364, 4294901760
        %v2348 = vsub.f32 %v364, %v2347
        %v2349 = vand.u32 %v2348, 4294901760
        %2350 = vmatpush1.msra.mxu0 %v2349
        %2351 = vmatprep.subr.mxu0 0.0
        %v2352 = vand.u32 %v363, 4294901760
        %v2353 = vsub.f32 %v363, %v2352
        %v2354 = vand.u32 %v2353, 4294901760
        %2355 = vmatpush1.msra.mxu0 %v2354
        %2356 = vmatprep.subr.mxu0 0.0
        %v2357 = vand.u32 %v362, 4294901760
        %v2358 = vsub.f32 %v362, %v2357
        %v2359 = vand.u32 %v2358, 4294901760
        %2360 = vmatpush1.msra.mxu0 %v2359
        %2361 = vmatprep.subr.mxu0 0.0
        %v2362 = vand.u32 %v361, 4294901760
        %v2363 = vsub.f32 %v361, %v2362
        %v2364 = vand.u32 %v2363, 4294901760
        %2365 = vmatpush1.msra.mxu0 %v2364
        %2366 = vmatprep.subr.mxu0 0.0
        %v2367 = vand.u32 %v360, 4294901760
        %v2368 = vsub.f32 %v360, %v2367
        %v2369 = vand.u32 %v2368, 4294901760
        %2370 = vmatpush1.msra.mxu0 %v2369
        %2371 = vmatprep.subr.mxu0 0.0
        %2372 = vmatpush2.msra.mxu0 0.0
        %2373 = vmatprep.subr.mxu0 0.0
        %2374 = vmatpush2.msra.mxu0 0.0
        %2375 = vmatprep.subr.mxu0 0.0
        %2376 = vmatpush2.msra.mxu0 0.0
        %2377 = vmatprep.subr.mxu0 0.0
        %2378 = vmatpush2.msra.mxu0 0.0
        %2379 = vmatprep.subr.mxu0 0.0
        %2380 = vmatpush2.msra.mxu0 0.0
        %2381 = vmatprep.subr.mxu0 0.0
        %2382 = vmatpush2.msra.mxu0 0.0
        %2383 = vmatprep.subr.mxu0 0.0
        %2384 = vmatpush2.msra.mxu0 0.0
        %2385 = vmatprep.subr.mxu0 0.0
        %2386 = vmatpush2.msra.mxu0 0.0
        %2387 = vmatprep.subr.mxu0 0.0
        %2388 = vmatpush2.msra.mxu0 0.0
        %2389 = vmatprep.subr.mxu0 0.0
        %2390 = vmatpush2.msra.mxu0 0.0
        %2391 = vmatprep.subr.mxu0 0.0
        %2392 = vmatpush2.msra.mxu0 0.0
        %2393 = vmatprep.subr.mxu0 0.0
        %2394 = vmatpush2.msra.mxu0 0.0
        %2395 = vmatprep.subr.mxu0 0.0
        %2396 = vmatpush2.msra.mxu0 0.0
        %2397 = vmatprep.subr.mxu0 0.0
        %2398 = vmatpush2.msra.mxu0 0.0
        %2399 = vmatprep.subr.mxu0 0.0
        %v2400 = vand.u32 %v377, 4294901760
        %v2401 = vsub.f32 %v377, %v2400
        %v2402 = vand.u32 %v2401, 4294901760
        %2403 = vmatpush2.msra.mxu0 %v2402
        %2404 = vmatprep.subr.mxu0 0.0
        %v2405 = vand.u32 %v376, 4294901760
        %v2406 = vsub.f32 %v376, %v2405
        %v2407 = vand.u32 %v2406, 4294901760
        %2408 = vmatpush2.msra.mxu0 %v2407
        %v2409 = vand.u32 %v1825, 4294901760
        %2410 = vmatprep.mubr.f32.mxu0 %v2409
        %v2411 = vand.u32 %v1822, 4294901760
        %2412 = vmatmul.mubr.f32.gmra.mxu0 %v2411
        %v2413 = vpop.f32.mrf.mxu0
        %v2414 = vadd.f32 %v2288, %v2413
        %v2415 = vpop.f32.mrf.mxu0
        %2416 = vdwg.mxu0
        %2417 = vmatprep.subr.mxu0 0.0
        %v2418 = vand.u32 %v375, 4294901760
        %2419 = vmatpush1.msra.mxu0 %v2418
        %2420 = vmatprep.subr.mxu0 0.0
        %v2421 = vand.u32 %v374, 4294901760
        %2422 = vmatpush1.msra.mxu0 %v2421
        %2423 = vmatprep.subr.mxu0 0.0
        %v2424 = vand.u32 %v373, 4294901760
        %2425 = vmatpush1.msra.mxu0 %v2424
        %2426 = vmatprep.subr.mxu0 0.0
        %v2427 = vand.u32 %v372, 4294901760
        %2428 = vmatpush1.msra.mxu0 %v2427
        %2429 = vmatprep.subr.mxu0 0.0
        %v2430 = vand.u32 %v371, 4294901760
        %2431 = vmatpush1.msra.mxu0 %v2430
        %2432 = vmatprep.subr.mxu0 0.0
        %v2433 = vand.u32 %v370, 4294901760
        %2434 = vmatpush1.msra.mxu0 %v2433
        %2435 = vmatprep.subr.mxu0 0.0
        %v2436 = vand.u32 %v369, 4294901760
        %2437 = vmatpush1.msra.mxu0 %v2436
        %2438 = vmatprep.subr.mxu0 0.0
        %v2439 = vand.u32 %v368, 4294901760
        %2440 = vmatpush1.msra.mxu0 %v2439
        %2441 = vmatprep.subr.mxu0 0.0
        %v2442 = vand.u32 %v367, 4294901760
        %2443 = vmatpush1.msra.mxu0 %v2442
        %2444 = vmatprep.subr.mxu0 0.0
        %v2445 = vand.u32 %v366, 4294901760
        %2446 = vmatpush1.msra.mxu0 %v2445
        %2447 = vmatprep.subr.mxu0 0.0
        %v2448 = vand.u32 %v365, 4294901760
        %2449 = vmatpush1.msra.mxu0 %v2448
        %2450 = vmatprep.subr.mxu0 0.0
        %v2451 = vand.u32 %v364, 4294901760
        %2452 = vmatpush1.msra.mxu0 %v2451
        %2453 = vmatprep.subr.mxu0 0.0
        %v2454 = vand.u32 %v363, 4294901760
        %2455 = vmatpush1.msra.mxu0 %v2454
        %2456 = vmatprep.subr.mxu0 0.0
        %v2457 = vand.u32 %v362, 4294901760
        %2458 = vmatpush1.msra.mxu0 %v2457
        %2459 = vmatprep.subr.mxu0 0.0
        %v2460 = vand.u32 %v361, 4294901760
        %2461 = vmatpush1.msra.mxu0 %v2460
        %2462 = vmatprep.subr.mxu0 0.0
        %v2463 = vand.u32 %v360, 4294901760
        %2464 = vmatpush1.msra.mxu0 %v2463
        %2465 = vmatprep.subr.mxu0 0.0
        %2466 = vmatpush2.msra.mxu0 0.0
        %2467 = vmatprep.subr.mxu0 0.0
        %2468 = vmatpush2.msra.mxu0 0.0
        %2469 = vmatprep.subr.mxu0 0.0
        %2470 = vmatpush2.msra.mxu0 0.0
        %2471 = vmatprep.subr.mxu0 0.0
        %2472 = vmatpush2.msra.mxu0 0.0
        %2473 = vmatprep.subr.mxu0 0.0
        %2474 = vmatpush2.msra.mxu0 0.0
        %2475 = vmatprep.subr.mxu0 0.0
        %2476 = vmatpush2.msra.mxu0 0.0
        %2477 = vmatprep.subr.mxu0 0.0
        %2478 = vmatpush2.msra.mxu0 0.0
        %2479 = vmatprep.subr.mxu0 0.0
        %2480 = vmatpush2.msra.mxu0 0.0
        %2481 = vmatprep.subr.mxu0 0.0
        %2482 = vmatpush2.msra.mxu0 0.0
        %2483 = vmatprep.subr.mxu0 0.0
        %2484 = vmatpush2.msra.mxu0 0.0
        %2485 = vmatprep.subr.mxu0 0.0
        %2486 = vmatpush2.msra.mxu0 0.0
        %2487 = vmatprep.subr.mxu0 0.0
        %2488 = vmatpush2.msra.mxu0 0.0
        %2489 = vmatprep.subr.mxu0 0.0
        %2490 = vmatpush2.msra.mxu0 0.0
        %2491 = vmatprep.subr.mxu0 0.0
        %2492 = vmatpush2.msra.mxu0 0.0
        %2493 = vmatprep.subr.mxu0 0.0
        %v2494 = vand.u32 %v377, 4294901760
        %2495 = vmatpush2.msra.mxu0 %v2494
        %2496 = vmatprep.subr.mxu0 0.0
        %v2497 = vand.u32 %v376, 4294901760
        %2498 = vmatpush2.msra.mxu0 %v2497
        %v2499 = vand.u32 %v1825, 4294901760
        %2500 = vmatprep.mubr.f32.mxu0 %v2499
        %v2501 = vand.u32 %v1822, 4294901760
        %2502 = vmatmul.mubr.f32.gmra.mxu0 %v2501
        %v2503 = vpop.f32.mrf.mxu0
        %v2504 = vadd.f32 %v2414, %v2503
        %v2505 = vpop.f32.mrf.mxu0
        %2506 = vdwg.mxu0
        %2507 = vst [vmem:[%s349 + $0x10] sm:$0xff] %v2504
        %v2508 = vld [vmem:[#allocation3] sm:$0xff]
        %v2509 = vld [vmem:[#allocation3 + $0x8] sm:$0xff]
        %v2510 = vld [vmem:[#allocation3 + $0x10] sm:$0xff]
        %2514 = vrot.lane.b32.xlu0 %v2508, 8
        %v2515 = vpop.permute.xlu0 %2514
        %2516 = vrot.lane.b32.xlu0 %v2509, 8
        %v2517 = vpop.permute.xlu0 %2516
        %2518 = vrot.lane.b32.xlu0 %v2510, 8
        %v2519 = vpop.permute.xlu0 %2518
        %v2520 = vsel %vm424, %v2515, %v2517
        %v2521 = vsel %vm424, %v2517, %v2519
        %v2523 = vsel %vm428, %v2521, 0
        %2525 = vmatprep.subr.mxu0 0.0
        %v2526 = vand.u32 %v375, 4294901760
        %2527 = vmatpush1.msra.mxu0 %v2526
        %2528 = vmatprep.subr.mxu0 0.0
        %v2529 = vand.u32 %v374, 4294901760
        %2530 = vmatpush1.msra.mxu0 %v2529
        %2531 = vmatprep.subr.mxu0 0.0
        %v2532 = vand.u32 %v373, 4294901760
        %2533 = vmatpush1.msra.mxu0 %v2532
        %2534 = vmatprep.subr.mxu0 0.0
        %v2535 = vand.u32 %v372, 4294901760
        %2536 = vmatpush1.msra.mxu0 %v2535
        %2537 = vmatprep.subr.mxu0 0.0
        %v2538 = vand.u32 %v371, 4294901760
        %2539 = vmatpush1.msra.mxu0 %v2538
        %2540 = vmatprep.subr.mxu0 0.0
        %v2541 = vand.u32 %v370, 4294901760
        %2542 = vmatpush1.msra.mxu0 %v2541
        %2543 = vmatprep.subr.mxu0 0.0
        %v2544 = vand.u32 %v369, 4294901760
        %2545 = vmatpush1.msra.mxu0 %v2544
        %2546 = vmatprep.subr.mxu0 0.0
        %v2547 = vand.u32 %v368, 4294901760
        %2548 = vmatpush1.msra.mxu0 %v2547
        %2549 = vmatprep.subr.mxu0 0.0
        %v2550 = vand.u32 %v367, 4294901760
        %2551 = vmatpush1.msra.mxu0 %v2550
        %2552 = vmatprep.subr.mxu0 0.0
        %v2553 = vand.u32 %v366, 4294901760
        %2554 = vmatpush1.msra.mxu0 %v2553
        %2555 = vmatprep.subr.mxu0 0.0
        %v2556 = vand.u32 %v365, 4294901760
        %2557 = vmatpush1.msra.mxu0 %v2556
        %2558 = vmatprep.subr.mxu0 0.0
        %v2559 = vand.u32 %v364, 4294901760
        %2560 = vmatpush1.msra.mxu0 %v2559
        %2561 = vmatprep.subr.mxu0 0.0
        %v2562 = vand.u32 %v363, 4294901760
        %2563 = vmatpush1.msra.mxu0 %v2562
        %2564 = vmatprep.subr.mxu0 0.0
        %v2565 = vand.u32 %v362, 4294901760
        %2566 = vmatpush1.msra.mxu0 %v2565
        %2567 = vmatprep.subr.mxu0 0.0
        %v2568 = vand.u32 %v361, 4294901760
        %2569 = vmatpush1.msra.mxu0 %v2568
        %2570 = vmatprep.subr.mxu0 0.0
        %v2571 = vand.u32 %v360, 4294901760
        %2572 = vmatpush1.msra.mxu0 %v2571
        %2573 = vmatprep.subr.mxu0 0.0
        %2574 = vmatpush2.msra.mxu0 0.0
        %2575 = vmatprep.subr.mxu0 0.0
        %2576 = vmatpush2.msra.mxu0 0.0
        %2577 = vmatprep.subr.mxu0 0.0
        %2578 = vmatpush2.msra.mxu0 0.0
        %2579 = vmatprep.subr.mxu0 0.0
        %2580 = vmatpush2.msra.mxu0 0.0
        %2581 = vmatprep.subr.mxu0 0.0
        %2582 = vmatpush2.msra.mxu0 0.0
        %2583 = vmatprep.subr.mxu0 0.0
        %2584 = vmatpush2.msra.mxu0 0.0
        %2585 = vmatprep.subr.mxu0 0.0
        %2586 = vmatpush2.msra.mxu0 0.0
        %2587 = vmatprep.subr.mxu0 0.0
        %2588 = vmatpush2.msra.mxu0 0.0
        %2589 = vmatprep.subr.mxu0 0.0
        %2590 = vmatpush2.msra.mxu0 0.0
        %2591 = vmatprep.subr.mxu0 0.0
        %2592 = vmatpush2.msra.mxu0 0.0
        %2593 = vmatprep.subr.mxu0 0.0
        %2594 = vmatpush2.msra.mxu0 0.0
        %2595 = vmatprep.subr.mxu0 0.0
        %2596 = vmatpush2.msra.mxu0 0.0
        %2597 = vmatprep.subr.mxu0 0.0
        %2598 = vmatpush2.msra.mxu0 0.0
        %2599 = vmatprep.subr.mxu0 0.0
        %2600 = vmatpush2.msra.mxu0 0.0
        %2601 = vmatprep.subr.mxu0 0.0
        %v2602 = vand.u32 %v377, 4294901760
        %2603 = vmatpush2.msra.mxu0 %v2602
        %2604 = vmatprep.subr.mxu0 0.0
        %v2605 = vand.u32 %v376, 4294901760
        %2606 = vmatpush2.msra.mxu0 %v2605
        %v2607 = vand.u32 %v2523, 4294901760
        %v2608 = vsub.f32 %v2523, %v2607
        %v2609 = vand.u32 %v2608, 4294901760
        %v2610 = vsub.f32 %v2608, %v2609
        %v2611 = vand.u32 %v2610, 4294901760
        %2612 = vmatprep.mubr.f32.mxu0 %v2611
        %v2613 = vand.u32 %v2520, 4294901760
        %v2614 = vsub.f32 %v2520, %v2613
        %v2615 = vand.u32 %v2614, 4294901760
        %v2616 = vsub.f32 %v2614, %v2615
        %v2617 = vand.u32 %v2616, 4294901760
        %2618 = vmatmul.mubr.f32.gmra.mxu0 %v2617
        %v2619 = vpop.f32.mrf.mxu0
        %v2620 = vadd.f32 0.0, %v2619
        %v2621 = vpop.f32.mrf.mxu0
        %2622 = vdwg.mxu0
        %2623 = vmatprep.subr.mxu0 0.0
        %v2624 = vand.u32 %v375, 4294901760
        %v2625 = vsub.f32 %v375, %v2624
        %v2626 = vand.u32 %v2625, 4294901760
        %v2627 = vsub.f32 %v2625, %v2626
        %v2628 = vand.u32 %v2627, 4294901760
        %2629 = vmatpush1.msra.mxu0 %v2628
        %2630 = vmatprep.subr.mxu0 0.0
        %v2631 = vand.u32 %v374, 4294901760
        %v2632 = vsub.f32 %v374, %v2631
        %v2633 = vand.u32 %v2632, 4294901760
        %v2634 = vsub.f32 %v2632, %v2633
        %v2635 = vand.u32 %v2634, 4294901760
        %2636 = vmatpush1.msra.mxu0 %v2635
        %2637 = vmatprep.subr.mxu0 0.0
        %v2638 = vand.u32 %v373, 4294901760
        %v2639 = vsub.f32 %v373, %v2638
        %v2640 = vand.u32 %v2639, 4294901760
        %v2641 = vsub.f32 %v2639, %v2640
        %v2642 = vand.u32 %v2641, 4294901760
        %2643 = vmatpush1.msra.mxu0 %v2642
        %2644 = vmatprep.subr.mxu0 0.0
        %v2645 = vand.u32 %v372, 4294901760
        %v2646 = vsub.f32 %v372, %v2645
        %v2647 = vand.u32 %v2646, 4294901760
        %v2648 = vsub.f32 %v2646, %v2647
        %v2649 = vand.u32 %v2648, 4294901760
        %2650 = vmatpush1.msra.mxu0 %v2649
        %2651 = vmatprep.subr.mxu0 0.0
        %v2652 = vand.u32 %v371, 4294901760
        %v2653 = vsub.f32 %v371, %v2652
        %v2654 = vand.u32 %v2653, 4294901760
        %v2655 = vsub.f32 %v2653, %v2654
        %v2656 = vand.u32 %v2655, 4294901760
        %2657 = vmatpush1.msra.mxu0 %v2656
        %2658 = vmatprep.subr.mxu0 0.0
        %v2659 = vand.u32 %v370, 4294901760
        %v2660 = vsub.f32 %v370, %v2659
        %v2661 = vand.u32 %v2660, 4294901760
        %v2662 = vsub.f32 %v2660, %v2661
        %v2663 = vand.u32 %v2662, 4294901760
        %2664 = vmatpush1.msra.mxu0 %v2663
        %2665 = vmatprep.subr.mxu0 0.0
        %v2666 = vand.u32 %v369, 4294901760
        %v2667 = vsub.f32 %v369, %v2666
        %v2668 = vand.u32 %v2667, 4294901760
        %v2669 = vsub.f32 %v2667, %v2668
        %v2670 = vand.u32 %v2669, 4294901760
        %2671 = vmatpush1.msra.mxu0 %v2670
        %2672 = vmatprep.subr.mxu0 0.0
        %v2673 = vand.u32 %v368, 4294901760
        %v2674 = vsub.f32 %v368, %v2673
        %v2675 = vand.u32 %v2674, 4294901760
        %v2676 = vsub.f32 %v2674, %v2675
        %v2677 = vand.u32 %v2676, 4294901760
        %2678 = vmatpush1.msra.mxu0 %v2677
        %2679 = vmatprep.subr.mxu0 0.0
        %v2680 = vand.u32 %v367, 4294901760
        %v2681 = vsub.f32 %v367, %v2680
        %v2682 = vand.u32 %v2681, 4294901760
        %v2683 = vsub.f32 %v2681, %v2682
        %v2684 = vand.u32 %v2683, 4294901760
        %2685 = vmatpush1.msra.mxu0 %v2684
        %2686 = vmatprep.subr.mxu0 0.0
        %v2687 = vand.u32 %v366, 4294901760
        %v2688 = vsub.f32 %v366, %v2687
        %v2689 = vand.u32 %v2688, 4294901760
        %v2690 = vsub.f32 %v2688, %v2689
        %v2691 = vand.u32 %v2690, 4294901760
        %2692 = vmatpush1.msra.mxu0 %v2691
        %2693 = vmatprep.subr.mxu0 0.0
        %v2694 = vand.u32 %v365, 4294901760
        %v2695 = vsub.f32 %v365, %v2694
        %v2696 = vand.u32 %v2695, 4294901760
        %v2697 = vsub.f32 %v2695, %v2696
        %v2698 = vand.u32 %v2697, 4294901760
        %2699 = vmatpush1.msra.mxu0 %v2698
        %2700 = vmatprep.subr.mxu0 0.0
        %v2701 = vand.u32 %v364, 4294901760
        %v2702 = vsub.f32 %v364, %v2701
        %v2703 = vand.u32 %v2702, 4294901760
        %v2704 = vsub.f32 %v2702, %v2703
        %v2705 = vand.u32 %v2704, 4294901760
        %2706 = vmatpush1.msra.mxu0 %v2705
        %2707 = vmatprep.subr.mxu0 0.0
        %v2708 = vand.u32 %v363, 4294901760
        %v2709 = vsub.f32 %v363, %v2708
        %v2710 = vand.u32 %v2709, 4294901760
        %v2711 = vsub.f32 %v2709, %v2710
        %v2712 = vand.u32 %v2711, 4294901760
        %2713 = vmatpush1.msra.mxu0 %v2712
        %2714 = vmatprep.subr.mxu0 0.0
        %v2715 = vand.u32 %v362, 4294901760
        %v2716 = vsub.f32 %v362, %v2715
        %v2717 = vand.u32 %v2716, 4294901760
        %v2718 = vsub.f32 %v2716, %v2717
        %v2719 = vand.u32 %v2718, 4294901760
        %2720 = vmatpush1.msra.mxu0 %v2719
        %2721 = vmatprep.subr.mxu0 0.0
        %v2722 = vand.u32 %v361, 4294901760
        %v2723 = vsub.f32 %v361, %v2722
        %v2724 = vand.u32 %v2723, 4294901760
        %v2725 = vsub.f32 %v2723, %v2724
        %v2726 = vand.u32 %v2725, 4294901760
        %2727 = vmatpush1.msra.mxu0 %v2726
        %2728 = vmatprep.subr.mxu0 0.0
        %v2729 = vand.u32 %v360, 4294901760
        %v2730 = vsub.f32 %v360, %v2729
        %v2731 = vand.u32 %v2730, 4294901760
        %v2732 = vsub.f32 %v2730, %v2731
        %v2733 = vand.u32 %v2732, 4294901760
        %2734 = vmatpush1.msra.mxu0 %v2733
        %2735 = vmatprep.subr.mxu0 0.0
        %2736 = vmatpush2.msra.mxu0 0.0
        %2737 = vmatprep.subr.mxu0 0.0
        %2738 = vmatpush2.msra.mxu0 0.0
        %2739 = vmatprep.subr.mxu0 0.0
        %2740 = vmatpush2.msra.mxu0 0.0
        %2741 = vmatprep.subr.mxu0 0.0
        %2742 = vmatpush2.msra.mxu0 0.0
        %2743 = vmatprep.subr.mxu0 0.0
        %2744 = vmatpush2.msra.mxu0 0.0
        %2745 = vmatprep.subr.mxu0 0.0
        %2746 = vmatpush2.msra.mxu0 0.0
        %2747 = vmatprep.subr.mxu0 0.0
        %2748 = vmatpush2.msra.mxu0 0.0
        %2749 = vmatprep.subr.mxu0 0.0
        %2750 = vmatpush2.msra.mxu0 0.0
        %2751 = vmatprep.subr.mxu0 0.0
        %2752 = vmatpush2.msra.mxu0 0.0
        %2753 = vmatprep.subr.mxu0 0.0
        %2754 = vmatpush2.msra.mxu0 0.0
        %2755 = vmatprep.subr.mxu0 0.0
        %2756 = vmatpush2.msra.mxu0 0.0
        %2757 = vmatprep.subr.mxu0 0.0
        %2758 = vmatpush2.msra.mxu0 0.0
        %2759 = vmatprep.subr.mxu0 0.0
        %2760 = vmatpush2.msra.mxu0 0.0
        %2761 = vmatprep.subr.mxu0 0.0
        %2762 = vmatpush2.msra.mxu0 0.0
        %2763 = vmatprep.subr.mxu0 0.0
        %v2764 = vand.u32 %v377, 4294901760
        %v2765 = vsub.f32 %v377, %v2764
        %v2766 = vand.u32 %v2765, 4294901760
        %v2767 = vsub.f32 %v2765, %v2766
        %v2768 = vand.u32 %v2767, 4294901760
        %2769 = vmatpush2.msra.mxu0 %v2768
        %2770 = vmatprep.subr.mxu0 0.0
        %v2771 = vand.u32 %v376, 4294901760
        %v2772 = vsub.f32 %v376, %v2771
        %v2773 = vand.u32 %v2772, 4294901760
        %v2774 = vsub.f32 %v2772, %v2773
        %v2775 = vand.u32 %v2774, 4294901760
        %2776 = vmatpush2.msra.mxu0 %v2775
        %v2777 = vand.u32 %v2523, 4294901760
        %2778 = vmatprep.mubr.f32.mxu0 %v2777
        %v2779 = vand.u32 %v2520, 4294901760
        %2780 = vmatmul.mubr.f32.gmra.mxu0 %v2779
        %v2781 = vpop.f32.mrf.mxu0
        %v2782 = vadd.f32 %v2620, %v2781
        %v2783 = vpop.f32.mrf.mxu0
        %2784 = vdwg.mxu0
        %2785 = vmatprep.subr.mxu0 0.0
        %v2786 = vand.u32 %v375, 4294901760
        %v2787 = vsub.f32 %v375, %v2786
        %2788 = vmatpush1.msra.mxu0 %v2787
        %2789 = vmatprep.subr.mxu0 0.0
        %v2790 = vand.u32 %v374, 4294901760
        %v2791 = vsub.f32 %v374, %v2790
        %2792 = vmatpush1.msra.mxu0 %v2791
        %2793 = vmatprep.subr.mxu0 0.0
        %v2794 = vand.u32 %v373, 4294901760
        %v2795 = vsub.f32 %v373, %v2794
        %2796 = vmatpush1.msra.mxu0 %v2795
        %2797 = vmatprep.subr.mxu0 0.0
        %v2798 = vand.u32 %v372, 4294901760
        %v2799 = vsub.f32 %v372, %v2798
        %2800 = vmatpush1.msra.mxu0 %v2799
        %2801 = vmatprep.subr.mxu0 0.0
        %v2802 = vand.u32 %v371, 4294901760
        %v2803 = vsub.f32 %v371, %v2802
        %2804 = vmatpush1.msra.mxu0 %v2803
        %2805 = vmatprep.subr.mxu0 0.0
        %v2806 = vand.u32 %v370, 4294901760
        %v2807 = vsub.f32 %v370, %v2806
        %2808 = vmatpush1.msra.mxu0 %v2807
        %2809 = vmatprep.subr.mxu0 0.0
        %v2810 = vand.u32 %v369, 4294901760
        %v2811 = vsub.f32 %v369, %v2810
        %2812 = vmatpush1.msra.mxu0 %v2811
        %2813 = vmatprep.subr.mxu0 0.0
        %v2814 = vand.u32 %v368, 4294901760
        %v2815 = vsub.f32 %v368, %v2814
        %2816 = vmatpush1.msra.mxu0 %v2815
        %2817 = vmatprep.subr.mxu0 0.0
        %v2818 = vand.u32 %v367, 4294901760
        %v2819 = vsub.f32 %v367, %v2818
        %2820 = vmatpush1.msra.mxu0 %v2819
        %2821 = vmatprep.subr.mxu0 0.0
        %v2822 = vand.u32 %v366, 4294901760
        %v2823 = vsub.f32 %v366, %v2822
        %2824 = vmatpush1.msra.mxu0 %v2823
        %2825 = vmatprep.subr.mxu0 0.0
        %v2826 = vand.u32 %v365, 4294901760
        %v2827 = vsub.f32 %v365, %v2826
        %2828 = vmatpush1.msra.mxu0 %v2827
        %2829 = vmatprep.subr.mxu0 0.0
        %v2830 = vand.u32 %v364, 4294901760
        %v2831 = vsub.f32 %v364, %v2830
        %2832 = vmatpush1.msra.mxu0 %v2831
        %2833 = vmatprep.subr.mxu0 0.0
        %v2834 = vand.u32 %v363, 4294901760
        %v2835 = vsub.f32 %v363, %v2834
        %2836 = vmatpush1.msra.mxu0 %v2835
        %2837 = vmatprep.subr.mxu0 0.0
        %v2838 = vand.u32 %v362, 4294901760
        %v2839 = vsub.f32 %v362, %v2838
        %2840 = vmatpush1.msra.mxu0 %v2839
        %2841 = vmatprep.subr.mxu0 0.0
        %v2842 = vand.u32 %v361, 4294901760
        %v2843 = vsub.f32 %v361, %v2842
        %2844 = vmatpush1.msra.mxu0 %v2843
        %2845 = vmatprep.subr.mxu0 0.0
        %v2846 = vand.u32 %v360, 4294901760
        %v2847 = vsub.f32 %v360, %v2846
        %2848 = vmatpush1.msra.mxu0 %v2847
        %2849 = vmatprep.subr.mxu0 0.0
        %2850 = vmatpush2.msra.mxu0 0.0
        %2851 = vmatprep.subr.mxu0 0.0
        %2852 = vmatpush2.msra.mxu0 0.0
        %2853 = vmatprep.subr.mxu0 0.0
        %2854 = vmatpush2.msra.mxu0 0.0
        %2855 = vmatprep.subr.mxu0 0.0
        %2856 = vmatpush2.msra.mxu0 0.0
        %2857 = vmatprep.subr.mxu0 0.0
        %2858 = vmatpush2.msra.mxu0 0.0
        %2859 = vmatprep.subr.mxu0 0.0
        %2860 = vmatpush2.msra.mxu0 0.0
        %2861 = vmatprep.subr.mxu0 0.0
        %2862 = vmatpush2.msra.mxu0 0.0
        %2863 = vmatprep.subr.mxu0 0.0
        %2864 = vmatpush2.msra.mxu0 0.0
        %2865 = vmatprep.subr.mxu0 0.0
        %2866 = vmatpush2.msra.mxu0 0.0
        %2867 = vmatprep.subr.mxu0 0.0
        %2868 = vmatpush2.msra.mxu0 0.0
        %2869 = vmatprep.subr.mxu0 0.0
        %2870 = vmatpush2.msra.mxu0 0.0
        %2871 = vmatprep.subr.mxu0 0.0
        %2872 = vmatpush2.msra.mxu0 0.0
        %2873 = vmatprep.subr.mxu0 0.0
        %2874 = vmatpush2.msra.mxu0 0.0
        %2875 = vmatprep.subr.mxu0 0.0
        %2876 = vmatpush2.msra.mxu0 0.0
        %2877 = vmatprep.subr.mxu0 0.0
        %v2878 = vand.u32 %v377, 4294901760
        %v2879 = vsub.f32 %v377, %v2878
        %2880 = vmatpush2.msra.mxu0 %v2879
        %2881 = vmatprep.subr.mxu0 0.0
        %v2882 = vand.u32 %v376, 4294901760
        %v2883 = vsub.f32 %v376, %v2882
        %2884 = vmatpush2.msra.mxu0 %v2883
        %v2885 = vand.u32 %v2523, 4294901760
        %v2886 = vsub.f32 %v2523, %v2885
        %2887 = vmatprep.mubr.f32.mxu0 %v2886
        %v2888 = vand.u32 %v2520, 4294901760
        %v2889 = vsub.f32 %v2520, %v2888
        %2890 = vmatmul.mubr.f32.gmra.mxu0 %v2889
        %v2891 = vpop.f32.mrf.mxu0
        %v2892 = vadd.f32 %v2782, %v2891
        %v2893 = vpop.f32.mrf.mxu0
        %2894 = vdwg.mxu0
        %2895 = vmatprep.subr.mxu0 0.0
        %v2896 = vand.u32 %v375, 4294901760
        %2897 = vmatpush1.msra.mxu0 %v2896
        %2898 = vmatprep.subr.mxu0 0.0
        %v2899 = vand.u32 %v374, 4294901760
        %2900 = vmatpush1.msra.mxu0 %v2899
        %2901 = vmatprep.subr.mxu0 0.0
        %v2902 = vand.u32 %v373, 4294901760
        %2903 = vmatpush1.msra.mxu0 %v2902
        %2904 = vmatprep.subr.mxu0 0.0
        %v2905 = vand.u32 %v372, 4294901760
        %2906 = vmatpush1.msra.mxu0 %v2905
        %2907 = vmatprep.subr.mxu0 0.0
        %v2908 = vand.u32 %v371, 4294901760
        %2909 = vmatpush1.msra.mxu0 %v2908
        %2910 = vmatprep.subr.mxu0 0.0
        %v2911 = vand.u32 %v370, 4294901760
        %2912 = vmatpush1.msra.mxu0 %v2911
        %2913 = vmatprep.subr.mxu0 0.0
        %v2914 = vand.u32 %v369, 4294901760
        %2915 = vmatpush1.msra.mxu0 %v2914
        %2916 = vmatprep.subr.mxu0 0.0
        %v2917 = vand.u32 %v368, 4294901760
        %2918 = vmatpush1.msra.mxu0 %v2917
        %2919 = vmatprep.subr.mxu0 0.0
        %v2920 = vand.u32 %v367, 4294901760
        %2921 = vmatpush1.msra.mxu0 %v2920
        %2922 = vmatprep.subr.mxu0 0.0
        %v2923 = vand.u32 %v366, 4294901760
        %2924 = vmatpush1.msra.mxu0 %v2923
        %2925 = vmatprep.subr.mxu0 0.0
        %v2926 = vand.u32 %v365, 4294901760
        %2927 = vmatpush1.msra.mxu0 %v2926
        %2928 = vmatprep.subr.mxu0 0.0
        %v2929 = vand.u32 %v364, 4294901760
        %2930 = vmatpush1.msra.mxu0 %v2929
        %2931 = vmatprep.subr.mxu0 0.0
        %v2932 = vand.u32 %v363, 4294901760
        %2933 = vmatpush1.msra.mxu0 %v2932
        %2934 = vmatprep.subr.mxu0 0.0
        %v2935 = vand.u32 %v362, 4294901760
        %2936 = vmatpush1.msra.mxu0 %v2935
        %2937 = vmatprep.subr.mxu0 0.0
        %v2938 = vand.u32 %v361, 4294901760
        %2939 = vmatpush1.msra.mxu0 %v2938
        %2940 = vmatprep.subr.mxu0 0.0
        %v2941 = vand.u32 %v360, 4294901760
        %2942 = vmatpush1.msra.mxu0 %v2941
        %2943 = vmatprep.subr.mxu0 0.0
        %2944 = vmatpush2.msra.mxu0 0.0
        %2945 = vmatprep.subr.mxu0 0.0
        %2946 = vmatpush2.msra.mxu0 0.0
        %2947 = vmatprep.subr.mxu0 0.0
        %2948 = vmatpush2.msra.mxu0 0.0
        %2949 = vmatprep.subr.mxu0 0.0
        %2950 = vmatpush2.msra.mxu0 0.0
        %2951 = vmatprep.subr.mxu0 0.0
        %2952 = vmatpush2.msra.mxu0 0.0
        %2953 = vmatprep.subr.mxu0 0.0
        %2954 = vmatpush2.msra.mxu0 0.0
        %2955 = vmatprep.subr.mxu0 0.0
        %2956 = vmatpush2.msra.mxu0 0.0
        %2957 = vmatprep.subr.mxu0 0.0
        %2958 = vmatpush2.msra.mxu0 0.0
        %2959 = vmatprep.subr.mxu0 0.0
        %2960 = vmatpush2.msra.mxu0 0.0
        %2961 = vmatprep.subr.mxu0 0.0
        %2962 = vmatpush2.msra.mxu0 0.0
        %2963 = vmatprep.subr.mxu0 0.0
        %2964 = vmatpush2.msra.mxu0 0.0
        %2965 = vmatprep.subr.mxu0 0.0
        %2966 = vmatpush2.msra.mxu0 0.0
        %2967 = vmatprep.subr.mxu0 0.0
        %2968 = vmatpush2.msra.mxu0 0.0
        %2969 = vmatprep.subr.mxu0 0.0
        %2970 = vmatpush2.msra.mxu0 0.0
        %2971 = vmatprep.subr.mxu0 0.0
        %v2972 = vand.u32 %v377, 4294901760
        %2973 = vmatpush2.msra.mxu0 %v2972
        %2974 = vmatprep.subr.mxu0 0.0
        %v2975 = vand.u32 %v376, 4294901760
        %2976 = vmatpush2.msra.mxu0 %v2975
        %v2977 = vand.u32 %v2523, 4294901760
        %v2978 = vsub.f32 %v2523, %v2977
        %v2979 = vand.u32 %v2978, 4294901760
        %2980 = vmatprep.mubr.f32.mxu0 %v2979
        %v2981 = vand.u32 %v2520, 4294901760
        %v2982 = vsub.f32 %v2520, %v2981
        %v2983 = vand.u32 %v2982, 4294901760
        %2984 = vmatmul.mubr.f32.gmra.mxu0 %v2983
        %v2985 = vpop.f32.mrf.mxu0
        %v2986 = vadd.f32 %v2892, %v2985
        %v2987 = vpop.f32.mrf.mxu0
        %2988 = vdwg.mxu0
        %2989 = vmatprep.subr.mxu0 0.0
        %v2990 = vand.u32 %v375, 4294901760
        %v2991 = vsub.f32 %v375, %v2990
        %v2992 = vand.u32 %v2991, 4294901760
        %2993 = vmatpush1.msra.mxu0 %v2992
        %2994 = vmatprep.subr.mxu0 0.0
        %v2995 = vand.u32 %v374, 4294901760
        %v2996 = vsub.f32 %v374, %v2995
        %v2997 = vand.u32 %v2996, 4294901760
        %2998 = vmatpush1.msra.mxu0 %v2997
        %2999 = vmatprep.subr.mxu0 0.0
        %v3000 = vand.u32 %v373, 4294901760
        %v3001 = vsub.f32 %v373, %v3000
        %v3002 = vand.u32 %v3001, 4294901760
        %3003 = vmatpush1.msra.mxu0 %v3002
        %3004 = vmatprep.subr.mxu0 0.0
        %v3005 = vand.u32 %v372, 4294901760
        %v3006 = vsub.f32 %v372, %v3005
        %v3007 = vand.u32 %v3006, 4294901760
        %3008 = vmatpush1.msra.mxu0 %v3007
        %3009 = vmatprep.subr.mxu0 0.0
        %v3010 = vand.u32 %v371, 4294901760
        %v3011 = vsub.f32 %v371, %v3010
        %v3012 = vand.u32 %v3011, 4294901760
        %3013 = vmatpush1.msra.mxu0 %v3012
        %3014 = vmatprep.subr.mxu0 0.0
        %v3015 = vand.u32 %v370, 4294901760
        %v3016 = vsub.f32 %v370, %v3015
        %v3017 = vand.u32 %v3016, 4294901760
        %3018 = vmatpush1.msra.mxu0 %v3017
        %3019 = vmatprep.subr.mxu0 0.0
        %v3020 = vand.u32 %v369, 4294901760
        %v3021 = vsub.f32 %v369, %v3020
        %v3022 = vand.u32 %v3021, 4294901760
        %3023 = vmatpush1.msra.mxu0 %v3022
        %3024 = vmatprep.subr.mxu0 0.0
        %v3025 = vand.u32 %v368, 4294901760
        %v3026 = vsub.f32 %v368, %v3025
        %v3027 = vand.u32 %v3026, 4294901760
        %3028 = vmatpush1.msra.mxu0 %v3027
        %3029 = vmatprep.subr.mxu0 0.0
        %v3030 = vand.u32 %v367, 4294901760
        %v3031 = vsub.f32 %v367, %v3030
        %v3032 = vand.u32 %v3031, 4294901760
        %3033 = vmatpush1.msra.mxu0 %v3032
        %3034 = vmatprep.subr.mxu0 0.0
        %v3035 = vand.u32 %v366, 4294901760
        %v3036 = vsub.f32 %v366, %v3035
        %v3037 = vand.u32 %v3036, 4294901760
        %3038 = vmatpush1.msra.mxu0 %v3037
        %3039 = vmatprep.subr.mxu0 0.0
        %v3040 = vand.u32 %v365, 4294901760
        %v3041 = vsub.f32 %v365, %v3040
        %v3042 = vand.u32 %v3041, 4294901760
        %3043 = vmatpush1.msra.mxu0 %v3042
        %3044 = vmatprep.subr.mxu0 0.0
        %v3045 = vand.u32 %v364, 4294901760
        %v3046 = vsub.f32 %v364, %v3045
        %v3047 = vand.u32 %v3046, 4294901760
        %3048 = vmatpush1.msra.mxu0 %v3047
        %3049 = vmatprep.subr.mxu0 0.0
        %v3050 = vand.u32 %v363, 4294901760
        %v3051 = vsub.f32 %v363, %v3050
        %v3052 = vand.u32 %v3051, 4294901760
        %3053 = vmatpush1.msra.mxu0 %v3052
        %3054 = vmatprep.subr.mxu0 0.0
        %v3055 = vand.u32 %v362, 4294901760
        %v3056 = vsub.f32 %v362, %v3055
        %v3057 = vand.u32 %v3056, 4294901760
        %3058 = vmatpush1.msra.mxu0 %v3057
        %3059 = vmatprep.subr.mxu0 0.0
        %v3060 = vand.u32 %v361, 4294901760
        %v3061 = vsub.f32 %v361, %v3060
        %v3062 = vand.u32 %v3061, 4294901760
        %3063 = vmatpush1.msra.mxu0 %v3062
        %3064 = vmatprep.subr.mxu0 0.0
        %v3065 = vand.u32 %v360, 4294901760
        %v3066 = vsub.f32 %v360, %v3065
        %v3067 = vand.u32 %v3066, 4294901760
        %3068 = vmatpush1.msra.mxu0 %v3067
        %3069 = vmatprep.subr.mxu0 0.0
        %3070 = vmatpush2.msra.mxu0 0.0
        %3071 = vmatprep.subr.mxu0 0.0
        %3072 = vmatpush2.msra.mxu0 0.0
        %3073 = vmatprep.subr.mxu0 0.0
        %3074 = vmatpush2.msra.mxu0 0.0
        %3075 = vmatprep.subr.mxu0 0.0
        %3076 = vmatpush2.msra.mxu0 0.0
        %3077 = vmatprep.subr.mxu0 0.0
        %3078 = vmatpush2.msra.mxu0 0.0
        %3079 = vmatprep.subr.mxu0 0.0
        %3080 = vmatpush2.msra.mxu0 0.0
        %3081 = vmatprep.subr.mxu0 0.0
        %3082 = vmatpush2.msra.mxu0 0.0
        %3083 = vmatprep.subr.mxu0 0.0
        %3084 = vmatpush2.msra.mxu0 0.0
        %3085 = vmatprep.subr.mxu0 0.0
        %3086 = vmatpush2.msra.mxu0 0.0
        %3087 = vmatprep.subr.mxu0 0.0
        %3088 = vmatpush2.msra.mxu0 0.0
        %3089 = vmatprep.subr.mxu0 0.0
        %3090 = vmatpush2.msra.mxu0 0.0
        %3091 = vmatprep.subr.mxu0 0.0
        %3092 = vmatpush2.msra.mxu0 0.0
        %3093 = vmatprep.subr.mxu0 0.0
        %3094 = vmatpush2.msra.mxu0 0.0
        %3095 = vmatprep.subr.mxu0 0.0
        %3096 = vmatpush2.msra.mxu0 0.0
        %3097 = vmatprep.subr.mxu0 0.0
        %v3098 = vand.u32 %v377, 4294901760
        %v3099 = vsub.f32 %v377, %v3098
        %v3100 = vand.u32 %v3099, 4294901760
        %3101 = vmatpush2.msra.mxu0 %v3100
        %3102 = vmatprep.subr.mxu0 0.0
        %v3103 = vand.u32 %v376, 4294901760
        %v3104 = vsub.f32 %v376, %v3103
        %v3105 = vand.u32 %v3104, 4294901760
        %3106 = vmatpush2.msra.mxu0 %v3105
        %v3107 = vand.u32 %v2523, 4294901760
        %3108 = vmatprep.mubr.f32.mxu0 %v3107
        %v3109 = vand.u32 %v2520, 4294901760
        %3110 = vmatmul.mubr.f32.gmra.mxu0 %v3109
        %v3111 = vpop.f32.mrf.mxu0
        %v3112 = vadd.f32 %v2986, %v3111
        %v3113 = vpop.f32.mrf.mxu0
        %3114 = vdwg.mxu0
        %3115 = vmatprep.subr.mxu0 0.0
        %v3116 = vand.u32 %v375, 4294901760
        %3117 = vmatpush1.msra.mxu0 %v3116
        %3118 = vmatprep.subr.mxu0 0.0
        %v3119 = vand.u32 %v374, 4294901760
        %3120 = vmatpush1.msra.mxu0 %v3119
        %3121 = vmatprep.subr.mxu0 0.0
        %v3122 = vand.u32 %v373, 4294901760
        %3123 = vmatpush1.msra.mxu0 %v3122
        %3124 = vmatprep.subr.mxu0 0.0
        %v3125 = vand.u32 %v372, 4294901760
        %3126 = vmatpush1.msra.mxu0 %v3125
        %3127 = vmatprep.subr.mxu0 0.0
        %v3128 = vand.u32 %v371, 4294901760
        %3129 = vmatpush1.msra.mxu0 %v3128
        %3130 = vmatprep.subr.mxu0 0.0
        %v3131 = vand.u32 %v370, 4294901760
        %3132 = vmatpush1.msra.mxu0 %v3131
        %3133 = vmatprep.subr.mxu0 0.0
        %v3134 = vand.u32 %v369, 4294901760
        %3135 = vmatpush1.msra.mxu0 %v3134
        %3136 = vmatprep.subr.mxu0 0.0
        %v3137 = vand.u32 %v368, 4294901760
        %3138 = vmatpush1.msra.mxu0 %v3137
        %3139 = vmatprep.subr.mxu0 0.0
        %v3140 = vand.u32 %v367, 4294901760
        %3141 = vmatpush1.msra.mxu0 %v3140
        %3142 = vmatprep.subr.mxu0 0.0
        %v3143 = vand.u32 %v366, 4294901760
        %3144 = vmatpush1.msra.mxu0 %v3143
        %3145 = vmatprep.subr.mxu0 0.0
        %v3146 = vand.u32 %v365, 4294901760
        %3147 = vmatpush1.msra.mxu0 %v3146
        %3148 = vmatprep.subr.mxu0 0.0
        %v3149 = vand.u32 %v364, 4294901760
        %3150 = vmatpush1.msra.mxu0 %v3149
        %3151 = vmatprep.subr.mxu0 0.0
        %v3152 = vand.u32 %v363, 4294901760
        %3153 = vmatpush1.msra.mxu0 %v3152
        %3154 = vmatprep.subr.mxu0 0.0
        %v3155 = vand.u32 %v362, 4294901760
        %3156 = vmatpush1.msra.mxu0 %v3155
        %3157 = vmatprep.subr.mxu0 0.0
        %v3158 = vand.u32 %v361, 4294901760
        %3159 = vmatpush1.msra.mxu0 %v3158
        %3160 = vmatprep.subr.mxu0 0.0
        %v3161 = vand.u32 %v360, 4294901760
        %3162 = vmatpush1.msra.mxu0 %v3161
        %3163 = vmatprep.subr.mxu0 0.0
        %3164 = vmatpush2.msra.mxu0 0.0
        %3165 = vmatprep.subr.mxu0 0.0
        %3166 = vmatpush2.msra.mxu0 0.0
        %3167 = vmatprep.subr.mxu0 0.0
        %3168 = vmatpush2.msra.mxu0 0.0
        %3169 = vmatprep.subr.mxu0 0.0
        %3170 = vmatpush2.msra.mxu0 0.0
        %3171 = vmatprep.subr.mxu0 0.0
        %3172 = vmatpush2.msra.mxu0 0.0
        %3173 = vmatprep.subr.mxu0 0.0
        %3174 = vmatpush2.msra.mxu0 0.0
        %3175 = vmatprep.subr.mxu0 0.0
        %3176 = vmatpush2.msra.mxu0 0.0
        %3177 = vmatprep.subr.mxu0 0.0
        %3178 = vmatpush2.msra.mxu0 0.0
        %3179 = vmatprep.subr.mxu0 0.0
        %3180 = vmatpush2.msra.mxu0 0.0
        %3181 = vmatprep.subr.mxu0 0.0
        %3182 = vmatpush2.msra.mxu0 0.0
        %3183 = vmatprep.subr.mxu0 0.0
        %3184 = vmatpush2.msra.mxu0 0.0
        %3185 = vmatprep.subr.mxu0 0.0
        %3186 = vmatpush2.msra.mxu0 0.0
        %3187 = vmatprep.subr.mxu0 0.0
        %3188 = vmatpush2.msra.mxu0 0.0
        %3189 = vmatprep.subr.mxu0 0.0
        %3190 = vmatpush2.msra.mxu0 0.0
        %3191 = vmatprep.subr.mxu0 0.0
        %v3192 = vand.u32 %v377, 4294901760
        %3193 = vmatpush2.msra.mxu0 %v3192
        %3194 = vmatprep.subr.mxu0 0.0
        %v3195 = vand.u32 %v376, 4294901760
        %3196 = vmatpush2.msra.mxu0 %v3195
        %v3197 = vand.u32 %v2523, 4294901760
        %3198 = vmatprep.mubr.f32.mxu0 %v3197
        %v3199 = vand.u32 %v2520, 4294901760
        %3200 = vmatmul.mubr.f32.gmra.mxu0 %v3199
        %v3201 = vpop.f32.mrf.mxu0
        %v3202 = vadd.f32 %v3112, %v3201
        %v3203 = vpop.f32.mrf.mxu0
        %3204 = vdwg.mxu0
        %3205 = vst [vmem:[%s349 + $0x18] sm:$0xff] %v3202
        %s3206 = sand.u32 %s168, 1
        %s3207 = scalar_lea.sflag [#allocation6], %s3206
        %s3208 = sand.u32 %s168, 1
        %s3209 = smul.addr %s3208, 32
        %s3210 = scalar_lea.vmem [#allocation12], %s3209
        // Predicated region
        $region61: #{tpu_custom_call.1} parent=35 // pred_check
          %p3211 = pneg %p178
        $region62: #{tpu_custom_call.1} parent=35 // pred_check_branch
          %3213 = sbr.rel (%p3211) target = $region64
        $region63: #{tpu_custom_call.1} parent=35 // pred_region
          %s3214 = smul.u32 4, %s30
          %s3216 = ssub.s32 512, 512
          %3217 = vsyncadd %s3207, %s3216
          %s3218 = smul.addr %s29, 12
          %s3219 = sadd.s32 %s3214, %s3218
          %s3220 = smul.addr %s3219, 128
          %s3221 = scalar_lea.hbm %s4, %s3220
          %s3223 = sshll.u32 %s3210, 4
          %s3224 = int_to_ptr.vmem [resolvable:$true] %s3223
          %3226 = dma.vmem_to_hbm [thread:$0]  %s3224, 512, %s3221, %s3207
        $region64: #{tpu_custom_call.1} parent=35 // pred_fallthru
          _
      $region36: #{tpu_custom_call.1} parent=5 // pred_fallthru
        _
      %p3227 = scmp.le.s32.totalorder 2, %s20
      // Predicated region
      $region65: #{tpu_custom_call.1} parent=5 // pred_check
        %p3228 = pneg %p3227
      $region66: #{tpu_custom_call.1} parent=5 // pred_check_branch
        %3230 = sbr.rel (%p3228) target = $region68
      $region67: #{tpu_custom_call.1} parent=5 // pred_region
        %s3231 = ssub.s32 %s20, 2
        // Predicated region
        $region69: #{tpu_custom_call.1} parent=67 // pred_check
          %p3232 = pneg %p184
        $region70: #{tpu_custom_call.1} parent=67 // pred_check_branch
          %3234 = sbr.rel (%p3232) target = $region72
        $region71: #{tpu_custom_call.1} parent=67 // pred_region
          %s3235 = sand.u32 %s169, 1
          %s3236 = scalar_lea.sflag [#allocation6], %s3235
          %s3237 = sand.u32 %s169, 1
          %s3238 = smul.addr %s3237, 32
          %s3239 = scalar_lea.vmem [#allocation12], %s3238
          %3240 = dma.done %s3236, 512
        $region72: #{tpu_custom_call.1} parent=67 // pred_fallthru
          _
      $region68: #{tpu_custom_call.1} parent=5 // pred_fallthru
        _
    $region6: #{tpu_custom_call.1} parent=1 // loop_footer
      %s24 = sadd.s32 1, %s20
    $region7: #{tpu_custom_call.1} parent=1 // loop_footer_branch
      %19 = sbr.rel target = $region3
    $region8: #{tpu_custom_call.1} parent=1 // loop_exit
      _
    %3241 = vsyncpa [#allocation5], 1
    %s3242 = scalar_lea.sflag [#allocation5], 1
    %3243 = vsyncpa %s3242, 1
    %3244 = vsyncpa [#allocation8], 1
    %s3245 = scalar_lea.sflag [#allocation8], 1
    %3246 = vsyncpa %s3245, 1
    %3247 = vsyncpa [#allocation11], 1
    %s3248 = scalar_lea.sflag [#allocation11], 1
    %3249 = vsyncpa %s3248, 1
    %3250 = vsyncpa [#allocation6], 1
    %s3251 = scalar_lea.sflag [#allocation6], 1
    %3252 = vsyncpa %s3251, 1

</llo_original>
